<compile_context>
chip_gen: v6e
topology: v6e:2x2x1
jax: 0.10.0
libtpu: 0.0.40
codegen_flags: <defaults>
</compile_context>

<pallas_src>
import functools
import math

import numpy as np
import jax
import jax.numpy as jnp
from jax import lax
from jax.experimental import pallas as pl
from jax.experimental.pallas import tpu as pltpu


# ---------------------------------------------------------------------------
# Fused kernel: one (batch, HW-tile) step, everything channel-major.
#   x_ref    : (C, T)      input tile (T = HW tile -> lane axis)
#   ctx_ref  : (S, CD)     context tokens for this batch element
#   wq_ref   : (C, C)      Wq (row-major), pre-scaled by 1/sqrt(head_dim)
#   wkv_ref  : (2C, CD)    [Wk ; Wv] stacked row-major
#   wo_h_ref : (H, C, D)   per-head slices of Wo (row-major)
#   bo_ref   : (C, 1)      output-projection bias (f32)
#   o_ref    : (C, T)      output tile, channel-major (lane-dense stores)
# ---------------------------------------------------------------------------
def _fused_cross_attn_kernel(x_ref, ctx_ref, wq_ref, wkv_ref, wo_h_ref, bo_ref,
                             o_ref, *, n_heads, head_dim, op_dtype,
                             approx_recip):
    C = n_heads * head_dim
    T = x_ref.shape[-1]

    x_cm = x_ref[...]                                    # (C, T), input dtype
    x_op = x_cm.astype(op_dtype)
    ctx_op = ctx_ref[...].astype(op_dtype)               # (S, CD)

    # Q projection, channel-major (scale already folded into Wq): (C,C)@(C,T).
    q_cm = jnp.dot(wq_ref[...], x_op,
                   preferred_element_type=jnp.float32)            # (C, T) f32

    # Fused K/V projection, channel-major: contract CD of (2C,CD) with (S,CD).
    kv_cm = lax.dot_general(wkv_ref[...], ctx_op,
                            (((1,), (1,)), ((), ())),
                            preferred_element_type=jnp.float32)   # (2C, S)
    q_op = q_cm.astype(op_dtype)
    k_cm = kv_cm[:C].astype(op_dtype)                    # (C, S) sublane slice
    v_cm = kv_cm[C:].astype(op_dtype)                    # (C, S) sublane slice

    # Per-head attention; output projection accumulated per head
    # (no head_outs list, no concatenate, single (C, T) f32 accumulator).
    y_cm = jnp.zeros((C, T), jnp.float32)
    for h in range(n_heads):
        sl = slice(h * head_dim, (h + 1) * head_dim)
        qh = q_op[sl]                                    # (D, T)
        kh = k_cm[sl]                                    # (D, S)
        vh = v_cm[sl]                                    # (D, S)

        # Transposed scores: contract D (dim 0 of both) -> (S, T).
        s_t = lax.dot_general(kh, qh, (((0,), (0,)), ((), ())),
                              preferred_element_type=jnp.float32)
        # Softmax along the key axis (sublane reduce), math in f32.
        m = jnp.max(s_t, axis=0, keepdims=True)          # (1, T)
        p = jnp.exp(s_t - m)                             # (S, T)
        l = jnp.sum(p, axis=0, keepdims=True)            # (1, T)

        # Head output, canonical (D,S)@(S,T); deferred softmax normalization
        # applied to the small (D, T) output via an EUP reciprocal.
        o_h = jnp.dot(vh, p.astype(op_dtype),
                      preferred_element_type=jnp.float32)          # (D, T)
        o_h = o_h * pl.reciprocal(l, approx=approx_recip)

        # Accumulate this head's slice of the output projection: (C,D)@(D,T).
        y_cm = y_cm + jnp.dot(wo_h_ref[h], o_h.astype(op_dtype),
                              preferred_element_type=jnp.float32)

    # Bias + residual (f32), stored channel-major -> lane-dense HW stores.
    out = x_cm.astype(jnp.float32) + y_cm + bo_ref[...]
    o_ref[...] = out.astype(o_ref.dtype)


# ---------------------------------------------------------------------------
# Forward (matches PyTorch CrossAttention.forward semantics)
# ---------------------------------------------------------------------------
def cross_attention_forward(x, context, params, n_heads, *,
                            op_dtype=jnp.bfloat16, hw_tile=None):
    b, c, h, w = x.shape
    hw = h * w
    s, cd = context.shape[1], context.shape[2]
    head_dim = c // n_heads
    scale = 1.0 / math.sqrt(head_dim)

    # HW tile: largest multiple of 128 dividing HW, capped so one tile's
    # working set fits comfortably in VMEM per TensorCore.
    # TODO(synk): on v6e raise vmem_limit_bytes (pltpu.CompilerParams) to go
    # beyond 2048-wide tiles at production shapes; on v5e prefer <= 1024.
    if hw_tile is None:
        if hw % 128 == 0:
            hw_tile = 128
            while hw_tile * 2 <= min(hw, 2048) and hw % (hw_tile * 2) == 0:
                hw_tile *= 2
        else:
            hw_tile = hw
    assert hw % hw_tile == 0
    n_tiles = hw // hw_tile

    # Weight prep (XLA level, once). Scale folded in f32 BEFORE the cast.
    wq_s = (params["wq"] * scale).astype(op_dtype)                  # (c, c)
    wkv = jnp.concatenate([params["wk"], params["wv"]],
                          axis=0).astype(op_dtype)                  # (2c, cd)
    wo_heads = params["wo"].reshape(c, n_heads, head_dim) \
                           .transpose(1, 0, 2).astype(op_dtype)     # (H, c, D)
    bo = params["bo"].reshape(c, 1).astype(jnp.float32)             # (c, 1)
    x_cm = x.reshape(b, c, hw)                                      # free NCHW view

    approx_recip = np.dtype(op_dtype) != np.dtype(jnp.float32)
    kernel = functools.partial(
        _fused_cross_attn_kernel, n_heads=n_heads, head_dim=head_dim,
        op_dtype=op_dtype, approx_recip=approx_recip)

    out_cm = pl.pallas_call(
        kernel,
        out_shape=jax.ShapeDtypeStruct((b, c, hw), x.dtype),
        grid=(b, n_tiles),
        in_specs=[
            pl.BlockSpec((None, c, hw_tile), lambda i, t: (i, 0, t)),      # x tile
            pl.BlockSpec((None, s, cd), lambda i, t: (i, 0, 0)),           # context
            pl.BlockSpec((c, c), lambda i, t: (0, 0)),                     # Wq (scaled)
            pl.BlockSpec((2 * c, cd), lambda i, t: (0, 0)),                # [Wk ; Wv]
            pl.BlockSpec((n_heads, c, head_dim), lambda i, t: (0, 0, 0)),  # Wo per head
            pl.BlockSpec((c, 1), lambda i, t: (0, 0)),                     # bias
        ],
        out_specs=pl.BlockSpec((None, c, hw_tile), lambda i, t: (i, 0, t)),
        compiler_params=pltpu.CompilerParams(
            dimension_semantics=("parallel", "parallel")),
    )(x_cm, context, wq_s, wkv, wo_heads, bo)

    return out_cm.reshape(b, c, h, w)


# ---------------------------------------------------------------------------
# Pure-JAX reference (for correctness check)
# ---------------------------------------------------------------------------
def cross_attention_ref(x, context, params, n_heads):
    b, c, h, w = x.shape
    hw = h * w
    head_dim = c // n_heads
    x_tokens = x.reshape(b, c, hw).transpose(0, 2, 1)
    q = x_tokens @ params["wq"].T
    k = context @ params["wk"].T
    v = context @ params["wv"].T
    qh = q.reshape(b, hw, n_heads, head_dim).transpose(0, 2, 1, 3)
    kh = k.reshape(b, -1, n_heads, head_dim).transpose(0, 2, 1, 3)
    vh = v.reshape(b, -1, n_heads, head_dim).transpose(0, 2, 1, 3)
    scores = jnp.einsum("bhqd,bhkd->bhqk", qh, kh) / math.sqrt(head_dim)
    p = jax.nn.softmax(scores, axis=-1)
    ah = jnp.einsum("bhqk,bhkd->bhqd", p, vh)
    a = ah.transpose(0, 2, 1, 3).reshape(b, hw, c)
    out = a @ params["wo"].T + params["bo"]
    return (x_tokens + out).transpose(0, 2, 1).reshape(b, c, h, w)


if __name__ == "__main__":
    # Small shapes consistent with the module.
    B, C, H, W = 2, 64, 16, 16      # query_dim = C = 64
    SEQ, CTX_DIM = 8, 32            # context_dim = 32
    N_HEADS = 8                     # head_dim = 8

    key = jax.random.PRNGKey(0)
    k0, k1, k2, k3, k4, k5, k6 = jax.random.split(key, 7)

    params = {
        "wq": jax.random.normal(k0, (C, C), jnp.float32) / math.sqrt(C),
        "wk": jax.random.normal(k1, (C, CTX_DIM), jnp.float32) / math.sqrt(CTX_DIM),
        "wv": jax.random.normal(k2, (C, CTX_DIM), jnp.float32) / math.sqrt(CTX_DIM),
        "wo": jax.random.normal(k3, (C, C), jnp.float32) / math.sqrt(C),
        "bo": jax.random.normal(k4, (C,), jnp.float32) * 0.01,
    }
    x = jax.random.normal(k5, (B, C, H, W), jnp.float32)
    context = jax.random.normal(k6, (B, SEQ, CTX_DIM), jnp.float32)

    ref = cross_attention_ref(x, context, params, N_HEADS)

    # 1) f32 operands, explicit HW tiling (2 tiles / batch): tight check.
    out_f32 = cross_attention_forward(x, context, params, N_HEADS,
                                      op_dtype=jnp.float32, hw_tile=128)
    out_f32 = jax.block_until_ready(out_f32)
    assert out_f32.shape == (B, C, H, W)
    assert jnp.allclose(out_f32, ref, atol=1e-3, rtol=1e-3), \
        "f32 mismatch vs reference"

    # 2) bf16 MXU operands (production configuration): sanity tolerance.
    out_bf16 = cross_attention_forward(x, context, params, N_HEADS,
                                       op_dtype=jnp.bfloat16)
    out_bf16 = jax.block_until_ready(out_bf16)
    max_err = float(jnp.max(jnp.abs(out_bf16 - ref)))
    assert max_err < 0.25, f"bf16 mismatch vs reference: max abs err {max_err}"

    print("KERNEL_OK")
</pallas_src>

<mosaic_0001>
module attributes {stable_mosaic.version = 11 : i64} {
  func.func @_fused_cross_attn_kernel(%arg0: i32, %arg1: i32, %arg2: memref<1x64x128xf32, #tpu.memory_space<vmem>>, %arg3: memref<1x8x32xf32, #tpu.memory_space<vmem>>, %arg4: memref<64x64xf32, #tpu.memory_space<vmem>>, %arg5: memref<128x32xf32, #tpu.memory_space<vmem>>, %arg6: memref<8x64x8xf32, #tpu.memory_space<vmem>>, %arg7: memref<64x1xf32, #tpu.memory_space<vmem>>, %arg8: memref<1x64x128xf32, #tpu.memory_space<vmem>>) attributes {dimension_semantics = [#tpu.dimension_semantics<parallel>, #tpu.dimension_semantics<parallel>], iteration_bounds = array<i64: 2, 2>, scalar_prefetch = 0 : i64, scratch_operands = 0 : i64, tpu.core_type = #tpu.core_type<tc>, window_params = [{transform_indices = @transform_0, window_bounds = array<i64: 1, 64, 128>}, {transform_indices = @transform_1, window_bounds = array<i64: 1, 8, 32>}, {pipeline_mode = #tpu.pipeline_mode<synchronous>, transform_indices = @transform_2, window_bounds = array<i64: 64, 64>}, {pipeline_mode = #tpu.pipeline_mode<synchronous>, transform_indices = @transform_3, window_bounds = array<i64: 128, 32>}, {pipeline_mode = #tpu.pipeline_mode<synchronous>, transform_indices = @transform_4, window_bounds = array<i64: 8, 64, 8>}, {pipeline_mode = #tpu.pipeline_mode<synchronous>, transform_indices = @transform_5, window_bounds = array<i64: 64, 1>}, {transform_indices = @transform_6, window_bounds = array<i64: 1, 64, 128>}]} {
    %c0 = arith.constant 0 : index
    %c0_0 = arith.constant 0 : index
    %c0_1 = arith.constant 0 : index
    %0 = vector.load %arg2[%c0, %c0_0, %c0_1] : memref<1x64x128xf32, #tpu.memory_space<vmem>>, vector<1x64x128xf32>
    %1 = vector.shape_cast %0 : vector<1x64x128xf32> to vector<64x128xf32>
    %c0_2 = arith.constant 0 : index
    %c0_3 = arith.constant 0 : index
    %c0_4 = arith.constant 0 : index
    %2 = vector.load %arg3[%c0_2, %c0_3, %c0_4] : memref<1x8x32xf32, #tpu.memory_space<vmem>>, vector<1x8x32xf32>
    %3 = vector.shape_cast %2 : vector<1x8x32xf32> to vector<8x32xf32>
    %c0_5 = arith.constant 0 : index
    %c0_6 = arith.constant 0 : index
    %4 = vector.load %arg4[%c0_5, %c0_6] : memref<64x64xf32, #tpu.memory_space<vmem>>, vector<64x64xf32>
    %cst = arith.constant dense<0.000000e+00> : vector<64x128xf32>
    %5 = tpu.matmul %4, %1, %cst {dimension_numbers = #tpu.dot_dimension_numbers<[1], [0], [0], [1], [0, 0, 1, 1], [], []>} : vector<64x64xf32>, vector<64x128xf32>, vector<64x128xf32> -> vector<64x128xf32>
    %c0_7 = arith.constant 0 : index
    %c0_8 = arith.constant 0 : index
    %6 = vector.load %arg5[%c0_7, %c0_8] : memref<128x32xf32, #tpu.memory_space<vmem>>, vector<128x32xf32>
    %cst_9 = arith.constant dense<0.000000e+00> : vector<128x8xf32>
    %7 = tpu.matmul %6, %3, %cst_9 {dimension_numbers = #tpu.dot_dimension_numbers<[1], [1], [0], [0], [0, 0, 1, 0], [], []>} : vector<128x32xf32>, vector<8x32xf32>, vector<128x8xf32> -> vector<128x8xf32>
    %8 = vector.extract_strided_slice %7 {offsets = [0, 0], sizes = [64, 8], strides = [1, 1]} : vector<128x8xf32> to vector<64x8xf32>
    %9 = vector.extract_strided_slice %7 {offsets = [64, 0], sizes = [64, 8], strides = [1, 1]} : vector<128x8xf32> to vector<64x8xf32>
    %cst_10 = arith.constant 0.000000e+00 : f32
    %10 = vector.broadcast %cst_10 : f32 to vector<64x128xf32>
    %11 = vector.extract_strided_slice %5 {offsets = [0, 0], sizes = [8, 128], strides = [1, 1]} : vector<64x128xf32> to vector<8x128xf32>
    %12 = vector.extract_strided_slice %8 {offsets = [0, 0], sizes = [8, 8], strides = [1, 1]} : vector<64x8xf32> to vector<8x8xf32>
    %13 = vector.extract_strided_slice %9 {offsets = [0, 0], sizes = [8, 8], strides = [1, 1]} : vector<64x8xf32> to vector<8x8xf32>
    %cst_11 = arith.constant dense<0.000000e+00> : vector<8x128xf32>
    %14 = tpu.matmul %12, %11, %cst_11 {dimension_numbers = #tpu.dot_dimension_numbers<[0], [0], [1], [1], [0, 1, 1, 1], [], []>} : vector<8x8xf32>, vector<8x128xf32>, vector<8x128xf32> -> vector<8x128xf32>
    %cst_12 = arith.constant dense<0xFF800000> : vector<128xf32>
    %15 = vector.multi_reduction <maximumf>, %14, %cst_12 [0] : vector<8x128xf32> to vector<128xf32>
    %16 = vector.shape_cast %15 : vector<128xf32> to vector<1x128xf32>
    %17 = vector.broadcast %16 : vector<1x128xf32> to vector<8x128xf32>
    %18 = arith.subf %14, %17 : vector<8x128xf32>
    %19 = math.exp %18 : vector<8x128xf32>
    %cst_13 = arith.constant dense<0.000000e+00> : vector<128xf32>
    %20 = vector.multi_reduction <add>, %19, %cst_13 [0] : vector<8x128xf32> to vector<128xf32>
    %21 = vector.shape_cast %20 : vector<128xf32> to vector<1x128xf32>
    %cst_14 = arith.constant dense<0.000000e+00> : vector<8x128xf32>
    %22 = tpu.matmul %13, %19, %cst_14 {dimension_numbers = #tpu.dot_dimension_numbers<[1], [0], [0], [1], [0, 0, 1, 1], [], []>} : vector<8x8xf32>, vector<8x128xf32>, vector<8x128xf32> -> vector<8x128xf32>
    %23 = tpu.reciprocal %21 : vector<1x128xf32> -> vector<1x128xf32>
    %24 = vector.broadcast %23 : vector<1x128xf32> to vector<8x128xf32>
    %25 = arith.mulf %22, %24 : vector<8x128xf32>
    %c0_15 = arith.constant 0 : index
    %c0_16 = arith.constant 0 : index
    %c0_17 = arith.constant 0 : index
    %26 = vector.load %arg6[%c0_15, %c0_16, %c0_17] : memref<8x64x8xf32, #tpu.memory_space<vmem>>, vector<1x64x8xf32>
    %27 = vector.shape_cast %26 : vector<1x64x8xf32> to vector<64x8xf32>
    %cst_18 = arith.constant dense<0.000000e+00> : vector<64x128xf32>
    %28 = tpu.matmul %27, %25, %cst_18 {dimension_numbers = #tpu.dot_dimension_numbers<[1], [0], [0], [1], [0, 0, 1, 1], [], []>} : vector<64x8xf32>, vector<8x128xf32>, vector<64x128xf32> -> vector<64x128xf32>
    %29 = arith.addf %10, %28 : vector<64x128xf32>
    %30 = vector.extract_strided_slice %5 {offsets = [8, 0], sizes = [8, 128], strides = [1, 1]} : vector<64x128xf32> to vector<8x128xf32>
    %31 = vector.extract_strided_slice %8 {offsets = [8, 0], sizes = [8, 8], strides = [1, 1]} : vector<64x8xf32> to vector<8x8xf32>
    %32 = vector.extract_strided_slice %9 {offsets = [8, 0], sizes = [8, 8], strides = [1, 1]} : vector<64x8xf32> to vector<8x8xf32>
    %cst_19 = arith.constant dense<0.000000e+00> : vector<8x128xf32>
    %33 = tpu.matmul %31, %30, %cst_19 {dimension_numbers = #tpu.dot_dimension_numbers<[0], [0], [1], [1], [0, 1, 1, 1], [], []>} : vector<8x8xf32>, vector<8x128xf32>, vector<8x128xf32> -> vector<8x128xf32>
    %cst_20 = arith.constant dense<0xFF800000> : vector<128xf32>
    %34 = vector.multi_reduction <maximumf>, %33, %cst_20 [0] : vector<8x128xf32> to vector<128xf32>
    %35 = vector.shape_cast %34 : vector<128xf32> to vector<1x128xf32>
    %36 = vector.broadcast %35 : vector<1x128xf32> to vector<8x128xf32>
    %37 = arith.subf %33, %36 : vector<8x128xf32>
    %38 = math.exp %37 : vector<8x128xf32>
    %cst_21 = arith.constant dense<0.000000e+00> : vector<128xf32>
    %39 = vector.multi_reduction <add>, %38, %cst_21 [0] : vector<8x128xf32> to vector<128xf32>
    %40 = vector.shape_cast %39 : vector<128xf32> to vector<1x128xf32>
    %cst_22 = arith.constant dense<0.000000e+00> : vector<8x128xf32>
    %41 = tpu.matmul %32, %38, %cst_22 {dimension_numbers = #tpu.dot_dimension_numbers<[1], [0], [0], [1], [0, 0, 1, 1], [], []>} : vector<8x8xf32>, vector<8x128xf32>, vector<8x128xf32> -> vector<8x128xf32>
    %42 = tpu.reciprocal %40 : vector<1x128xf32> -> vector<1x128xf32>
    %43 = vector.broadcast %42 : vector<1x128xf32> to vector<8x128xf32>
    %44 = arith.mulf %41, %43 : vector<8x128xf32>
    %c1 = arith.constant 1 : index
    %c0_23 = arith.constant 0 : index
    %c0_24 = arith.constant 0 : index
    %45 = vector.load %arg6[%c1, %c0_23, %c0_24] : memref<8x64x8xf32, #tpu.memory_space<vmem>>, vector<1x64x8xf32>
    %46 = vector.shape_cast %45 : vector<1x64x8xf32> to vector<64x8xf32>
    %cst_25 = arith.constant dense<0.000000e+00> : vector<64x128xf32>
    %47 = tpu.matmul %46, %44, %cst_25 {dimension_numbers = #tpu.dot_dimension_numbers<[1], [0], [0], [1], [0, 0, 1, 1], [], []>} : vector<64x8xf32>, vector<8x128xf32>, vector<64x128xf32> -> vector<64x128xf32>
    %48 = arith.addf %29, %47 : vector<64x128xf32>
    %49 = vector.extract_strided_slice %5 {offsets = [16, 0], sizes = [8, 128], strides = [1, 1]} : vector<64x128xf32> to vector<8x128xf32>
    %50 = vector.extract_strided_slice %8 {offsets = [16, 0], sizes = [8, 8], strides = [1, 1]} : vector<64x8xf32> to vector<8x8xf32>
    %51 = vector.extract_strided_slice %9 {offsets = [16, 0], sizes = [8, 8], strides = [1, 1]} : vector<64x8xf32> to vector<8x8xf32>
    %cst_26 = arith.constant dense<0.000000e+00> : vector<8x128xf32>
    %52 = tpu.matmul %50, %49, %cst_26 {dimension_numbers = #tpu.dot_dimension_numbers<[0], [0], [1], [1], [0, 1, 1, 1], [], []>} : vector<8x8xf32>, vector<8x128xf32>, vector<8x128xf32> -> vector<8x128xf32>
    %cst_27 = arith.constant dense<0xFF800000> : vector<128xf32>
    %53 = vector.multi_reduction <maximumf>, %52, %cst_27 [0] : vector<8x128xf32> to vector<128xf32>
    %54 = vector.shape_cast %53 : vector<128xf32> to vector<1x128xf32>
    %55 = vector.broadcast %54 : vector<1x128xf32> to vector<8x128xf32>
    %56 = arith.subf %52, %55 : vector<8x128xf32>
    %57 = math.exp %56 : vector<8x128xf32>
    %cst_28 = arith.constant dense<0.000000e+00> : vector<128xf32>
    %58 = vector.multi_reduction <add>, %57, %cst_28 [0] : vector<8x128xf32> to vector<128xf32>
    %59 = vector.shape_cast %58 : vector<128xf32> to vector<1x128xf32>
    %cst_29 = arith.constant dense<0.000000e+00> : vector<8x128xf32>
    %60 = tpu.matmul %51, %57, %cst_29 {dimension_numbers = #tpu.dot_dimension_numbers<[1], [0], [0], [1], [0, 0, 1, 1], [], []>} : vector<8x8xf32>, vector<8x128xf32>, vector<8x128xf32> -> vector<8x128xf32>
    %61 = tpu.reciprocal %59 : vector<1x128xf32> -> vector<1x128xf32>
    %62 = vector.broadcast %61 : vector<1x128xf32> to vector<8x128xf32>
    %63 = arith.mulf %60, %62 : vector<8x128xf32>
    %c2 = arith.constant 2 : index
    %c0_30 = arith.constant 0 : index
    %c0_31 = arith.constant 0 : index
    %64 = vector.load %arg6[%c2, %c0_30, %c0_31] : memref<8x64x8xf32, #tpu.memory_space<vmem>>, vector<1x64x8xf32>
    %65 = vector.shape_cast %64 : vector<1x64x8xf32> to vector<64x8xf32>
    %cst_32 = arith.constant dense<0.000000e+00> : vector<64x128xf32>
    %66 = tpu.matmul %65, %63, %cst_32 {dimension_numbers = #tpu.dot_dimension_numbers<[1], [0], [0], [1], [0, 0, 1, 1], [], []>} : vector<64x8xf32>, vector<8x128xf32>, vector<64x128xf32> -> vector<64x128xf32>
    %67 = arith.addf %48, %66 : vector<64x128xf32>
    %68 = vector.extract_strided_slice %5 {offsets = [24, 0], sizes = [8, 128], strides = [1, 1]} : vector<64x128xf32> to vector<8x128xf32>
    %69 = vector.extract_strided_slice %8 {offsets = [24, 0], sizes = [8, 8], strides = [1, 1]} : vector<64x8xf32> to vector<8x8xf32>
    %70 = vector.extract_strided_slice %9 {offsets = [24, 0], sizes = [8, 8], strides = [1, 1]} : vector<64x8xf32> to vector<8x8xf32>
    %cst_33 = arith.constant dense<0.000000e+00> : vector<8x128xf32>
    %71 = tpu.matmul %69, %68, %cst_33 {dimension_numbers = #tpu.dot_dimension_numbers<[0], [0], [1], [1], [0, 1, 1, 1], [], []>} : vector<8x8xf32>, vector<8x128xf32>, vector<8x128xf32> -> vector<8x128xf32>
    %cst_34 = arith.constant dense<0xFF800000> : vector<128xf32>
    %72 = vector.multi_reduction <maximumf>, %71, %cst_34 [0] : vector<8x128xf32> to vector<128xf32>
    %73 = vector.shape_cast %72 : vector<128xf32> to vector<1x128xf32>
    %74 = vector.broadcast %73 : vector<1x128xf32> to vector<8x128xf32>
    %75 = arith.subf %71, %74 : vector<8x128xf32>
    %76 = math.exp %75 : vector<8x128xf32>
    %cst_35 = arith.constant dense<0.000000e+00> : vector<128xf32>
    %77 = vector.multi_reduction <add>, %76, %cst_35 [0] : vector<8x128xf32> to vector<128xf32>
    %78 = vector.shape_cast %77 : vector<128xf32> to vector<1x128xf32>
    %cst_36 = arith.constant dense<0.000000e+00> : vector<8x128xf32>
    %79 = tpu.matmul %70, %76, %cst_36 {dimension_numbers = #tpu.dot_dimension_numbers<[1], [0], [0], [1], [0, 0, 1, 1], [], []>} : vector<8x8xf32>, vector<8x128xf32>, vector<8x128xf32> -> vector<8x128xf32>
    %80 = tpu.reciprocal %78 : vector<1x128xf32> -> vector<1x128xf32>
    %81 = vector.broadcast %80 : vector<1x128xf32> to vector<8x128xf32>
    %82 = arith.mulf %79, %81 : vector<8x128xf32>
    %c3 = arith.constant 3 : index
    %c0_37 = arith.constant 0 : index
    %c0_38 = arith.constant 0 : index
    %83 = vector.load %arg6[%c3, %c0_37, %c0_38] : memref<8x64x8xf32, #tpu.memory_space<vmem>>, vector<1x64x8xf32>
    %84 = vector.shape_cast %83 : vector<1x64x8xf32> to vector<64x8xf32>
    %cst_39 = arith.constant dense<0.000000e+00> : vector<64x128xf32>
    %85 = tpu.matmul %84, %82, %cst_39 {dimension_numbers = #tpu.dot_dimension_numbers<[1], [0], [0], [1], [0, 0, 1, 1], [], []>} : vector<64x8xf32>, vector<8x128xf32>, vector<64x128xf32> -> vector<64x128xf32>
    %86 = arith.addf %67, %85 : vector<64x128xf32>
    %87 = vector.extract_strided_slice %5 {offsets = [32, 0], sizes = [8, 128], strides = [1, 1]} : vector<64x128xf32> to vector<8x128xf32>
    %88 = vector.extract_strided_slice %8 {offsets = [32, 0], sizes = [8, 8], strides = [1, 1]} : vector<64x8xf32> to vector<8x8xf32>
    %89 = vector.extract_strided_slice %9 {offsets = [32, 0], sizes = [8, 8], strides = [1, 1]} : vector<64x8xf32> to vector<8x8xf32>
    %cst_40 = arith.constant dense<0.000000e+00> : vector<8x128xf32>
    %90 = tpu.matmul %88, %87, %cst_40 {dimension_numbers = #tpu.dot_dimension_numbers<[0], [0], [1], [1], [0, 1, 1, 1], [], []>} : vector<8x8xf32>, vector<8x128xf32>, vector<8x128xf32> -> vector<8x128xf32>
    %cst_41 = arith.constant dense<0xFF800000> : vector<128xf32>
    %91 = vector.multi_reduction <maximumf>, %90, %cst_41 [0] : vector<8x128xf32> to vector<128xf32>
    %92 = vector.shape_cast %91 : vector<128xf32> to vector<1x128xf32>
    %93 = vector.broadcast %92 : vector<1x128xf32> to vector<8x128xf32>
    %94 = arith.subf %90, %93 : vector<8x128xf32>
    %95 = math.exp %94 : vector<8x128xf32>
    %cst_42 = arith.constant dense<0.000000e+00> : vector<128xf32>
    %96 = vector.multi_reduction <add>, %95, %cst_42 [0] : vector<8x128xf32> to vector<128xf32>
    %97 = vector.shape_cast %96 : vector<128xf32> to vector<1x128xf32>
    %cst_43 = arith.constant dense<0.000000e+00> : vector<8x128xf32>
    %98 = tpu.matmul %89, %95, %cst_43 {dimension_numbers = #tpu.dot_dimension_numbers<[1], [0], [0], [1], [0, 0, 1, 1], [], []>} : vector<8x8xf32>, vector<8x128xf32>, vector<8x128xf32> -> vector<8x128xf32>
    %99 = tpu.reciprocal %97 : vector<1x128xf32> -> vector<1x128xf32>
    %100 = vector.broadcast %99 : vector<1x128xf32> to vector<8x128xf32>
    %101 = arith.mulf %98, %100 : vector<8x128xf32>
    %c4 = arith.constant 4 : index
    %c0_44 = arith.constant 0 : index
    %c0_45 = arith.constant 0 : index
    %102 = vector.load %arg6[%c4, %c0_44, %c0_45] : memref<8x64x8xf32, #tpu.memory_space<vmem>>, vector<1x64x8xf32>
    %103 = vector.shape_cast %102 : vector<1x64x8xf32> to vector<64x8xf32>
    %cst_46 = arith.constant dense<0.000000e+00> : vector<64x128xf32>
    %104 = tpu.matmul %103, %101, %cst_46 {dimension_numbers = #tpu.dot_dimension_numbers<[1], [0], [0], [1], [0, 0, 1, 1], [], []>} : vector<64x8xf32>, vector<8x128xf32>, vector<64x128xf32> -> vector<64x128xf32>
    %105 = arith.addf %86, %104 : vector<64x128xf32>
    %106 = vector.extract_strided_slice %5 {offsets = [40, 0], sizes = [8, 128], strides = [1, 1]} : vector<64x128xf32> to vector<8x128xf32>
    %107 = vector.extract_strided_slice %8 {offsets = [40, 0], sizes = [8, 8], strides = [1, 1]} : vector<64x8xf32> to vector<8x8xf32>
    %108 = vector.extract_strided_slice %9 {offsets = [40, 0], sizes = [8, 8], strides = [1, 1]} : vector<64x8xf32> to vector<8x8xf32>
    %cst_47 = arith.constant dense<0.000000e+00> : vector<8x128xf32>
    %109 = tpu.matmul %107, %106, %cst_47 {dimension_numbers = #tpu.dot_dimension_numbers<[0], [0], [1], [1], [0, 1, 1, 1], [], []>} : vector<8x8xf32>, vector<8x128xf32>, vector<8x128xf32> -> vector<8x128xf32>
    %cst_48 = arith.constant dense<0xFF800000> : vector<128xf32>
    %110 = vector.multi_reduction <maximumf>, %109, %cst_48 [0] : vector<8x128xf32> to vector<128xf32>
    %111 = vector.shape_cast %110 : vector<128xf32> to vector<1x128xf32>
    %112 = vector.broadcast %111 : vector<1x128xf32> to vector<8x128xf32>
    %113 = arith.subf %109, %112 : vector<8x128xf32>
    %114 = math.exp %113 : vector<8x128xf32>
    %cst_49 = arith.constant dense<0.000000e+00> : vector<128xf32>
    %115 = vector.multi_reduction <add>, %114, %cst_49 [0] : vector<8x128xf32> to vector<128xf32>
    %116 = vector.shape_cast %115 : vector<128xf32> to vector<1x128xf32>
    %cst_50 = arith.constant dense<0.000000e+00> : vector<8x128xf32>
    %117 = tpu.matmul %108, %114, %cst_50 {dimension_numbers = #tpu.dot_dimension_numbers<[1], [0], [0], [1], [0, 0, 1, 1], [], []>} : vector<8x8xf32>, vector<8x128xf32>, vector<8x128xf32> -> vector<8x128xf32>
    %118 = tpu.reciprocal %116 : vector<1x128xf32> -> vector<1x128xf32>
    %119 = vector.broadcast %118 : vector<1x128xf32> to vector<8x128xf32>
    %120 = arith.mulf %117, %119 : vector<8x128xf32>
    %c5 = arith.constant 5 : index
    %c0_51 = arith.constant 0 : index
    %c0_52 = arith.constant 0 : index
    %121 = vector.load %arg6[%c5, %c0_51, %c0_52] : memref<8x64x8xf32, #tpu.memory_space<vmem>>, vector<1x64x8xf32>
    %122 = vector.shape_cast %121 : vector<1x64x8xf32> to vector<64x8xf32>
    %cst_53 = arith.constant dense<0.000000e+00> : vector<64x128xf32>
    %123 = tpu.matmul %122, %120, %cst_53 {dimension_numbers = #tpu.dot_dimension_numbers<[1], [0], [0], [1], [0, 0, 1, 1], [], []>} : vector<64x8xf32>, vector<8x128xf32>, vector<64x128xf32> -> vector<64x128xf32>
    %124 = arith.addf %105, %123 : vector<64x128xf32>
    %125 = vector.extract_strided_slice %5 {offsets = [48, 0], sizes = [8, 128], strides = [1, 1]} : vector<64x128xf32> to vector<8x128xf32>
    %126 = vector.extract_strided_slice %8 {offsets = [48, 0], sizes = [8, 8], strides = [1, 1]} : vector<64x8xf32> to vector<8x8xf32>
    %127 = vector.extract_strided_slice %9 {offsets = [48, 0], sizes = [8, 8], strides = [1, 1]} : vector<64x8xf32> to vector<8x8xf32>
    %cst_54 = arith.constant dense<0.000000e+00> : vector<8x128xf32>
    %128 = tpu.matmul %126, %125, %cst_54 {dimension_numbers = #tpu.dot_dimension_numbers<[0], [0], [1], [1], [0, 1, 1, 1], [], []>} : vector<8x8xf32>, vector<8x128xf32>, vector<8x128xf32> -> vector<8x128xf32>
    %cst_55 = arith.constant dense<0xFF800000> : vector<128xf32>
    %129 = vector.multi_reduction <maximumf>, %128, %cst_55 [0] : vector<8x128xf32> to vector<128xf32>
    %130 = vector.shape_cast %129 : vector<128xf32> to vector<1x128xf32>
    %131 = vector.broadcast %130 : vector<1x128xf32> to vector<8x128xf32>
    %132 = arith.subf %128, %131 : vector<8x128xf32>
    %133 = math.exp %132 : vector<8x128xf32>
    %cst_56 = arith.constant dense<0.000000e+00> : vector<128xf32>
    %134 = vector.multi_reduction <add>, %133, %cst_56 [0] : vector<8x128xf32> to vector<128xf32>
    %135 = vector.shape_cast %134 : vector<128xf32> to vector<1x128xf32>
    %cst_57 = arith.constant dense<0.000000e+00> : vector<8x128xf32>
    %136 = tpu.matmul %127, %133, %cst_57 {dimension_numbers = #tpu.dot_dimension_numbers<[1], [0], [0], [1], [0, 0, 1, 1], [], []>} : vector<8x8xf32>, vector<8x128xf32>, vector<8x128xf32> -> vector<8x128xf32>
    %137 = tpu.reciprocal %135 : vector<1x128xf32> -> vector<1x128xf32>
    %138 = vector.broadcast %137 : vector<1x128xf32> to vector<8x128xf32>
    %139 = arith.mulf %136, %138 : vector<8x128xf32>
    %c6 = arith.constant 6 : index
    %c0_58 = arith.constant 0 : index
    %c0_59 = arith.constant 0 : index
    %140 = vector.load %arg6[%c6, %c0_58, %c0_59] : memref<8x64x8xf32, #tpu.memory_space<vmem>>, vector<1x64x8xf32>
    %141 = vector.shape_cast %140 : vector<1x64x8xf32> to vector<64x8xf32>
    %cst_60 = arith.constant dense<0.000000e+00> : vector<64x128xf32>
    %142 = tpu.matmul %141, %139, %cst_60 {dimension_numbers = #tpu.dot_dimension_numbers<[1], [0], [0], [1], [0, 0, 1, 1], [], []>} : vector<64x8xf32>, vector<8x128xf32>, vector<64x128xf32> -> vector<64x128xf32>
    %143 = arith.addf %124, %142 : vector<64x128xf32>
    %144 = vector.extract_strided_slice %5 {offsets = [56, 0], sizes = [8, 128], strides = [1, 1]} : vector<64x128xf32> to vector<8x128xf32>
    %145 = vector.extract_strided_slice %8 {offsets = [56, 0], sizes = [8, 8], strides = [1, 1]} : vector<64x8xf32> to vector<8x8xf32>
    %146 = vector.extract_strided_slice %9 {offsets = [56, 0], sizes = [8, 8], strides = [1, 1]} : vector<64x8xf32> to vector<8x8xf32>
    %cst_61 = arith.constant dense<0.000000e+00> : vector<8x128xf32>
    %147 = tpu.matmul %145, %144, %cst_61 {dimension_numbers = #tpu.dot_dimension_numbers<[0], [0], [1], [1], [0, 1, 1, 1], [], []>} : vector<8x8xf32>, vector<8x128xf32>, vector<8x128xf32> -> vector<8x128xf32>
    %cst_62 = arith.constant dense<0xFF800000> : vector<128xf32>
    %148 = vector.multi_reduction <maximumf>, %147, %cst_62 [0] : vector<8x128xf32> to vector<128xf32>
    %149 = vector.shape_cast %148 : vector<128xf32> to vector<1x128xf32>
    %150 = vector.broadcast %149 : vector<1x128xf32> to vector<8x128xf32>
    %151 = arith.subf %147, %150 : vector<8x128xf32>
    %152 = math.exp %151 : vector<8x128xf32>
    %cst_63 = arith.constant dense<0.000000e+00> : vector<128xf32>
    %153 = vector.multi_reduction <add>, %152, %cst_63 [0] : vector<8x128xf32> to vector<128xf32>
    %154 = vector.shape_cast %153 : vector<128xf32> to vector<1x128xf32>
    %cst_64 = arith.constant dense<0.000000e+00> : vector<8x128xf32>
    %155 = tpu.matmul %146, %152, %cst_64 {dimension_numbers = #tpu.dot_dimension_numbers<[1], [0], [0], [1], [0, 0, 1, 1], [], []>} : vector<8x8xf32>, vector<8x128xf32>, vector<8x128xf32> -> vector<8x128xf32>
    %156 = tpu.reciprocal %154 : vector<1x128xf32> -> vector<1x128xf32>
    %157 = vector.broadcast %156 : vector<1x128xf32> to vector<8x128xf32>
    %158 = arith.mulf %155, %157 : vector<8x128xf32>
    %c7 = arith.constant 7 : index
    %c0_65 = arith.constant 0 : index
    %c0_66 = arith.constant 0 : index
    %159 = vector.load %arg6[%c7, %c0_65, %c0_66] : memref<8x64x8xf32, #tpu.memory_space<vmem>>, vector<1x64x8xf32>
    %160 = vector.shape_cast %159 : vector<1x64x8xf32> to vector<64x8xf32>
    %cst_67 = arith.constant dense<0.000000e+00> : vector<64x128xf32>
    %161 = tpu.matmul %160, %158, %cst_67 {dimension_numbers = #tpu.dot_dimension_numbers<[1], [0], [0], [1], [0, 0, 1, 1], [], []>} : vector<64x8xf32>, vector<8x128xf32>, vector<64x128xf32> -> vector<64x128xf32>
    %162 = arith.addf %143, %161 : vector<64x128xf32>
    %163 = arith.addf %1, %162 : vector<64x128xf32>
    %c0_68 = arith.constant 0 : index
    %c0_69 = arith.constant 0 : index
    %164 = vector.load %arg7[%c0_68, %c0_69] : memref<64x1xf32, #tpu.memory_space<vmem>>, vector<64x1xf32>
    %165 = vector.broadcast %164 : vector<64x1xf32> to vector<64x128xf32>
    %166 = arith.addf %163, %165 : vector<64x128xf32>
    %c0_70 = arith.constant 0 : index
    %c0_71 = arith.constant 0 : index
    %c0_72 = arith.constant 0 : index
    %167 = vector.load %arg8[%c0_70, %c0_71, %c0_72] : memref<1x64x128xf32, #tpu.memory_space<vmem>>, vector<1x64x128xf32>
    %168 = vector.shape_cast %167 : vector<1x64x128xf32> to vector<64x128xf32>
    %169 = vector.shape_cast %166 : vector<64x128xf32> to vector<1x64x128xf32>
    tpu.vector_store %arg8[%c0_70, %c0_71, %c0_72], %169 {strides = array<i32>} : memref<1x64x128xf32, #tpu.memory_space<vmem>>, vector<1x64x128xf32>,
    return
  }
  func.func @transform_0(%arg0: i32, %arg1: i32) -> (i32, i32, i32) {
    %c0_i32 = arith.constant 0 : i32
    %c0_i32_0 = arith.constant 0 : i32
    return %arg0, %c0_i32, %arg1 : i32, i32, i32
  }
  func.func @transform_1(%arg0: i32, %arg1: i32) -> (i32, i32, i32) {
    %c0_i32 = arith.constant 0 : i32
    %c0_i32_0 = arith.constant 0 : i32
    %c0_i32_1 = arith.constant 0 : i32
    return %arg0, %c0_i32, %c0_i32_0 : i32, i32, i32
  }
  func.func @transform_2(%arg0: i32, %arg1: i32) -> (i32, i32) {
    %c0_i32 = arith.constant 0 : i32
    %c0_i32_0 = arith.constant 0 : i32
    %c0_i32_1 = arith.constant 0 : i32
    return %c0_i32, %c0_i32_0 : i32, i32
  }
  func.func @transform_3(%arg0: i32, %arg1: i32) -> (i32, i32) {
    %c0_i32 = arith.constant 0 : i32
    %c0_i32_0 = arith.constant 0 : i32
    %c0_i32_1 = arith.constant 0 : i32
    return %c0_i32, %c0_i32_0 : i32, i32
  }
  func.func @transform_4(%arg0: i32, %arg1: i32) -> (i32, i32, i32) {
    %c0_i32 = arith.constant 0 : i32
    %c0_i32_0 = arith.constant 0 : i32
    %c0_i32_1 = arith.constant 0 : i32
    %c0_i32_2 = arith.constant 0 : i32
    return %c0_i32, %c0_i32_0, %c0_i32_1 : i32, i32, i32
  }
  func.func @transform_5(%arg0: i32, %arg1: i32) -> (i32, i32) {
    %c0_i32 = arith.constant 0 : i32
    %c0_i32_0 = arith.constant 0 : i32
    %c0_i32_1 = arith.constant 0 : i32
    return %c0_i32, %c0_i32_0 : i32, i32
  }
  func.func @transform_6(%arg0: i32, %arg1: i32) -> (i32, i32, i32) {
    %c0_i32 = arith.constant 0 : i32
    %c0_i32_0 = arith.constant 0 : i32
    return %arg0, %c0_i32, %arg1 : i32, i32, i32
  }
}

</mosaic_0001>

<llo_original>
// kernel: tpu_custom_call.1
$region0: #{tpu_custom_call.1}
  #allocation0 [shape = 'u32[]', space=smem, size = 0x4, offset = 0x4, fixed_abs, tag = 'smem constant byte address 0x4 - core index']
  #allocation1 [shape = 'u32[144,128]{1,0:T(1,128)}', space=vmem, size = 0x12000, scoped, tag = 'internal scratch']
  %s0 = inlined_call_operand.vmem [shape: f32[2,64,256], index: 0, kind: input, shape index: {}]
  %s1 = inlined_call_operand.vmem [shape: f32[2,8,32], index: 1, kind: input, shape index: {}]
  %s2 = inlined_call_operand.vmem [shape: f32[64,64], index: 2, kind: input, shape index: {}]
  %s3 = inlined_call_operand.vmem [shape: f32[128,32], index: 3, kind: input, shape index: {}]
  %s4 = inlined_call_operand.vmem [shape: f32[8,64,8], index: 4, kind: input, shape index: {}]
  %s5 = inlined_call_operand.vmem [shape: f32[64,1], index: 5, kind: input, shape index: {}]
  %s6 = inlined_call_operand.hbm [shape: f32[2,64,256], index: 6, kind: output, shape index: {}]
  %s7 = sld [smem:[#allocation0]]
  $region95: #{tpu_custom_call.1} parent=0
    _
  %s9 = ssub.s32 1, %s7
  %s10 = scalar_select 0, %s9, %s7
  $region1: #{tpu_custom_call.1} parent=0
    #allocation2 [shape = 'u8[65536]{0}', space=vmem, size = 0x10000, scoped, tag = 'input window, operand 0']
    #allocation3 [shape = 'u8[65536]{0}', space=vmem, size = 0x10000, scoped, tag = 'output window, operand 0']
    #allocation4 [shape = 's32[2]{0}', space=sflag, size = 0x8, scoped, tag = 'scoped memory for tpu_custom_call.1']
    %11 = vsyncpa [#allocation4], 0
    %s12 = scalar_lea.sflag [#allocation4], 1
    %13 = vsyncpa %s12, 0
    loop: start=0, step=1, limit=6
    $region2: #{tpu_custom_call.1} parent=1 // loop_pre_header
      _
    $region3: #{tpu_custom_call.1} parent=1 // loop_header
      %s15 = sphi 0, %s19
      %p16 = scmp.ge.s32.totalorder %s15, 6
      %s22 = sphi 0, %s34
      %s23 = sphi 0, %s30
      %s24 = sphi 0, %s22
      %s25 = sphi 0, %s23
      %s26 = sphi 0, %s24
      %s27 = sphi 0, %s25
      %s39 = sphi 0, %s41
      %s42 = sphi 0, %s39
      %s43 = sphi 0, %s42
      %s59 = sphi 0, %s43
      %s65 = sphi 0, %s67
      %s68 = sphi 0, %s65
      %s69 = sphi 0, %s68
      %s85 = sphi 0, %s69
      %s89 = sphi 0, %s89
      %s91 = sphi 0, %s89
      %s92 = sphi 0, %s91
      %s106 = sphi 0, %s92
      %s110 = sphi 0, %s110
      %s112 = sphi 0, %s110
      %s113 = sphi 0, %s112
      %s127 = sphi 0, %s113
      %s131 = sphi 0, %s131
      %s133 = sphi 0, %s131
      %s134 = sphi 0, %s133
      %s148 = sphi 0, %s134
      %s152 = sphi 0, %s152
      %s154 = sphi 0, %s152
      %s155 = sphi 0, %s154
      %s169 = sphi 0, %s155
      %s177 = sphi 0, %s179
      %s180 = sphi 0, %s177
      %s181 = sphi 0, %s180
      %s197 = sphi 0, %s181
    $region4: #{tpu_custom_call.1} parent=1 // loop_header_branch
      %18 = sbr.rel (%p16) target = $region8
    $region5: #{tpu_custom_call.1} parent=1 // loop_body
      %s20 = ssub.s32 %s15, 1
      %s21 = ssub.s32 %s15, 2
      %s28 = sadd.s32 1, %s23
      %p29 = scmp.ge.s32.totalorder %s28, 2
      %s30 = scalar_select %p29, 0, %s28
      %s31 = sadd.s32 1, %s22
      %s32 = scalar_select %p29, %s31, %s22
      %p33 = scmp.ge.s32.totalorder %s32, 2
      %s34 = scalar_select %p33, 0, %s32
      %s35 = ssub.s32 %s22, %s34
      %s36 = ssub.s32 %s23, %s30
      %s37 = sor.u32 %s35, %s36
      %p38 = scmp.eq.s32.totalorder %s37, 0
      %s40 = sadd.s32 %s39, 1
      %s41 = scalar_select %p38, %s39, %s40
      %p44 = pneg %p38
      %p45 = scmp.eq.s32.totalorder %s15, 3
      %p46 = por %p44, %p45
      %p47 = scmp.ne.s32.totalorder %s39, %s42
      %p48 = scmp.eq.s32.totalorder %s15, 0
      %p49 = por %p47, %p48
      %p50 = scmp.ne.s32.totalorder %s39, %s42
      %p51 = scmp.eq.s32.totalorder %s20, 3
      %p52 = por %p50, %p51
      %p53 = scmp.ne.s32.totalorder %s42, %s43
      %p54 = scmp.eq.s32.totalorder %s20, 0
      %p55 = por %p53, %p54
      %p56 = scmp.ne.s32.totalorder %s42, %s43
      %p57 = scmp.eq.s32.totalorder %s21, 3
      %p58 = por %p56, %p57
      %p60 = scmp.ne.s32.totalorder %s43, %s59
      %p61 = scmp.eq.s32.totalorder %s21, 0
      %p62 = por %p60, %p61
      %s63 = ssub.s32 %s22, %s34
      %p64 = scmp.eq.s32.totalorder %s63, 0
      %s66 = sadd.s32 %s65, 1
      %s67 = scalar_select %p64, %s65, %s66
      %p70 = pneg %p64
      %p71 = scmp.eq.s32.totalorder %s15, 3
      %p72 = por %p70, %p71
      %p73 = scmp.ne.s32.totalorder %s65, %s68
      %p74 = scmp.eq.s32.totalorder %s15, 0
      %p75 = por %p73, %p74
      %p76 = scmp.ne.s32.totalorder %s65, %s68
      %p77 = scmp.eq.s32.totalorder %s20, 3
      %p78 = por %p76, %p77
      %p79 = scmp.ne.s32.totalorder %s68, %s69
      %p80 = scmp.eq.s32.totalorder %s20, 0
      %p81 = por %p79, %p80
      %p82 = scmp.ne.s32.totalorder %s68, %s69
      %p83 = scmp.eq.s32.totalorder %s21, 3
      %p84 = por %p82, %p83
      %p86 = scmp.ne.s32.totalorder %s69, %s85
      %p87 = scmp.eq.s32.totalorder %s21, 0
      %p88 = por %p86, %p87
      %s90 = sadd.s32 %s89, 1
      %p93 = scmp.eq.s32.totalorder %s15, 3
      %p94 = scmp.ne.s32.totalorder %s89, %s91
      %p95 = scmp.eq.s32.totalorder %s15, 0
      %p96 = por %p94, %p95
      %p97 = scmp.ne.s32.totalorder %s89, %s91
      %p98 = scmp.eq.s32.totalorder %s20, 3
      %p99 = por %p97, %p98
      %p100 = scmp.ne.s32.totalorder %s91, %s92
      %p101 = scmp.eq.s32.totalorder %s20, 0
      %p102 = por %p100, %p101
      %p103 = scmp.ne.s32.totalorder %s91, %s92
      %p104 = scmp.eq.s32.totalorder %s21, 3
      %p105 = por %p103, %p104
      %p107 = scmp.ne.s32.totalorder %s92, %s106
      %p108 = scmp.eq.s32.totalorder %s21, 0
      %p109 = por %p107, %p108
      %s111 = sadd.s32 %s110, 1
      %p114 = scmp.eq.s32.totalorder %s15, 3
      %p115 = scmp.ne.s32.totalorder %s110, %s112
      %p116 = scmp.eq.s32.totalorder %s15, 0
      %p117 = por %p115, %p116
      %p118 = scmp.ne.s32.totalorder %s110, %s112
      %p119 = scmp.eq.s32.totalorder %s20, 3
      %p120 = por %p118, %p119
      %p121 = scmp.ne.s32.totalorder %s112, %s113
      %p122 = scmp.eq.s32.totalorder %s20, 0
      %p123 = por %p121, %p122
      %p124 = scmp.ne.s32.totalorder %s112, %s113
      %p125 = scmp.eq.s32.totalorder %s21, 3
      %p126 = por %p124, %p125
      %p128 = scmp.ne.s32.totalorder %s113, %s127
      %p129 = scmp.eq.s32.totalorder %s21, 0
      %p130 = por %p128, %p129
      %s132 = sadd.s32 %s131, 1
      %p135 = scmp.eq.s32.totalorder %s15, 3
      %p136 = scmp.ne.s32.totalorder %s131, %s133
      %p137 = scmp.eq.s32.totalorder %s15, 0
      %p138 = por %p136, %p137
      %p139 = scmp.ne.s32.totalorder %s131, %s133
      %p140 = scmp.eq.s32.totalorder %s20, 3
      %p141 = por %p139, %p140
      %p142 = scmp.ne.s32.totalorder %s133, %s134
      %p143 = scmp.eq.s32.totalorder %s20, 0
      %p144 = por %p142, %p143
      %p145 = scmp.ne.s32.totalorder %s133, %s134
      %p146 = scmp.eq.s32.totalorder %s21, 3
      %p147 = por %p145, %p146
      %p149 = scmp.ne.s32.totalorder %s134, %s148
      %p150 = scmp.eq.s32.totalorder %s21, 0
      %p151 = por %p149, %p150
      %s153 = sadd.s32 %s152, 1
      %p156 = scmp.eq.s32.totalorder %s15, 3
      %p157 = scmp.ne.s32.totalorder %s152, %s154
      %p158 = scmp.eq.s32.totalorder %s15, 0
      %p159 = por %p157, %p158
      %p160 = scmp.ne.s32.totalorder %s152, %s154
      %p161 = scmp.eq.s32.totalorder %s20, 3
      %p162 = por %p160, %p161
      %p163 = scmp.ne.s32.totalorder %s154, %s155
      %p164 = scmp.eq.s32.totalorder %s20, 0
      %p165 = por %p163, %p164
      %p166 = scmp.ne.s32.totalorder %s154, %s155
      %p167 = scmp.eq.s32.totalorder %s21, 3
      %p168 = por %p166, %p167
      %p170 = scmp.ne.s32.totalorder %s155, %s169
      %p171 = scmp.eq.s32.totalorder %s21, 0
      %p172 = por %p170, %p171
      %s173 = ssub.s32 %s22, %s34
      %s174 = ssub.s32 %s23, %s30
      %s175 = sor.u32 %s173, %s174
      %p176 = scmp.eq.s32.totalorder %s175, 0
      %s178 = sadd.s32 %s177, 1
      %s179 = scalar_select %p176, %s177, %s178
      %p182 = pneg %p176
      %p183 = scmp.eq.s32.totalorder %s15, 3
      %p184 = por %p182, %p183
      %p185 = scmp.ne.s32.totalorder %s177, %s180
      %p186 = scmp.eq.s32.totalorder %s15, 0
      %p187 = por %p185, %p186
      %p188 = scmp.ne.s32.totalorder %s177, %s180
      %p189 = scmp.eq.s32.totalorder %s20, 3
      %p190 = por %p188, %p189
      %p191 = scmp.ne.s32.totalorder %s180, %s181
      %p192 = scmp.eq.s32.totalorder %s20, 0
      %p193 = por %p191, %p192
      %p194 = scmp.ne.s32.totalorder %s180, %s181
      %p195 = scmp.eq.s32.totalorder %s21, 3
      %p196 = por %p194, %p195
      %p198 = scmp.ne.s32.totalorder %s181, %s197
      %p199 = scmp.eq.s32.totalorder %s21, 0
      %p200 = por %p198, %p199
      %p201 = scmp.le.s32.totalorder 1, %s15
      %p202 = scmp.lt.s32.totalorder %s15, 5
      %p203 = pnand %p201, %p202
      %p204 = pneg %p203
      // Predicated region
      $region9: #{tpu_custom_call.1} parent=5 // pred_check
        _
      $region10: #{tpu_custom_call.1} parent=5 // pred_check_branch
        %206 = sbr.rel (%p203) target = $region12
      $region11: #{tpu_custom_call.1} parent=5 // pred_region
        %s207 = ssub.s32 %s15, 1
        // Predicated region
        $region13: #{tpu_custom_call.1} parent=11 // pred_check
          %p208 = pneg %p102
        $region14: #{tpu_custom_call.1} parent=11 // pred_check_branch
          %210 = sbr.rel (%p208) target = $region16
        $region15: #{tpu_custom_call.1} parent=11 // pred_region
          _
        $region16: #{tpu_custom_call.1} parent=11 // pred_fallthru
          _
        // Predicated region
        $region17: #{tpu_custom_call.1} parent=11 // pred_check
          %p211 = pneg %p123
        $region18: #{tpu_custom_call.1} parent=11 // pred_check_branch
          %213 = sbr.rel (%p211) target = $region20
        $region19: #{tpu_custom_call.1} parent=11 // pred_region
          _
        $region20: #{tpu_custom_call.1} parent=11 // pred_fallthru
          _
        // Predicated region
        $region21: #{tpu_custom_call.1} parent=11 // pred_check
          %p214 = pneg %p144
        $region22: #{tpu_custom_call.1} parent=11 // pred_check_branch
          %216 = sbr.rel (%p214) target = $region24
        $region23: #{tpu_custom_call.1} parent=11 // pred_region
          _
        $region24: #{tpu_custom_call.1} parent=11 // pred_fallthru
          _
        // Predicated region
        $region25: #{tpu_custom_call.1} parent=11 // pred_check
          %p217 = pneg %p165
        $region26: #{tpu_custom_call.1} parent=11 // pred_check_branch
          %219 = sbr.rel (%p217) target = $region28
        $region27: #{tpu_custom_call.1} parent=11 // pred_region
          _
        $region28: #{tpu_custom_call.1} parent=11 // pred_fallthru
          _
      $region12: #{tpu_custom_call.1} parent=5 // pred_fallthru
        _
      %p220 = scmp.lt.s32.totalorder %s15, 4
      // Predicated region
      $region29: #{tpu_custom_call.1} parent=5 // pred_check
        %p221 = pneg %p220
      $region30: #{tpu_custom_call.1} parent=5 // pred_check_branch
        %223 = sbr.rel (%p221) target = $region32
      $region31: #{tpu_custom_call.1} parent=5 // pred_region
        // Predicated region
        $region33: #{tpu_custom_call.1} parent=31 // pred_check
          %p224 = pneg %p49
        $region34: #{tpu_custom_call.1} parent=31 // pred_check_branch
          %226 = sbr.rel (%p224) target = $region36
        $region35: #{tpu_custom_call.1} parent=31 // pred_region
          %s227 = sand.u32 %s39, 1
          %s228 = sand.u32 %s39, 1
          %s229 = smul.addr %s228, 64
          %s230 = scalar_lea.vmem [#allocation2], %s229
          %s231 = smul.addr %s22, 16
          %s232 = sadd.s32 %s23, %s231
          %s233 = smul.addr %s232, 8
          %s234 = scalar_lea.vmem %s0, %s233
          // Predicated region
          $region37: #{tpu_custom_call.1} parent=35 // pred_check
            _
          $region38: #{tpu_custom_call.1} parent=35 // pred_check_branch
            %236 = sbr.rel (0) target = $region40
          $region39: #{tpu_custom_call.1} parent=35 // pred_region
            // Predicated region
            $region41: #{tpu_custom_call.1} parent=39 // pred_check
              _
            $region42: #{tpu_custom_call.1} parent=39 // pred_check_branch
              %238 = sbr.rel (0) target = $region44
            $region43: #{tpu_custom_call.1} parent=39 // pred_region
              // Predicated region
              $region56: #{tpu_custom_call.1} parent=43 // pred_check
                _
              $region57: #{tpu_custom_call.1} parent=43 // pred_check_branch
                %268 = sbr.rel (0) target = $region59
              $region58: #{tpu_custom_call.1} parent=43 // pred_region
                loop: start=0, step=1, limit=1
                $region60: #{tpu_custom_call.1} parent=58 // loop_pre_header
                  _
                $region61: #{tpu_custom_call.1} parent=58 // loop_header
                  %s270 = sphi 0, %s274
                  %p271 = scmp.ge.s32.totalorder %s270, 1
                  %s275 = sphi %s234, %s234
                  %s276 = sphi %s230, %s230
                $region62: #{tpu_custom_call.1} parent=58 // loop_header_branch
                  %273 = sbr.rel (%p271) target = $region66
                $region63: #{tpu_custom_call.1} parent=58 // loop_body
                  %v277 = vld [vmem:[%s275] sm:$0xff]
                  %278 = vst [vmem:[%s276] sm:$0xff] %v277
                  %v279 = vld [vmem:[%s275 + $0x10] sm:$0xff]
                  %280 = vst [vmem:[%s276 + $0x8] sm:$0xff] %v279
                  %v281 = vld [vmem:[%s275 + $0x20] sm:$0xff]
                  %282 = vst [vmem:[%s276 + $0x10] sm:$0xff] %v281
                  %v283 = vld [vmem:[%s275 + $0x30] sm:$0xff]
                  %284 = vst [vmem:[%s276 + $0x18] sm:$0xff] %v283
                  %v285 = vld [vmem:[%s275 + $0x40] sm:$0xff]
                  %286 = vst [vmem:[%s276 + $0x20] sm:$0xff] %v285
                  %v287 = vld [vmem:[%s275 + $0x50] sm:$0xff]
                  %288 = vst [vmem:[%s276 + $0x28] sm:$0xff] %v287
                  %v289 = vld [vmem:[%s275 + $0x60] sm:$0xff]
                  %290 = vst [vmem:[%s276 + $0x30] sm:$0xff] %v289
                  %v291 = vld [vmem:[%s275 + $0x70] sm:$0xff]
                  %292 = vst [vmem:[%s276 + $0x38] sm:$0xff] %v291
                $region64: #{tpu_custom_call.1} parent=58 // loop_footer
                  %s274 = sadd.s32 1, %s270
                $region65: #{tpu_custom_call.1} parent=58 // loop_footer_branch
                  %269 = sbr.rel target = $region61
                $region66: #{tpu_custom_call.1} parent=58 // loop_exit
                  _
              $region59: #{tpu_custom_call.1} parent=43 // pred_fallthru
                _
              // Predicated region
              $region67: #{tpu_custom_call.1} parent=43 // pred_check
                _
              $region68: #{tpu_custom_call.1} parent=43 // pred_check_branch
                %294 = sbr.rel target = $region70
              $region69: #{tpu_custom_call.1} parent=43 // pred_region
                _
              $region70: #{tpu_custom_call.1} parent=43 // pred_fallthru
                _
            $region44: #{tpu_custom_call.1} parent=39 // pred_fallthru
              _
            // Predicated region
            $region45: #{tpu_custom_call.1} parent=39 // pred_check
              _
            $region46: #{tpu_custom_call.1} parent=39 // pred_check_branch
              %240 = sbr.rel target = $region48
            $region47: #{tpu_custom_call.1} parent=39 // pred_region
              %s242 = ssub.s32 256, 1
              loop: start=0, step=1, limit=1
              $region49: #{tpu_custom_call.1} parent=47 // loop_pre_header
                _
              $region50: #{tpu_custom_call.1} parent=47 // loop_header
                %s244 = sphi 0, %s248
                %p245 = scmp.ge.s32.totalorder %s244, 1
                %s249 = sphi %s234, %s234
                %s250 = sphi %s230, %s230
              $region51: #{tpu_custom_call.1} parent=47 // loop_header_branch
                %247 = sbr.rel (%p245) target = $region55
              $region52: #{tpu_custom_call.1} parent=47 // loop_body
                %v251 = vld [vmem:[%s249] sm:%s242]
                %252 = vst [vmem:[%s250] sm:%s242] %v251
                %v253 = vld [vmem:[%s249 + $0x10] sm:%s242]
                %254 = vst [vmem:[%s250 + $0x8] sm:%s242] %v253
                %v255 = vld [vmem:[%s249 + $0x20] sm:%s242]
                %256 = vst [vmem:[%s250 + $0x10] sm:%s242] %v255
                %v257 = vld [vmem:[%s249 + $0x30] sm:%s242]
                %258 = vst [vmem:[%s250 + $0x18] sm:%s242] %v257
                %v259 = vld [vmem:[%s249 + $0x40] sm:%s242]
                %260 = vst [vmem:[%s250 + $0x20] sm:%s242] %v259
                %v261 = vld [vmem:[%s249 + $0x50] sm:%s242]
                %262 = vst [vmem:[%s250 + $0x28] sm:%s242] %v261
                %v263 = vld [vmem:[%s249 + $0x60] sm:%s242]
                %264 = vst [vmem:[%s250 + $0x30] sm:%s242] %v263
                %v265 = vld [vmem:[%s249 + $0x70] sm:%s242]
                %266 = vst [vmem:[%s250 + $0x38] sm:%s242] %v265
              $region53: #{tpu_custom_call.1} parent=47 // loop_footer
                %s248 = sadd.s32 1, %s244
              $region54: #{tpu_custom_call.1} parent=47 // loop_footer_branch
                %243 = sbr.rel target = $region50
              $region55: #{tpu_custom_call.1} parent=47 // loop_exit
                _
            $region48: #{tpu_custom_call.1} parent=39 // pred_fallthru
              _
          $region40: #{tpu_custom_call.1} parent=35 // pred_fallthru
            _
          %295 = vnop
        $region36: #{tpu_custom_call.1} parent=31 // pred_fallthru
          _
        // Predicated region
        $region71: #{tpu_custom_call.1} parent=31 // pred_check
          %p296 = pneg %p75
        $region72: #{tpu_custom_call.1} parent=31 // pred_check_branch
          %298 = sbr.rel (%p296) target = $region74
        $region73: #{tpu_custom_call.1} parent=31 // pred_region
          %p299 = scmp.lt.s32.totalorder %s22, 1
          %s300 = scalar_select %p299, %s22, 1
          %s301 = smul.addr %s300, 8
          %s302 = scalar_lea.vmem %s1, %s301
        $region74: #{tpu_custom_call.1} parent=31 // pred_fallthru
          _
      $region32: #{tpu_custom_call.1} parent=5 // pred_fallthru
        _
      %p303 = scmp.le.s32.totalorder 1, %s15
      %p304 = scmp.lt.s32.totalorder %s15, 5
      %p305 = pnand %p303, %p304
      %p306 = pneg %p305
      // Predicated region
      $region75: #{tpu_custom_call.1} parent=5 // pred_check
        _
      $region76: #{tpu_custom_call.1} parent=5 // pred_check_branch
        %308 = sbr.rel (%p305) target = $region78
      $region77: #{tpu_custom_call.1} parent=5 // pred_region
        %s309 = ssub.s32 %s15, 1
        %s310 = sand.u32 %s42, 1
        %s311 = sand.u32 %s42, 1
        %s312 = smul.addr %s311, 64
        %s313 = scalar_lea.vmem [#allocation2], %s312
        // Predicated region
        $region79: #{tpu_custom_call.1} parent=77 // pred_check
          %p314 = pneg %p55
        $region80: #{tpu_custom_call.1} parent=77 // pred_check_branch
          %316 = sbr.rel (%p314) target = $region82
        $region81: #{tpu_custom_call.1} parent=77 // pred_region
          _
        $region82: #{tpu_custom_call.1} parent=77 // pred_fallthru
          _
        %s317 = sand.u32 %s42, 1
        %s318 = sand.u32 %s42, 1
        %s319 = smul.addr %s318, 64
        %s320 = scalar_lea.vmem [#allocation2], %s319
        %p321 = pneg %p55
        %p322 = pneg %p52
        %p323 = scmp.lt.s32.totalorder %s24, 1
        %s324 = scalar_select %p323, %s24, 1
        %s325 = smul.addr %s324, 8
        %s326 = scalar_lea.vmem %s1, %s325
        %p327 = pneg %p81
        %p328 = pneg %p78
        %p329 = pneg %p102
        %p330 = pneg %p99
        %p331 = pneg %p123
        %p332 = pneg %p120
        %p333 = pneg %p144
        %p334 = pneg %p141
        %p335 = pneg %p165
        %p336 = pneg %p162
        %p337 = pneg %p193
        %p338 = pneg %p190
        %s339 = sand.u32 %s180, 1
        %s340 = scalar_lea.sflag [#allocation4], %s339
        %s341 = sand.u32 %s180, 1
        %s342 = smul.addr %s341, 64
        %s343 = scalar_lea.vmem [#allocation3], %s342
        %p344 = scmp.lt.s32.totalorder %s24, 1
        %s345 = scalar_select %p344, %s24, 1
        %s346 = smul.addr %s345, 8
        %s347 = scalar_lea.vmem %s1, %s346
        %v348 = vld [vmem:[%s313] sm:$0xff]
        %v349 = vld [vmem:[%s313 + $0x8] sm:$0xff]
        %v350 = vld [vmem:[%s313 + $0x10] sm:$0xff]
        %v351 = vld [vmem:[%s313 + $0x18] sm:$0xff]
        %v352 = vld [vmem:[%s313 + $0x20] sm:$0xff]
        %v353 = vld [vmem:[%s313 + $0x28] sm:$0xff]
        %v354 = vld [vmem:[%s313 + $0x30] sm:$0xff]
        %v355 = vld [vmem:[%s313 + $0x38] sm:$0xff]
        %v356 = vld [vmem:[%s347] sm:$0xff]
        %v357 = vld [vmem:[%s2] sm:$0xff]
        %v358 = vld [vmem:[%s2 + $0x8] sm:$0xff]
        %v359 = vld [vmem:[%s2 + $0x10] sm:$0xff]
        %v360 = vld [vmem:[%s2 + $0x18] sm:$0xff]
        %v361 = vld [vmem:[%s2 + $0x20] sm:$0xff]
        %v362 = vld [vmem:[%s2 + $0x28] sm:$0xff]
        %v363 = vld [vmem:[%s2 + $0x30] sm:$0xff]
        %v364 = vld [vmem:[%s2 + $0x38] sm:$0xff]
        %vm365 = vcmask 523264
        %v367 = vsel %vm365, %v357, 0
        %v370 = vsel %vm365, %v358, 0
        %v373 = vsel %vm365, %v359, 0
        %v376 = vsel %vm365, %v360, 0
        %v379 = vsel %vm365, %v361, 0
        %v382 = vsel %vm365, %v362, 0
        %v385 = vsel %vm365, %v363, 0
        %v388 = vsel %vm365, %v364, 0
        %390 = vmatprep.subr.mxu0 0.0
        %391 = vmatpush1.msra.mxu0 0.0
        %392 = vmatprep.subr.mxu0 0.0
        %393 = vmatpush1.msra.mxu0 0.0
        %394 = vmatprep.subr.mxu0 0.0
        %395 = vmatpush1.msra.mxu0 0.0
        %396 = vmatprep.subr.mxu0 0.0
        %397 = vmatpush1.msra.mxu0 0.0
        %398 = vmatprep.subr.mxu0 0.0
        %399 = vmatpush1.msra.mxu0 0.0
        %400 = vmatprep.subr.mxu0 0.0
        %401 = vmatpush1.msra.mxu0 0.0
        %402 = vmatprep.subr.mxu0 0.0
        %403 = vmatpush1.msra.mxu0 0.0
        %404 = vmatprep.subr.mxu0 0.0
        %405 = vmatpush1.msra.mxu0 0.0
        %406 = vmatprep.subr.mxu0 0.0
        %407 = vmatpush1.msra.mxu0 %v355
        %408 = vmatprep.subr.mxu0 0.0
        %409 = vmatpush1.msra.mxu0 %v354
        %410 = vmatprep.subr.mxu0 0.0
        %411 = vmatpush1.msra.mxu0 %v353
        %412 = vmatprep.subr.mxu0 0.0
        %413 = vmatpush1.msra.mxu0 %v352
        %414 = vmatprep.subr.mxu0 0.0
        %415 = vmatpush1.msra.mxu0 %v351
        %416 = vmatprep.subr.mxu0 0.0
        %417 = vmatpush1.msra.mxu0 %v350
        %418 = vmatprep.subr.mxu0 0.0
        %419 = vmatpush1.msra.mxu0 %v349
        %420 = vmatprep.subr.mxu0 0.0
        %421 = vmatpush1.msra.mxu0 %v348
        %422 = vmatprep.subr.mxu0 0.0
        %423 = vmatpush2.msra.mxu0 0.0
        %424 = vmatprep.subr.mxu0 0.0
        %425 = vmatpush2.msra.mxu0 0.0
        %426 = vmatprep.subr.mxu0 0.0
        %427 = vmatpush2.msra.mxu0 0.0
        %428 = vmatprep.subr.mxu0 0.0
        %429 = vmatpush2.msra.mxu0 0.0
        %430 = vmatprep.subr.mxu0 0.0
        %431 = vmatpush2.msra.mxu0 0.0
        %432 = vmatprep.subr.mxu0 0.0
        %433 = vmatpush2.msra.mxu0 0.0
        %434 = vmatprep.subr.mxu0 0.0
        %435 = vmatpush2.msra.mxu0 0.0
        %436 = vmatprep.subr.mxu0 0.0
        %437 = vmatpush2.msra.mxu0 0.0
        %438 = vmatprep.subr.mxu0 0.0
        %439 = vmatpush2.msra.mxu0 0.0
        %440 = vmatprep.subr.mxu0 0.0
        %441 = vmatpush2.msra.mxu0 0.0
        %442 = vmatprep.subr.mxu0 0.0
        %443 = vmatpush2.msra.mxu0 0.0
        %444 = vmatprep.subr.mxu0 0.0
        %445 = vmatpush2.msra.mxu0 0.0
        %446 = vmatprep.subr.mxu0 0.0
        %447 = vmatpush2.msra.mxu0 0.0
        %448 = vmatprep.subr.mxu0 0.0
        %449 = vmatpush2.msra.mxu0 0.0
        %450 = vmatprep.subr.mxu0 0.0
        %451 = vmatpush2.msra.mxu0 0.0
        %452 = vmatprep.subr.mxu0 0.0
        %453 = vmatpush2.msra.mxu0 0.0
        %454 = vmatprep.mubr.f32.mxu0 0.0
        %455 = vmatmul.mubr.f32.gmra.mxu0 %v367
        %v456 = vpop.f32.mrf.mxu0
        %v457 = vadd.f32 0.0, %v456
        %v458 = vpop.f32.mrf.mxu0
        %459 = vmatprep.mubr.f32.mxu0 0.0
        %460 = vmatmul.mubr.f32.gmra.mxu0 %v370
        %v461 = vpop.f32.mrf.mxu0
        %v462 = vadd.f32 0.0, %v461
        %v463 = vpop.f32.mrf.mxu0
        %464 = vmatprep.mubr.f32.mxu0 0.0
        %465 = vmatmul.mubr.f32.gmra.mxu0 %v373
        %v466 = vpop.f32.mrf.mxu0
        %v467 = vadd.f32 0.0, %v466
        %v468 = vpop.f32.mrf.mxu0
        %469 = vmatprep.mubr.f32.mxu0 0.0
        %470 = vmatmul.mubr.f32.gmra.mxu0 %v376
        %v471 = vpop.f32.mrf.mxu0
        %v472 = vadd.f32 0.0, %v471
        %v473 = vpop.f32.mrf.mxu0
        %474 = vmatprep.mubr.f32.mxu0 0.0
        %475 = vmatmul.mubr.f32.gmra.mxu0 %v379
        %v476 = vpop.f32.mrf.mxu0
        %v477 = vadd.f32 0.0, %v476
        %v478 = vpop.f32.mrf.mxu0
        %479 = vmatprep.mubr.f32.mxu0 0.0
        %480 = vmatmul.mubr.f32.gmra.mxu0 %v382
        %v481 = vpop.f32.mrf.mxu0
        %v482 = vadd.f32 0.0, %v481
        %v483 = vpop.f32.mrf.mxu0
        %484 = vmatprep.mubr.f32.mxu0 0.0
        %485 = vmatmul.mubr.f32.gmra.mxu0 %v385
        %v486 = vpop.f32.mrf.mxu0
        %v487 = vadd.f32 0.0, %v486
        %v488 = vpop.f32.mrf.mxu0
        %489 = vmatprep.mubr.f32.mxu0 0.0
        %490 = vmatmul.mubr.f32.gmra.mxu0 %v388
        %v491 = vpop.f32.mrf.mxu0
        %v492 = vadd.f32 0.0, %v491
        %v493 = vpop.f32.mrf.mxu0
        %494 = vdwg.mxu0
        %v495 = vld [vmem:[%s3] sm:$0xff]
        %v496 = vld [vmem:[%s3 + $0x8] sm:$0xff]
        %v497 = vld [vmem:[%s3 + $0x10] sm:$0xff]
        %v498 = vld [vmem:[%s3 + $0x18] sm:$0xff]
        %v499 = vld [vmem:[%s3 + $0x20] sm:$0xff]
        %v500 = vld [vmem:[%s3 + $0x28] sm:$0xff]
        %v501 = vld [vmem:[%s3 + $0x30] sm:$0xff]
        %v502 = vld [vmem:[%s3 + $0x38] sm:$0xff]
        %v503 = vld [vmem:[%s3 + $0x40] sm:$0xff]
        %v504 = vld [vmem:[%s3 + $0x48] sm:$0xff]
        %v505 = vld [vmem:[%s3 + $0x50] sm:$0xff]
        %v506 = vld [vmem:[%s3 + $0x58] sm:$0xff]
        %v507 = vld [vmem:[%s3 + $0x60] sm:$0xff]
        %v508 = vld [vmem:[%s3 + $0x68] sm:$0xff]
        %v509 = vld [vmem:[%s3 + $0x70] sm:$0xff]
        %v510 = vld [vmem:[%s3 + $0x78] sm:$0xff]
        %vm511 = vcmask 261120
        %v513 = vsel %vm511, %v495, 0
        %v516 = vsel %vm511, %v496, 0
        %v519 = vsel %vm511, %v497, 0
        %v522 = vsel %vm511, %v498, 0
        %v525 = vsel %vm511, %v499, 0
        %v528 = vsel %vm511, %v500, 0
        %v531 = vsel %vm511, %v501, 0
        %v534 = vsel %vm511, %v502, 0
        %v537 = vsel %vm511, %v503, 0
        %v540 = vsel %vm511, %v504, 0
        %v543 = vsel %vm511, %v505, 0
        %v546 = vsel %vm511, %v506, 0
        %v549 = vsel %vm511, %v507, 0
        %v552 = vsel %vm511, %v508, 0
        %v555 = vsel %vm511, %v509, 0
        %v558 = vsel %vm511, %v510, 0
        %v561 = vsel %vm511, %v356, 0
        %563 = vmatprep.subr.mxu0 0.0
        %564 = vmatpush1.xpose.msra.mxu0 0.0
        %565 = vmatprep.subr.mxu0 0.0
        %566 = vmatpush1.xpose.msra.mxu0 0.0
        %567 = vmatprep.subr.mxu0 0.0
        %568 = vmatpush1.xpose.msra.mxu0 0.0
        %569 = vmatprep.subr.mxu0 0.0
        %570 = vmatpush1.xpose.msra.mxu0 0.0
        %571 = vmatprep.subr.mxu0 0.0
        %572 = vmatpush1.xpose.msra.mxu0 0.0
        %573 = vmatprep.subr.mxu0 0.0
        %574 = vmatpush1.xpose.msra.mxu0 0.0
        %575 = vmatprep.subr.mxu0 0.0
        %576 = vmatpush1.xpose.msra.mxu0 0.0
        %577 = vmatprep.subr.mxu0 0.0
        %578 = vmatpush1.xpose.msra.mxu0 0.0
        %579 = vmatprep.subr.mxu0 0.0
        %580 = vmatpush1.xpose.msra.mxu0 0.0
        %581 = vmatprep.subr.mxu0 0.0
        %582 = vmatpush1.xpose.msra.mxu0 0.0
        %583 = vmatprep.subr.mxu0 0.0
        %584 = vmatpush1.xpose.msra.mxu0 0.0
        %585 = vmatprep.subr.mxu0 0.0
        %586 = vmatpush1.xpose.msra.mxu0 0.0
        %587 = vmatprep.subr.mxu0 0.0
        %588 = vmatpush1.xpose.msra.mxu0 0.0
        %589 = vmatprep.subr.mxu0 0.0
        %590 = vmatpush1.xpose.msra.mxu0 0.0
        %591 = vmatprep.subr.mxu0 0.0
        %592 = vmatpush1.xpose.msra.mxu0 0.0
        %593 = vmatprep.subr.mxu0 0.0
        %594 = vmatpush1.xpose.msra.mxu0 %v561
        %595 = vmatprep.subr.mxu0 0.0
        %596 = vmatpush2.xpose.msra.mxu0 0.0
        %597 = vmatprep.subr.mxu0 0.0
        %598 = vmatpush2.xpose.msra.mxu0 0.0
        %599 = vmatprep.subr.mxu0 0.0
        %600 = vmatpush2.xpose.msra.mxu0 0.0
        %601 = vmatprep.subr.mxu0 0.0
        %602 = vmatpush2.xpose.msra.mxu0 0.0
        %603 = vmatprep.subr.mxu0 0.0
        %604 = vmatpush2.xpose.msra.mxu0 0.0
        %605 = vmatprep.subr.mxu0 0.0
        %606 = vmatpush2.xpose.msra.mxu0 0.0
        %607 = vmatprep.subr.mxu0 0.0
        %608 = vmatpush2.xpose.msra.mxu0 0.0
        %609 = vmatprep.subr.mxu0 0.0
        %610 = vmatpush2.xpose.msra.mxu0 0.0
        %611 = vmatprep.subr.mxu0 0.0
        %612 = vmatpush2.xpose.msra.mxu0 0.0
        %613 = vmatprep.subr.mxu0 0.0
        %614 = vmatpush2.xpose.msra.mxu0 0.0
        %615 = vmatprep.subr.mxu0 0.0
        %616 = vmatpush2.xpose.msra.mxu0 0.0
        %617 = vmatprep.subr.mxu0 0.0
        %618 = vmatpush2.xpose.msra.mxu0 0.0
        %619 = vmatprep.subr.mxu0 0.0
        %620 = vmatpush2.xpose.msra.mxu0 0.0
        %621 = vmatprep.subr.mxu0 0.0
        %622 = vmatpush2.xpose.msra.mxu0 0.0
        %623 = vmatprep.subr.mxu0 0.0
        %624 = vmatpush2.xpose.msra.mxu0 0.0
        %625 = vmatprep.subr.mxu0 0.0
        %626 = vmatpush2.xpose.msra.mxu0 0.0
        %627 = vmatprep.mubr.f32.mxu0 0.0
        %628 = vmatmul.mubr.f32.gmra.mxu0 %v513
        %v629 = vpop.f32.mrf.mxu0
        %v630 = vadd.f32 0.0, %v629
        %v631 = vpop.f32.mrf.mxu0
        %632 = vmatprep.mubr.f32.mxu0 0.0
        %633 = vmatmul.mubr.f32.gmra.mxu0 %v516
        %v634 = vpop.f32.mrf.mxu0
        %v635 = vadd.f32 0.0, %v634
        %v636 = vpop.f32.mrf.mxu0
        %637 = vmatprep.mubr.f32.mxu0 0.0
        %638 = vmatmul.mubr.f32.gmra.mxu0 %v519
        %v639 = vpop.f32.mrf.mxu0
        %v640 = vadd.f32 0.0, %v639
        %v641 = vpop.f32.mrf.mxu0
        %642 = vmatprep.mubr.f32.mxu0 0.0
        %643 = vmatmul.mubr.f32.gmra.mxu0 %v522
        %v644 = vpop.f32.mrf.mxu0
        %v645 = vadd.f32 0.0, %v644
        %v646 = vpop.f32.mrf.mxu0
        %647 = vmatprep.mubr.f32.mxu0 0.0
        %648 = vmatmul.mubr.f32.gmra.mxu0 %v525
        %v649 = vpop.f32.mrf.mxu0
        %v650 = vadd.f32 0.0, %v649
        %v651 = vpop.f32.mrf.mxu0
        %652 = vmatprep.mubr.f32.mxu0 0.0
        %653 = vmatmul.mubr.f32.gmra.mxu0 %v528
        %v654 = vpop.f32.mrf.mxu0
        %v655 = vadd.f32 0.0, %v654
        %v656 = vpop.f32.mrf.mxu0
        %657 = vmatprep.mubr.f32.mxu0 0.0
        %658 = vmatmul.mubr.f32.gmra.mxu0 %v531
        %v659 = vpop.f32.mrf.mxu0
        %v660 = vadd.f32 0.0, %v659
        %v661 = vpop.f32.mrf.mxu0
        %662 = vmatprep.mubr.f32.mxu0 0.0
        %663 = vmatmul.mubr.f32.gmra.mxu0 %v534
        %v664 = vpop.f32.mrf.mxu0
        %v665 = vadd.f32 0.0, %v664
        %v666 = vpop.f32.mrf.mxu0
        %667 = vmatprep.mubr.f32.mxu0 0.0
        %668 = vmatmul.mubr.f32.gmra.mxu0 %v537
        %v669 = vpop.f32.mrf.mxu0
        %v670 = vadd.f32 0.0, %v669
        %v671 = vpop.f32.mrf.mxu0
        %672 = vmatprep.mubr.f32.mxu0 0.0
        %673 = vmatmul.mubr.f32.gmra.mxu0 %v540
        %v674 = vpop.f32.mrf.mxu0
        %v675 = vadd.f32 0.0, %v674
        %v676 = vpop.f32.mrf.mxu0
        %677 = vmatprep.mubr.f32.mxu0 0.0
        %678 = vmatmul.mubr.f32.gmra.mxu0 %v543
        %v679 = vpop.f32.mrf.mxu0
        %v680 = vadd.f32 0.0, %v679
        %v681 = vpop.f32.mrf.mxu0
        %682 = vmatprep.mubr.f32.mxu0 0.0
        %683 = vmatmul.mubr.f32.gmra.mxu0 %v546
        %v684 = vpop.f32.mrf.mxu0
        %v685 = vadd.f32 0.0, %v684
        %v686 = vpop.f32.mrf.mxu0
        %687 = vmatprep.mubr.f32.mxu0 0.0
        %688 = vmatmul.mubr.f32.gmra.mxu0 %v549
        %v689 = vpop.f32.mrf.mxu0
        %v690 = vadd.f32 0.0, %v689
        %v691 = vpop.f32.mrf.mxu0
        %692 = vmatprep.mubr.f32.mxu0 0.0
        %693 = vmatmul.mubr.f32.gmra.mxu0 %v552
        %v694 = vpop.f32.mrf.mxu0
        %v695 = vadd.f32 0.0, %v694
        %v696 = vpop.f32.mrf.mxu0
        %697 = vmatprep.mubr.f32.mxu0 0.0
        %698 = vmatmul.mubr.f32.gmra.mxu0 %v555
        %v699 = vpop.f32.mrf.mxu0
        %v700 = vadd.f32 0.0, %v699
        %v701 = vpop.f32.mrf.mxu0
        %702 = vmatprep.mubr.f32.mxu0 0.0
        %703 = vmatmul.mubr.f32.gmra.mxu0 %v558
        %v704 = vpop.f32.mrf.mxu0
        %v705 = vadd.f32 0.0, %v704
        %v706 = vpop.f32.mrf.mxu0
        %707 = vdwg.mxu0
        %708 = vxpose.xlu0.b32.start [1/16] %v630, 128
        %709 = vxpose.xlu0.b32.cont [2/16] 0.0, 128
        %710 = vxpose.xlu0.b32.cont [3/16] 0.0, 128
        %711 = vxpose.xlu0.b32.cont [4/16] 0.0, 128
        %712 = vxpose.xlu0.b32.cont [5/16] 0.0, 128
        %713 = vxpose.xlu0.b32.cont [6/16] 0.0, 128
        %714 = vxpose.xlu0.b32.cont [7/16] 0.0, 128
        %715 = vxpose.xlu0.b32.cont [8/16] 0.0, 128
        %716 = vxpose.xlu0.b32.cont [9/16] 0.0, 128
        %717 = vxpose.xlu0.b32.cont [10/16] 0.0, 128
        %718 = vxpose.xlu0.b32.cont [11/16] 0.0, 128
        %719 = vxpose.xlu0.b32.cont [12/16] 0.0, 128
        %720 = vxpose.xlu0.b32.cont [13/16] 0.0, 128
        %721 = vxpose.xlu0.b32.cont [14/16] 0.0, 128
        %722 = vxpose.xlu0.b32.cont [15/16] 0.0, 128
        %723 = vxpose.xlu0.b32.end [16/16] 0.0, 128
        %v724 = vpop.trf.xlu0
        %v725 = vpop.trf.xlu0
        %v726 = vpop.trf.xlu0
        %v727 = vpop.trf.xlu0
        %v728 = vpop.trf.xlu0
        %v729 = vpop.trf.xlu0
        %v730 = vpop.trf.xlu0
        %v731 = vpop.trf.xlu0
        %v732 = vpop.trf.xlu0
        %v733 = vpop.trf.xlu0
        %v734 = vpop.trf.xlu0
        %v735 = vpop.trf.xlu0
        %v736 = vpop.trf.xlu0
        %v737 = vpop.trf.xlu0
        %v738 = vpop.trf.xlu0
        %v739 = vpop.trf.xlu0
        %vm740 = vcmask 64512
        %v742 = vsel %vm740, %v724, 0
        %744 = vmatprep.subr.mxu0 0.0
        %745 = vmatpush1.msra.mxu0 0.0
        %746 = vmatprep.subr.mxu0 0.0
        %747 = vmatpush1.msra.mxu0 0.0
        %748 = vmatprep.subr.mxu0 0.0
        %749 = vmatpush1.msra.mxu0 0.0
        %750 = vmatprep.subr.mxu0 0.0
        %751 = vmatpush1.msra.mxu0 0.0
        %752 = vmatprep.subr.mxu0 0.0
        %753 = vmatpush1.msra.mxu0 0.0
        %754 = vmatprep.subr.mxu0 0.0
        %755 = vmatpush1.msra.mxu0 0.0
        %756 = vmatprep.subr.mxu0 0.0
        %757 = vmatpush1.msra.mxu0 0.0
        %758 = vmatprep.subr.mxu0 0.0
        %759 = vmatpush1.msra.mxu0 0.0
        %760 = vmatprep.subr.mxu0 0.0
        %761 = vmatpush1.msra.mxu0 0.0
        %762 = vmatprep.subr.mxu0 0.0
        %763 = vmatpush1.msra.mxu0 0.0
        %764 = vmatprep.subr.mxu0 0.0
        %765 = vmatpush1.msra.mxu0 0.0
        %766 = vmatprep.subr.mxu0 0.0
        %767 = vmatpush1.msra.mxu0 0.0
        %768 = vmatprep.subr.mxu0 0.0
        %769 = vmatpush1.msra.mxu0 0.0
        %770 = vmatprep.subr.mxu0 0.0
        %771 = vmatpush1.msra.mxu0 0.0
        %772 = vmatprep.subr.mxu0 0.0
        %773 = vmatpush1.msra.mxu0 0.0
        %774 = vmatprep.subr.mxu0 0.0
        %775 = vmatpush1.msra.mxu0 %v457
        %776 = vmatprep.subr.mxu0 0.0
        %777 = vmatpush2.msra.mxu0 0.0
        %778 = vmatprep.subr.mxu0 0.0
        %779 = vmatpush2.msra.mxu0 0.0
        %780 = vmatprep.subr.mxu0 0.0
        %781 = vmatpush2.msra.mxu0 0.0
        %782 = vmatprep.subr.mxu0 0.0
        %783 = vmatpush2.msra.mxu0 0.0
        %784 = vmatprep.subr.mxu0 0.0
        %785 = vmatpush2.msra.mxu0 0.0
        %786 = vmatprep.subr.mxu0 0.0
        %787 = vmatpush2.msra.mxu0 0.0
        %788 = vmatprep.subr.mxu0 0.0
        %789 = vmatpush2.msra.mxu0 0.0
        %790 = vmatprep.subr.mxu0 0.0
        %791 = vmatpush2.msra.mxu0 0.0
        %792 = vmatprep.subr.mxu0 0.0
        %793 = vmatpush2.msra.mxu0 0.0
        %794 = vmatprep.subr.mxu0 0.0
        %795 = vmatpush2.msra.mxu0 0.0
        %796 = vmatprep.subr.mxu0 0.0
        %797 = vmatpush2.msra.mxu0 0.0
        %798 = vmatprep.subr.mxu0 0.0
        %799 = vmatpush2.msra.mxu0 0.0
        %800 = vmatprep.subr.mxu0 0.0
        %801 = vmatpush2.msra.mxu0 0.0
        %802 = vmatprep.subr.mxu0 0.0
        %803 = vmatpush2.msra.mxu0 0.0
        %804 = vmatprep.subr.mxu0 0.0
        %805 = vmatpush2.msra.mxu0 0.0
        %806 = vmatprep.subr.mxu0 0.0
        %807 = vmatpush2.msra.mxu0 0.0
        %808 = vmatprep.mubr.f32.mxu0 0.0
        %809 = vmatmul.mubr.f32.gmra.mxu0 %v742
        %v810 = vpop.f32.mrf.mxu0
        %v811 = vadd.f32 0.0, %v810
        %v812 = vpop.f32.mrf.mxu0
        %813 = vdwg.mxu0
        %v814 = vrot.slane %v811, 4
        %v815 = vmax.f32 %v811, %v814
        %v816 = vrot.slane %v815, 2
        %v817 = vmax.f32 %v815, %v816
        %v818 = vrot.slane %v817, 1
        %v819 = vmax.f32 %v817, %v818
        %v820 = vsub.f32 %v811, %v819
        %v821 = vmul.f32 %v820, 1.442695
        %v822 = vpow.pop %v821
        %v823 = vrot.slane %v822, 4
        %v824 = vadd.f32 %v822, %v823
        %v825 = vrot.slane %v824, 2
        %v826 = vadd.f32 %v824, %v825
        %v827 = vrot.slane %v826, 1
        %v828 = vadd.f32 %v826, %v827
        %v830 = vsel %vm740, %v670, 0
        %832 = vmatprep.subr.mxu0 0.0
        %833 = vmatpush1.msra.mxu0 0.0
        %834 = vmatprep.subr.mxu0 0.0
        %835 = vmatpush1.msra.mxu0 0.0
        %836 = vmatprep.subr.mxu0 0.0
        %837 = vmatpush1.msra.mxu0 0.0
        %838 = vmatprep.subr.mxu0 0.0
        %839 = vmatpush1.msra.mxu0 0.0
        %840 = vmatprep.subr.mxu0 0.0
        %841 = vmatpush1.msra.mxu0 0.0
        %842 = vmatprep.subr.mxu0 0.0
        %843 = vmatpush1.msra.mxu0 0.0
        %844 = vmatprep.subr.mxu0 0.0
        %845 = vmatpush1.msra.mxu0 0.0
        %846 = vmatprep.subr.mxu0 0.0
        %847 = vmatpush1.msra.mxu0 0.0
        %848 = vmatprep.subr.mxu0 0.0
        %849 = vmatpush1.msra.mxu0 0.0
        %850 = vmatprep.subr.mxu0 0.0
        %851 = vmatpush1.msra.mxu0 0.0
        %852 = vmatprep.subr.mxu0 0.0
        %853 = vmatpush1.msra.mxu0 0.0
        %854 = vmatprep.subr.mxu0 0.0
        %855 = vmatpush1.msra.mxu0 0.0
        %856 = vmatprep.subr.mxu0 0.0
        %857 = vmatpush1.msra.mxu0 0.0
        %858 = vmatprep.subr.mxu0 0.0
        %859 = vmatpush1.msra.mxu0 0.0
        %860 = vmatprep.subr.mxu0 0.0
        %861 = vmatpush1.msra.mxu0 0.0
        %862 = vmatprep.subr.mxu0 0.0
        %863 = vmatpush1.msra.mxu0 %v822
        %864 = vmatprep.subr.mxu0 0.0
        %865 = vmatpush2.msra.mxu0 0.0
        %866 = vmatprep.subr.mxu0 0.0
        %867 = vmatpush2.msra.mxu0 0.0
        %868 = vmatprep.subr.mxu0 0.0
        %869 = vmatpush2.msra.mxu0 0.0
        %870 = vmatprep.subr.mxu0 0.0
        %871 = vmatpush2.msra.mxu0 0.0
        %872 = vmatprep.subr.mxu0 0.0
        %873 = vmatpush2.msra.mxu0 0.0
        %874 = vmatprep.subr.mxu0 0.0
        %875 = vmatpush2.msra.mxu0 0.0
        %876 = vmatprep.subr.mxu0 0.0
        %877 = vmatpush2.msra.mxu0 0.0
        %878 = vmatprep.subr.mxu0 0.0
        %879 = vmatpush2.msra.mxu0 0.0
        %880 = vmatprep.subr.mxu0 0.0
        %881 = vmatpush2.msra.mxu0 0.0
        %882 = vmatprep.subr.mxu0 0.0
        %883 = vmatpush2.msra.mxu0 0.0
        %884 = vmatprep.subr.mxu0 0.0
        %885 = vmatpush2.msra.mxu0 0.0
        %886 = vmatprep.subr.mxu0 0.0
        %887 = vmatpush2.msra.mxu0 0.0
        %888 = vmatprep.subr.mxu0 0.0
        %889 = vmatpush2.msra.mxu0 0.0
        %890 = vmatprep.subr.mxu0 0.0
        %891 = vmatpush2.msra.mxu0 0.0
        %892 = vmatprep.subr.mxu0 0.0
        %893 = vmatpush2.msra.mxu0 0.0
        %894 = vmatprep.subr.mxu0 0.0
        %895 = vmatpush2.msra.mxu0 0.0
        %896 = vmatprep.mubr.f32.mxu0 0.0
        %897 = vmatmul.mubr.f32.gmra.mxu0 %v830
        %v898 = vpop.f32.mrf.mxu0
        %v899 = vadd.f32 0.0, %v898
        %v900 = vpop.f32.mrf.mxu0
        %901 = vdwg.mxu0
        %v902 = vrcp.pop %v828
        %v903 = vmul.f32 %v899, %v902
        %v904 = vld [vmem:[%s4] sm:$0xff]
        %v905 = vld [vmem:[%s4 + $0x8] sm:$0xff]
        %v906 = vld [vmem:[%s4 + $0x10] sm:$0xff]
        %v907 = vld [vmem:[%s4 + $0x18] sm:$0xff]
        %v908 = vld [vmem:[%s4 + $0x20] sm:$0xff]
        %v909 = vld [vmem:[%s4 + $0x28] sm:$0xff]
        %v910 = vld [vmem:[%s4 + $0x30] sm:$0xff]
        %v911 = vld [vmem:[%s4 + $0x38] sm:$0xff]
        %912 = vxpose.xlu0.b32.start [1/16] %v635, 128
        %913 = vxpose.xlu0.b32.cont [2/16] 0.0, 128
        %914 = vxpose.xlu0.b32.cont [3/16] 0.0, 128
        %915 = vxpose.xlu0.b32.cont [4/16] 0.0, 128
        %916 = vxpose.xlu0.b32.cont [5/16] 0.0, 128
        %917 = vxpose.xlu0.b32.cont [6/16] 0.0, 128
        %918 = vxpose.xlu0.b32.cont [7/16] 0.0, 128
        %919 = vxpose.xlu0.b32.cont [8/16] 0.0, 128
        %920 = vxpose.xlu0.b32.cont [9/16] 0.0, 128
        %921 = vxpose.xlu0.b32.cont [10/16] 0.0, 128
        %922 = vxpose.xlu0.b32.cont [11/16] 0.0, 128
        %923 = vxpose.xlu0.b32.cont [12/16] 0.0, 128
        %924 = vxpose.xlu0.b32.cont [13/16] 0.0, 128
        %925 = vxpose.xlu0.b32.cont [14/16] 0.0, 128
        %926 = vxpose.xlu0.b32.cont [15/16] 0.0, 128
        %927 = vxpose.xlu0.b32.end [16/16] 0.0, 128
        %v928 = vpop.trf.xlu0
        %v929 = vpop.trf.xlu0
        %v930 = vpop.trf.xlu0
        %v931 = vpop.trf.xlu0
        %v932 = vpop.trf.xlu0
        %v933 = vpop.trf.xlu0
        %v934 = vpop.trf.xlu0
        %v935 = vpop.trf.xlu0
        %v936 = vpop.trf.xlu0
        %v937 = vpop.trf.xlu0
        %v938 = vpop.trf.xlu0
        %v939 = vpop.trf.xlu0
        %v940 = vpop.trf.xlu0
        %v941 = vpop.trf.xlu0
        %v942 = vpop.trf.xlu0
        %v943 = vpop.trf.xlu0
        %v945 = vsel %vm740, %v928, 0
        %947 = vmatprep.subr.mxu0 0.0
        %948 = vmatpush1.msra.mxu0 0.0
        %949 = vmatprep.subr.mxu0 0.0
        %950 = vmatpush1.msra.mxu0 0.0
        %951 = vmatprep.subr.mxu0 0.0
        %952 = vmatpush1.msra.mxu0 0.0
        %953 = vmatprep.subr.mxu0 0.0
        %954 = vmatpush1.msra.mxu0 0.0
        %955 = vmatprep.subr.mxu0 0.0
        %956 = vmatpush1.msra.mxu0 0.0
        %957 = vmatprep.subr.mxu0 0.0
        %958 = vmatpush1.msra.mxu0 0.0
        %959 = vmatprep.subr.mxu0 0.0
        %960 = vmatpush1.msra.mxu0 0.0
        %961 = vmatprep.subr.mxu0 0.0
        %962 = vmatpush1.msra.mxu0 0.0
        %963 = vmatprep.subr.mxu0 0.0
        %964 = vmatpush1.msra.mxu0 0.0
        %965 = vmatprep.subr.mxu0 0.0
        %966 = vmatpush1.msra.mxu0 0.0
        %967 = vmatprep.subr.mxu0 0.0
        %968 = vmatpush1.msra.mxu0 0.0
        %969 = vmatprep.subr.mxu0 0.0
        %970 = vmatpush1.msra.mxu0 0.0
        %971 = vmatprep.subr.mxu0 0.0
        %972 = vmatpush1.msra.mxu0 0.0
        %973 = vmatprep.subr.mxu0 0.0
        %974 = vmatpush1.msra.mxu0 0.0
        %975 = vmatprep.subr.mxu0 0.0
        %976 = vmatpush1.msra.mxu0 0.0
        %977 = vmatprep.subr.mxu0 0.0
        %978 = vmatpush1.msra.mxu0 %v462
        %979 = vmatprep.subr.mxu0 0.0
        %980 = vmatpush2.msra.mxu0 0.0
        %981 = vmatprep.subr.mxu0 0.0
        %982 = vmatpush2.msra.mxu0 0.0
        %983 = vmatprep.subr.mxu0 0.0
        %984 = vmatpush2.msra.mxu0 0.0
        %985 = vmatprep.subr.mxu0 0.0
        %986 = vmatpush2.msra.mxu0 0.0
        %987 = vmatprep.subr.mxu0 0.0
        %988 = vmatpush2.msra.mxu0 0.0
        %989 = vmatprep.subr.mxu0 0.0
        %990 = vmatpush2.msra.mxu0 0.0
        %991 = vmatprep.subr.mxu0 0.0
        %992 = vmatpush2.msra.mxu0 0.0
        %993 = vmatprep.subr.mxu0 0.0
        %994 = vmatpush2.msra.mxu0 0.0
        %995 = vmatprep.subr.mxu0 0.0
        %996 = vmatpush2.msra.mxu0 0.0
        %997 = vmatprep.subr.mxu0 0.0
        %998 = vmatpush2.msra.mxu0 0.0
        %999 = vmatprep.subr.mxu0 0.0
        %1000 = vmatpush2.msra.mxu0 0.0
        %1001 = vmatprep.subr.mxu0 0.0
        %1002 = vmatpush2.msra.mxu0 0.0
        %1003 = vmatprep.subr.mxu0 0.0
        %1004 = vmatpush2.msra.mxu0 0.0
        %1005 = vmatprep.subr.mxu0 0.0
        %1006 = vmatpush2.msra.mxu0 0.0
        %1007 = vmatprep.subr.mxu0 0.0
        %1008 = vmatpush2.msra.mxu0 0.0
        %1009 = vmatprep.subr.mxu0 0.0
        %1010 = vmatpush2.msra.mxu0 0.0
        %1011 = vmatprep.mubr.f32.mxu0 0.0
        %1012 = vmatmul.mubr.f32.gmra.mxu0 %v945
        %v1013 = vpop.f32.mrf.mxu0
        %v1014 = vadd.f32 0.0, %v1013
        %v1015 = vpop.f32.mrf.mxu0
        %1016 = vdwg.mxu0
        %v1017 = vrot.slane %v1014, 4
        %v1018 = vmax.f32 %v1014, %v1017
        %v1019 = vrot.slane %v1018, 2
        %v1020 = vmax.f32 %v1018, %v1019
        %v1021 = vrot.slane %v1020, 1
        %v1022 = vmax.f32 %v1020, %v1021
        %v1023 = vsub.f32 %v1014, %v1022
        %v1024 = vmul.f32 %v1023, 1.442695
        %v1025 = vpow.pop %v1024
        %v1026 = vrot.slane %v1025, 4
        %v1027 = vadd.f32 %v1025, %v1026
        %v1028 = vrot.slane %v1027, 2
        %v1029 = vadd.f32 %v1027, %v1028
        %v1030 = vrot.slane %v1029, 1
        %v1031 = vadd.f32 %v1029, %v1030
        %v1033 = vsel %vm740, %v675, 0
        %1035 = vmatprep.subr.mxu0 0.0
        %1036 = vmatpush1.msra.mxu0 0.0
        %1037 = vmatprep.subr.mxu0 0.0
        %1038 = vmatpush1.msra.mxu0 0.0
        %1039 = vmatprep.subr.mxu0 0.0
        %1040 = vmatpush1.msra.mxu0 0.0
        %1041 = vmatprep.subr.mxu0 0.0
        %1042 = vmatpush1.msra.mxu0 0.0
        %1043 = vmatprep.subr.mxu0 0.0
        %1044 = vmatpush1.msra.mxu0 0.0
        %1045 = vmatprep.subr.mxu0 0.0
        %1046 = vmatpush1.msra.mxu0 0.0
        %1047 = vmatprep.subr.mxu0 0.0
        %1048 = vmatpush1.msra.mxu0 0.0
        %1049 = vmatprep.subr.mxu0 0.0
        %1050 = vmatpush1.msra.mxu0 0.0
        %1051 = vmatprep.subr.mxu0 0.0
        %1052 = vmatpush1.msra.mxu0 0.0
        %1053 = vmatprep.subr.mxu0 0.0
        %1054 = vmatpush1.msra.mxu0 0.0
        %1055 = vmatprep.subr.mxu0 0.0
        %1056 = vmatpush1.msra.mxu0 0.0
        %1057 = vmatprep.subr.mxu0 0.0
        %1058 = vmatpush1.msra.mxu0 0.0
        %1059 = vmatprep.subr.mxu0 0.0
        %1060 = vmatpush1.msra.mxu0 0.0
        %1061 = vmatprep.subr.mxu0 0.0
        %1062 = vmatpush1.msra.mxu0 0.0
        %1063 = vmatprep.subr.mxu0 0.0
        %1064 = vmatpush1.msra.mxu0 0.0
        %1065 = vmatprep.subr.mxu0 0.0
        %1066 = vmatpush1.msra.mxu0 %v1025
        %1067 = vmatprep.subr.mxu0 0.0
        %1068 = vmatpush2.msra.mxu0 0.0
        %1069 = vmatprep.subr.mxu0 0.0
        %1070 = vmatpush2.msra.mxu0 0.0
        %1071 = vmatprep.subr.mxu0 0.0
        %1072 = vmatpush2.msra.mxu0 0.0
        %1073 = vmatprep.subr.mxu0 0.0
        %1074 = vmatpush2.msra.mxu0 0.0
        %1075 = vmatprep.subr.mxu0 0.0
        %1076 = vmatpush2.msra.mxu0 0.0
        %1077 = vmatprep.subr.mxu0 0.0
        %1078 = vmatpush2.msra.mxu0 0.0
        %1079 = vmatprep.subr.mxu0 0.0
        %1080 = vmatpush2.msra.mxu0 0.0
        %1081 = vmatprep.subr.mxu0 0.0
        %1082 = vmatpush2.msra.mxu0 0.0
        %1083 = vmatprep.subr.mxu0 0.0
        %1084 = vmatpush2.msra.mxu0 0.0
        %1085 = vmatprep.subr.mxu0 0.0
        %1086 = vmatpush2.msra.mxu0 0.0
        %1087 = vmatprep.subr.mxu0 0.0
        %1088 = vmatpush2.msra.mxu0 0.0
        %1089 = vmatprep.subr.mxu0 0.0
        %1090 = vmatpush2.msra.mxu0 0.0
        %1091 = vmatprep.subr.mxu0 0.0
        %1092 = vmatpush2.msra.mxu0 0.0
        %1093 = vmatprep.subr.mxu0 0.0
        %1094 = vmatpush2.msra.mxu0 0.0
        %1095 = vmatprep.subr.mxu0 0.0
        %1096 = vmatpush2.msra.mxu0 0.0
        %1097 = vmatprep.subr.mxu0 0.0
        %1098 = vmatpush2.msra.mxu0 0.0
        %1099 = vmatprep.mubr.f32.mxu0 0.0
        %1100 = vmatmul.mubr.f32.gmra.mxu0 %v1033
        %v1101 = vpop.f32.mrf.mxu0
        %v1102 = vadd.f32 0.0, %v1101
        %v1103 = vpop.f32.mrf.mxu0
        %1104 = vdwg.mxu0
        %v1105 = vrcp.pop %v1031
        %v1106 = vmul.f32 %v1102, %v1105
        %s1107 = scalar_lea.vmem %s4, 64
        %v1108 = vld [vmem:[%s1107] sm:$0xff]
        %v1109 = vld [vmem:[%s1107 + $0x8] sm:$0xff]
        %v1110 = vld [vmem:[%s1107 + $0x10] sm:$0xff]
        %v1111 = vld [vmem:[%s1107 + $0x18] sm:$0xff]
        %v1112 = vld [vmem:[%s1107 + $0x20] sm:$0xff]
        %v1113 = vld [vmem:[%s1107 + $0x28] sm:$0xff]
        %v1114 = vld [vmem:[%s1107 + $0x30] sm:$0xff]
        %v1115 = vld [vmem:[%s1107 + $0x38] sm:$0xff]
        %v1117 = vsel %vm740, %v1108, 0
        %v1120 = vsel %vm740, %v1109, 0
        %v1123 = vsel %vm740, %v1110, 0
        %v1126 = vsel %vm740, %v1111, 0
        %v1129 = vsel %vm740, %v1112, 0
        %v1132 = vsel %vm740, %v1113, 0
        %v1135 = vsel %vm740, %v1114, 0
        %v1138 = vsel %vm740, %v1115, 0
        %1140 = vmatprep.subr.mxu0 0.0
        %1141 = vmatpush1.msra.mxu0 0.0
        %1142 = vmatprep.subr.mxu0 0.0
        %1143 = vmatpush1.msra.mxu0 0.0
        %1144 = vmatprep.subr.mxu0 0.0
        %1145 = vmatpush1.msra.mxu0 0.0
        %1146 = vmatprep.subr.mxu0 0.0
        %1147 = vmatpush1.msra.mxu0 0.0
        %1148 = vmatprep.subr.mxu0 0.0
        %1149 = vmatpush1.msra.mxu0 0.0
        %1150 = vmatprep.subr.mxu0 0.0
        %1151 = vmatpush1.msra.mxu0 0.0
        %1152 = vmatprep.subr.mxu0 0.0
        %1153 = vmatpush1.msra.mxu0 0.0
        %1154 = vmatprep.subr.mxu0 0.0
        %1155 = vmatpush1.msra.mxu0 0.0
        %1156 = vmatprep.subr.mxu0 0.0
        %1157 = vmatpush1.msra.mxu0 0.0
        %1158 = vmatprep.subr.mxu0 0.0
        %1159 = vmatpush1.msra.mxu0 0.0
        %1160 = vmatprep.subr.mxu0 0.0
        %1161 = vmatpush1.msra.mxu0 0.0
        %1162 = vmatprep.subr.mxu0 0.0
        %1163 = vmatpush1.msra.mxu0 0.0
        %1164 = vmatprep.subr.mxu0 0.0
        %1165 = vmatpush1.msra.mxu0 0.0
        %1166 = vmatprep.subr.mxu0 0.0
        %1167 = vmatpush1.msra.mxu0 0.0
        %1168 = vmatprep.subr.mxu0 0.0
        %1169 = vmatpush1.msra.mxu0 0.0
        %1170 = vmatprep.subr.mxu0 0.0
        %1171 = vmatpush1.msra.mxu0 %v1106
        %1172 = vmatprep.subr.mxu0 0.0
        %1173 = vmatpush2.msra.mxu0 0.0
        %1174 = vmatprep.subr.mxu0 0.0
        %1175 = vmatpush2.msra.mxu0 0.0
        %1176 = vmatprep.subr.mxu0 0.0
        %1177 = vmatpush2.msra.mxu0 0.0
        %1178 = vmatprep.subr.mxu0 0.0
        %1179 = vmatpush2.msra.mxu0 0.0
        %1180 = vmatprep.subr.mxu0 0.0
        %1181 = vmatpush2.msra.mxu0 0.0
        %1182 = vmatprep.subr.mxu0 0.0
        %1183 = vmatpush2.msra.mxu0 0.0
        %1184 = vmatprep.subr.mxu0 0.0
        %1185 = vmatpush2.msra.mxu0 0.0
        %1186 = vmatprep.subr.mxu0 0.0
        %1187 = vmatpush2.msra.mxu0 0.0
        %1188 = vmatprep.subr.mxu0 0.0
        %1189 = vmatpush2.msra.mxu0 0.0
        %1190 = vmatprep.subr.mxu0 0.0
        %1191 = vmatpush2.msra.mxu0 0.0
        %1192 = vmatprep.subr.mxu0 0.0
        %1193 = vmatpush2.msra.mxu0 0.0
        %1194 = vmatprep.subr.mxu0 0.0
        %1195 = vmatpush2.msra.mxu0 0.0
        %1196 = vmatprep.subr.mxu0 0.0
        %1197 = vmatpush2.msra.mxu0 0.0
        %1198 = vmatprep.subr.mxu0 0.0
        %1199 = vmatpush2.msra.mxu0 0.0
        %1200 = vmatprep.subr.mxu0 0.0
        %1201 = vmatpush2.msra.mxu0 0.0
        %1202 = vmatprep.subr.mxu0 0.0
        %1203 = vmatpush2.msra.mxu0 0.0
        %1204 = vmatprep.mubr.f32.mxu0 0.0
        %1205 = vmatmul.mubr.f32.gmra.mxu0 %v1117
        %v1206 = vpop.f32.mrf.mxu0
        %v1207 = vadd.f32 0.0, %v1206
        %v1208 = vpop.f32.mrf.mxu0
        %1209 = vmatprep.mubr.f32.mxu0 0.0
        %1210 = vmatmul.mubr.f32.gmra.mxu0 %v1120
        %v1211 = vpop.f32.mrf.mxu0
        %v1212 = vadd.f32 0.0, %v1211
        %v1213 = vpop.f32.mrf.mxu0
        %1214 = vmatprep.mubr.f32.mxu0 0.0
        %1215 = vmatmul.mubr.f32.gmra.mxu0 %v1123
        %v1216 = vpop.f32.mrf.mxu0
        %v1217 = vadd.f32 0.0, %v1216
        %v1218 = vpop.f32.mrf.mxu0
        %1219 = vmatprep.mubr.f32.mxu0 0.0
        %1220 = vmatmul.mubr.f32.gmra.mxu0 %v1126
        %v1221 = vpop.f32.mrf.mxu0
        %v1222 = vadd.f32 0.0, %v1221
        %v1223 = vpop.f32.mrf.mxu0
        %1224 = vmatprep.mubr.f32.mxu0 0.0
        %1225 = vmatmul.mubr.f32.gmra.mxu0 %v1129
        %v1226 = vpop.f32.mrf.mxu0
        %v1227 = vadd.f32 0.0, %v1226
        %v1228 = vpop.f32.mrf.mxu0
        %1229 = vmatprep.mubr.f32.mxu0 0.0
        %1230 = vmatmul.mubr.f32.gmra.mxu0 %v1132
        %v1231 = vpop.f32.mrf.mxu0
        %v1232 = vadd.f32 0.0, %v1231
        %v1233 = vpop.f32.mrf.mxu0
        %1234 = vmatprep.mubr.f32.mxu0 0.0
        %1235 = vmatmul.mubr.f32.gmra.mxu0 %v1135
        %v1236 = vpop.f32.mrf.mxu0
        %v1237 = vadd.f32 0.0, %v1236
        %v1238 = vpop.f32.mrf.mxu0
        %1239 = vmatprep.mubr.f32.mxu0 0.0
        %1240 = vmatmul.mubr.f32.gmra.mxu0 %v1138
        %v1241 = vpop.f32.mrf.mxu0
        %v1242 = vadd.f32 0.0, %v1241
        %v1243 = vpop.f32.mrf.mxu0
        %1244 = vdwg.mxu0
        %v1246 = vsel %vm740, %v904, 0
        %v1249 = vsel %vm740, %v905, 0
        %v1252 = vsel %vm740, %v906, 0
        %v1255 = vsel %vm740, %v907, 0
        %v1258 = vsel %vm740, %v908, 0
        %v1261 = vsel %vm740, %v909, 0
        %v1264 = vsel %vm740, %v910, 0
        %v1267 = vsel %vm740, %v911, 0
        %1269 = vmatprep.subr.mxu0 0.0
        %1270 = vmatpush1.msra.mxu0 0.0
        %1271 = vmatprep.subr.mxu0 0.0
        %1272 = vmatpush1.msra.mxu0 0.0
        %1273 = vmatprep.subr.mxu0 0.0
        %1274 = vmatpush1.msra.mxu0 0.0
        %1275 = vmatprep.subr.mxu0 0.0
        %1276 = vmatpush1.msra.mxu0 0.0
        %1277 = vmatprep.subr.mxu0 0.0
        %1278 = vmatpush1.msra.mxu0 0.0
        %1279 = vmatprep.subr.mxu0 0.0
        %1280 = vmatpush1.msra.mxu0 0.0
        %1281 = vmatprep.subr.mxu0 0.0
        %1282 = vmatpush1.msra.mxu0 0.0
        %1283 = vmatprep.subr.mxu0 0.0
        %1284 = vmatpush1.msra.mxu0 0.0
        %1285 = vmatprep.subr.mxu0 0.0
        %1286 = vmatpush1.msra.mxu0 0.0
        %1287 = vmatprep.subr.mxu0 0.0
        %1288 = vmatpush1.msra.mxu0 0.0
        %1289 = vmatprep.subr.mxu0 0.0
        %1290 = vmatpush1.msra.mxu0 0.0
        %1291 = vmatprep.subr.mxu0 0.0
        %1292 = vmatpush1.msra.mxu0 0.0
        %1293 = vmatprep.subr.mxu0 0.0
        %1294 = vmatpush1.msra.mxu0 0.0
        %1295 = vmatprep.subr.mxu0 0.0
        %1296 = vmatpush1.msra.mxu0 0.0
        %1297 = vmatprep.subr.mxu0 0.0
        %1298 = vmatpush1.msra.mxu0 0.0
        %1299 = vmatprep.subr.mxu0 0.0
        %1300 = vmatpush1.msra.mxu0 %v903
        %1301 = vmatprep.subr.mxu0 0.0
        %1302 = vmatpush2.msra.mxu0 0.0
        %1303 = vmatprep.subr.mxu0 0.0
        %1304 = vmatpush2.msra.mxu0 0.0
        %1305 = vmatprep.subr.mxu0 0.0
        %1306 = vmatpush2.msra.mxu0 0.0
        %1307 = vmatprep.subr.mxu0 0.0
        %1308 = vmatpush2.msra.mxu0 0.0
        %1309 = vmatprep.subr.mxu0 0.0
        %1310 = vmatpush2.msra.mxu0 0.0
        %1311 = vmatprep.subr.mxu0 0.0
        %1312 = vmatpush2.msra.mxu0 0.0
        %1313 = vmatprep.subr.mxu0 0.0
        %1314 = vmatpush2.msra.mxu0 0.0
        %1315 = vmatprep.subr.mxu0 0.0
        %1316 = vmatpush2.msra.mxu0 0.0
        %1317 = vmatprep.subr.mxu0 0.0
        %1318 = vmatpush2.msra.mxu0 0.0
        %1319 = vmatprep.subr.mxu0 0.0
        %1320 = vmatpush2.msra.mxu0 0.0
        %1321 = vmatprep.subr.mxu0 0.0
        %1322 = vmatpush2.msra.mxu0 0.0
        %1323 = vmatprep.subr.mxu0 0.0
        %1324 = vmatpush2.msra.mxu0 0.0
        %1325 = vmatprep.subr.mxu0 0.0
        %1326 = vmatpush2.msra.mxu0 0.0
        %1327 = vmatprep.subr.mxu0 0.0
        %1328 = vmatpush2.msra.mxu0 0.0
        %1329 = vmatprep.subr.mxu0 0.0
        %1330 = vmatpush2.msra.mxu0 0.0
        %1331 = vmatprep.subr.mxu0 0.0
        %1332 = vmatpush2.msra.mxu0 0.0
        %1333 = vmatprep.mubr.f32.mxu0 0.0
        %1334 = vmatmul.mubr.f32.gmra.mxu0 %v1246
        %v1335 = vpop.f32.mrf.mxu0
        %v1336 = vadd.f32 %v1207, %v1335
        %v1337 = vpop.f32.mrf.mxu0
        %1338 = vmatprep.mubr.f32.mxu0 0.0
        %1339 = vmatmul.mubr.f32.gmra.mxu0 %v1249
        %v1340 = vpop.f32.mrf.mxu0
        %v1341 = vadd.f32 %v1212, %v1340
        %v1342 = vpop.f32.mrf.mxu0
        %1343 = vmatprep.mubr.f32.mxu0 0.0
        %1344 = vmatmul.mubr.f32.gmra.mxu0 %v1252
        %v1345 = vpop.f32.mrf.mxu0
        %v1346 = vadd.f32 %v1217, %v1345
        %v1347 = vpop.f32.mrf.mxu0
        %1348 = vmatprep.mubr.f32.mxu0 0.0
        %1349 = vmatmul.mubr.f32.gmra.mxu0 %v1255
        %v1350 = vpop.f32.mrf.mxu0
        %v1351 = vadd.f32 %v1222, %v1350
        %v1352 = vpop.f32.mrf.mxu0
        %1353 = vmatprep.mubr.f32.mxu0 0.0
        %1354 = vmatmul.mubr.f32.gmra.mxu0 %v1258
        %v1355 = vpop.f32.mrf.mxu0
        %v1356 = vadd.f32 %v1227, %v1355
        %v1357 = vpop.f32.mrf.mxu0
        %1358 = vmatprep.mubr.f32.mxu0 0.0
        %1359 = vmatmul.mubr.f32.gmra.mxu0 %v1261
        %v1360 = vpop.f32.mrf.mxu0
        %v1361 = vadd.f32 %v1232, %v1360
        %v1362 = vpop.f32.mrf.mxu0
        %1363 = vmatprep.mubr.f32.mxu0 0.0
        %1364 = vmatmul.mubr.f32.gmra.mxu0 %v1264
        %v1365 = vpop.f32.mrf.mxu0
        %v1366 = vadd.f32 %v1237, %v1365
        %v1367 = vpop.f32.mrf.mxu0
        %1368 = vmatprep.mubr.f32.mxu0 0.0
        %1369 = vmatmul.mubr.f32.gmra.mxu0 %v1267
        %v1370 = vpop.f32.mrf.mxu0
        %v1371 = vadd.f32 %v1242, %v1370
        %v1372 = vpop.f32.mrf.mxu0
        %1373 = vdwg.mxu0
        %1374 = vxpose.xlu0.b32.start [1/16] %v640, 128
        %1375 = vxpose.xlu0.b32.cont [2/16] 0.0, 128
        %1376 = vxpose.xlu0.b32.cont [3/16] 0.0, 128
        %1377 = vxpose.xlu0.b32.cont [4/16] 0.0, 128
        %1378 = vxpose.xlu0.b32.cont [5/16] 0.0, 128
        %1379 = vxpose.xlu0.b32.cont [6/16] 0.0, 128
        %1380 = vxpose.xlu0.b32.cont [7/16] 0.0, 128
        %1381 = vxpose.xlu0.b32.cont [8/16] 0.0, 128
        %1382 = vxpose.xlu0.b32.cont [9/16] 0.0, 128
        %1383 = vxpose.xlu0.b32.cont [10/16] 0.0, 128
        %1384 = vxpose.xlu0.b32.cont [11/16] 0.0, 128
        %1385 = vxpose.xlu0.b32.cont [12/16] 0.0, 128
        %1386 = vxpose.xlu0.b32.cont [13/16] 0.0, 128
        %1387 = vxpose.xlu0.b32.cont [14/16] 0.0, 128
        %1388 = vxpose.xlu0.b32.cont [15/16] 0.0, 128
        %1389 = vxpose.xlu0.b32.end [16/16] 0.0, 128
        %v1390 = vpop.trf.xlu0
        %v1391 = vpop.trf.xlu0
        %v1392 = vpop.trf.xlu0
        %v1393 = vpop.trf.xlu0
        %v1394 = vpop.trf.xlu0
        %v1395 = vpop.trf.xlu0
        %v1396 = vpop.trf.xlu0
        %v1397 = vpop.trf.xlu0
        %v1398 = vpop.trf.xlu0
        %v1399 = vpop.trf.xlu0
        %v1400 = vpop.trf.xlu0
        %v1401 = vpop.trf.xlu0
        %v1402 = vpop.trf.xlu0
        %v1403 = vpop.trf.xlu0
        %v1404 = vpop.trf.xlu0
        %v1405 = vpop.trf.xlu0
        %v1407 = vsel %vm740, %v1390, 0
        %1409 = vmatprep.subr.mxu0 0.0
        %1410 = vmatpush1.msra.mxu0 0.0
        %1411 = vmatprep.subr.mxu0 0.0
        %1412 = vmatpush1.msra.mxu0 0.0
        %1413 = vmatprep.subr.mxu0 0.0
        %1414 = vmatpush1.msra.mxu0 0.0
        %1415 = vmatprep.subr.mxu0 0.0
        %1416 = vmatpush1.msra.mxu0 0.0
        %1417 = vmatprep.subr.mxu0 0.0
        %1418 = vmatpush1.msra.mxu0 0.0
        %1419 = vmatprep.subr.mxu0 0.0
        %1420 = vmatpush1.msra.mxu0 0.0
        %1421 = vmatprep.subr.mxu0 0.0
        %1422 = vmatpush1.msra.mxu0 0.0
        %1423 = vmatprep.subr.mxu0 0.0
        %1424 = vmatpush1.msra.mxu0 0.0
        %1425 = vmatprep.subr.mxu0 0.0
        %1426 = vmatpush1.msra.mxu0 0.0
        %1427 = vmatprep.subr.mxu0 0.0
        %1428 = vmatpush1.msra.mxu0 0.0
        %1429 = vmatprep.subr.mxu0 0.0
        %1430 = vmatpush1.msra.mxu0 0.0
        %1431 = vmatprep.subr.mxu0 0.0
        %1432 = vmatpush1.msra.mxu0 0.0
        %1433 = vmatprep.subr.mxu0 0.0
        %1434 = vmatpush1.msra.mxu0 0.0
        %1435 = vmatprep.subr.mxu0 0.0
        %1436 = vmatpush1.msra.mxu0 0.0
        %1437 = vmatprep.subr.mxu0 0.0
        %1438 = vmatpush1.msra.mxu0 0.0
        %1439 = vmatprep.subr.mxu0 0.0
        %1440 = vmatpush1.msra.mxu0 %v467
        %1441 = vmatprep.subr.mxu0 0.0
        %1442 = vmatpush2.msra.mxu0 0.0
        %1443 = vmatprep.subr.mxu0 0.0
        %1444 = vmatpush2.msra.mxu0 0.0
        %1445 = vmatprep.subr.mxu0 0.0
        %1446 = vmatpush2.msra.mxu0 0.0
        %1447 = vmatprep.subr.mxu0 0.0
        %1448 = vmatpush2.msra.mxu0 0.0
        %1449 = vmatprep.subr.mxu0 0.0
        %1450 = vmatpush2.msra.mxu0 0.0
        %1451 = vmatprep.subr.mxu0 0.0
        %1452 = vmatpush2.msra.mxu0 0.0
        %1453 = vmatprep.subr.mxu0 0.0
        %1454 = vmatpush2.msra.mxu0 0.0
        %1455 = vmatprep.subr.mxu0 0.0
        %1456 = vmatpush2.msra.mxu0 0.0
        %1457 = vmatprep.subr.mxu0 0.0
        %1458 = vmatpush2.msra.mxu0 0.0
        %1459 = vmatprep.subr.mxu0 0.0
        %1460 = vmatpush2.msra.mxu0 0.0
        %1461 = vmatprep.subr.mxu0 0.0
        %1462 = vmatpush2.msra.mxu0 0.0
        %1463 = vmatprep.subr.mxu0 0.0
        %1464 = vmatpush2.msra.mxu0 0.0
        %1465 = vmatprep.subr.mxu0 0.0
        %1466 = vmatpush2.msra.mxu0 0.0
        %1467 = vmatprep.subr.mxu0 0.0
        %1468 = vmatpush2.msra.mxu0 0.0
        %1469 = vmatprep.subr.mxu0 0.0
        %1470 = vmatpush2.msra.mxu0 0.0
        %1471 = vmatprep.subr.mxu0 0.0
        %1472 = vmatpush2.msra.mxu0 0.0
        %1473 = vmatprep.mubr.f32.mxu0 0.0
        %1474 = vmatmul.mubr.f32.gmra.mxu0 %v1407
        %v1475 = vpop.f32.mrf.mxu0
        %v1476 = vadd.f32 0.0, %v1475
        %v1477 = vpop.f32.mrf.mxu0
        %1478 = vdwg.mxu0
        %v1479 = vrot.slane %v1476, 4
        %v1480 = vmax.f32 %v1476, %v1479
        %v1481 = vrot.slane %v1480, 2
        %v1482 = vmax.f32 %v1480, %v1481
        %v1483 = vrot.slane %v1482, 1
        %v1484 = vmax.f32 %v1482, %v1483
        %v1485 = vsub.f32 %v1476, %v1484
        %v1486 = vmul.f32 %v1485, 1.442695
        %v1487 = vpow.pop %v1486
        %v1488 = vrot.slane %v1487, 4
        %v1489 = vadd.f32 %v1487, %v1488
        %v1490 = vrot.slane %v1489, 2
        %v1491 = vadd.f32 %v1489, %v1490
        %v1492 = vrot.slane %v1491, 1
        %v1493 = vadd.f32 %v1491, %v1492
        %v1495 = vsel %vm740, %v680, 0
        %1497 = vmatprep.subr.mxu0 0.0
        %1498 = vmatpush1.msra.mxu0 0.0
        %1499 = vmatprep.subr.mxu0 0.0
        %1500 = vmatpush1.msra.mxu0 0.0
        %1501 = vmatprep.subr.mxu0 0.0
        %1502 = vmatpush1.msra.mxu0 0.0
        %1503 = vmatprep.subr.mxu0 0.0
        %1504 = vmatpush1.msra.mxu0 0.0
        %1505 = vmatprep.subr.mxu0 0.0
        %1506 = vmatpush1.msra.mxu0 0.0
        %1507 = vmatprep.subr.mxu0 0.0
        %1508 = vmatpush1.msra.mxu0 0.0
        %1509 = vmatprep.subr.mxu0 0.0
        %1510 = vmatpush1.msra.mxu0 0.0
        %1511 = vmatprep.subr.mxu0 0.0
        %1512 = vmatpush1.msra.mxu0 0.0
        %1513 = vmatprep.subr.mxu0 0.0
        %1514 = vmatpush1.msra.mxu0 0.0
        %1515 = vmatprep.subr.mxu0 0.0
        %1516 = vmatpush1.msra.mxu0 0.0
        %1517 = vmatprep.subr.mxu0 0.0
        %1518 = vmatpush1.msra.mxu0 0.0
        %1519 = vmatprep.subr.mxu0 0.0
        %1520 = vmatpush1.msra.mxu0 0.0
        %1521 = vmatprep.subr.mxu0 0.0
        %1522 = vmatpush1.msra.mxu0 0.0
        %1523 = vmatprep.subr.mxu0 0.0
        %1524 = vmatpush1.msra.mxu0 0.0
        %1525 = vmatprep.subr.mxu0 0.0
        %1526 = vmatpush1.msra.mxu0 0.0
        %1527 = vmatprep.subr.mxu0 0.0
        %1528 = vmatpush1.msra.mxu0 %v1487
        %1529 = vmatprep.subr.mxu0 0.0
        %1530 = vmatpush2.msra.mxu0 0.0
        %1531 = vmatprep.subr.mxu0 0.0
        %1532 = vmatpush2.msra.mxu0 0.0
        %1533 = vmatprep.subr.mxu0 0.0
        %1534 = vmatpush2.msra.mxu0 0.0
        %1535 = vmatprep.subr.mxu0 0.0
        %1536 = vmatpush2.msra.mxu0 0.0
        %1537 = vmatprep.subr.mxu0 0.0
        %1538 = vmatpush2.msra.mxu0 0.0
        %1539 = vmatprep.subr.mxu0 0.0
        %1540 = vmatpush2.msra.mxu0 0.0
        %1541 = vmatprep.subr.mxu0 0.0
        %1542 = vmatpush2.msra.mxu0 0.0
        %1543 = vmatprep.subr.mxu0 0.0
        %1544 = vmatpush2.msra.mxu0 0.0
        %1545 = vmatprep.subr.mxu0 0.0
        %1546 = vmatpush2.msra.mxu0 0.0
        %1547 = vmatprep.subr.mxu0 0.0
        %1548 = vmatpush2.msra.mxu0 0.0
        %1549 = vmatprep.subr.mxu0 0.0
        %1550 = vmatpush2.msra.mxu0 0.0
        %1551 = vmatprep.subr.mxu0 0.0
        %1552 = vmatpush2.msra.mxu0 0.0
        %1553 = vmatprep.subr.mxu0 0.0
        %1554 = vmatpush2.msra.mxu0 0.0
        %1555 = vmatprep.subr.mxu0 0.0
        %1556 = vmatpush2.msra.mxu0 0.0
        %1557 = vmatprep.subr.mxu0 0.0
        %1558 = vmatpush2.msra.mxu0 0.0
        %1559 = vmatprep.subr.mxu0 0.0
        %1560 = vmatpush2.msra.mxu0 0.0
        %1561 = vmatprep.mubr.f32.mxu0 0.0
        %1562 = vmatmul.mubr.f32.gmra.mxu0 %v1495
        %v1563 = vpop.f32.mrf.mxu0
        %v1564 = vadd.f32 0.0, %v1563
        %v1565 = vpop.f32.mrf.mxu0
        %1566 = vdwg.mxu0
        %v1567 = vrcp.pop %v1493
        %v1568 = vmul.f32 %v1564, %v1567
        %s1569 = scalar_lea.vmem %s4, 128
        %v1570 = vld [vmem:[%s1569] sm:$0xff]
        %v1571 = vld [vmem:[%s1569 + $0x8] sm:$0xff]
        %v1572 = vld [vmem:[%s1569 + $0x10] sm:$0xff]
        %v1573 = vld [vmem:[%s1569 + $0x18] sm:$0xff]
        %v1574 = vld [vmem:[%s1569 + $0x20] sm:$0xff]
        %v1575 = vld [vmem:[%s1569 + $0x28] sm:$0xff]
        %v1576 = vld [vmem:[%s1569 + $0x30] sm:$0xff]
        %v1577 = vld [vmem:[%s1569 + $0x38] sm:$0xff]
        %v1579 = vsel %vm740, %v1570, 0
        %v1582 = vsel %vm740, %v1571, 0
        %v1585 = vsel %vm740, %v1572, 0
        %v1588 = vsel %vm740, %v1573, 0
        %v1591 = vsel %vm740, %v1574, 0
        %v1594 = vsel %vm740, %v1575, 0
        %v1597 = vsel %vm740, %v1576, 0
        %v1600 = vsel %vm740, %v1577, 0
        %1602 = vmatprep.subr.mxu0 0.0
        %1603 = vmatpush1.msra.mxu0 0.0
        %1604 = vmatprep.subr.mxu0 0.0
        %1605 = vmatpush1.msra.mxu0 0.0
        %1606 = vmatprep.subr.mxu0 0.0
        %1607 = vmatpush1.msra.mxu0 0.0
        %1608 = vmatprep.subr.mxu0 0.0
        %1609 = vmatpush1.msra.mxu0 0.0
        %1610 = vmatprep.subr.mxu0 0.0
        %1611 = vmatpush1.msra.mxu0 0.0
        %1612 = vmatprep.subr.mxu0 0.0
        %1613 = vmatpush1.msra.mxu0 0.0
        %1614 = vmatprep.subr.mxu0 0.0
        %1615 = vmatpush1.msra.mxu0 0.0
        %1616 = vmatprep.subr.mxu0 0.0
        %1617 = vmatpush1.msra.mxu0 0.0
        %1618 = vmatprep.subr.mxu0 0.0
        %1619 = vmatpush1.msra.mxu0 0.0
        %1620 = vmatprep.subr.mxu0 0.0
        %1621 = vmatpush1.msra.mxu0 0.0
        %1622 = vmatprep.subr.mxu0 0.0
        %1623 = vmatpush1.msra.mxu0 0.0
        %1624 = vmatprep.subr.mxu0 0.0
        %1625 = vmatpush1.msra.mxu0 0.0
        %1626 = vmatprep.subr.mxu0 0.0
        %1627 = vmatpush1.msra.mxu0 0.0
        %1628 = vmatprep.subr.mxu0 0.0
        %1629 = vmatpush1.msra.mxu0 0.0
        %1630 = vmatprep.subr.mxu0 0.0
        %1631 = vmatpush1.msra.mxu0 0.0
        %1632 = vmatprep.subr.mxu0 0.0
        %1633 = vmatpush1.msra.mxu0 %v1568
        %1634 = vmatprep.subr.mxu0 0.0
        %1635 = vmatpush2.msra.mxu0 0.0
        %1636 = vmatprep.subr.mxu0 0.0
        %1637 = vmatpush2.msra.mxu0 0.0
        %1638 = vmatprep.subr.mxu0 0.0
        %1639 = vmatpush2.msra.mxu0 0.0
        %1640 = vmatprep.subr.mxu0 0.0
        %1641 = vmatpush2.msra.mxu0 0.0
        %1642 = vmatprep.subr.mxu0 0.0
        %1643 = vmatpush2.msra.mxu0 0.0
        %1644 = vmatprep.subr.mxu0 0.0
        %1645 = vmatpush2.msra.mxu0 0.0
        %1646 = vmatprep.subr.mxu0 0.0
        %1647 = vmatpush2.msra.mxu0 0.0
        %1648 = vmatprep.subr.mxu0 0.0
        %1649 = vmatpush2.msra.mxu0 0.0
        %1650 = vmatprep.subr.mxu0 0.0
        %1651 = vmatpush2.msra.mxu0 0.0
        %1652 = vmatprep.subr.mxu0 0.0
        %1653 = vmatpush2.msra.mxu0 0.0
        %1654 = vmatprep.subr.mxu0 0.0
        %1655 = vmatpush2.msra.mxu0 0.0
        %1656 = vmatprep.subr.mxu0 0.0
        %1657 = vmatpush2.msra.mxu0 0.0
        %1658 = vmatprep.subr.mxu0 0.0
        %1659 = vmatpush2.msra.mxu0 0.0
        %1660 = vmatprep.subr.mxu0 0.0
        %1661 = vmatpush2.msra.mxu0 0.0
        %1662 = vmatprep.subr.mxu0 0.0
        %1663 = vmatpush2.msra.mxu0 0.0
        %1664 = vmatprep.subr.mxu0 0.0
        %1665 = vmatpush2.msra.mxu0 0.0
        %1666 = vmatprep.mubr.f32.mxu0 0.0
        %1667 = vmatmul.mubr.f32.gmra.mxu0 %v1579
        %v1668 = vpop.f32.mrf.mxu0
        %v1669 = vadd.f32 0.0, %v1668
        %v1670 = vpop.f32.mrf.mxu0
        %1671 = vmatprep.mubr.f32.mxu0 0.0
        %1672 = vmatmul.mubr.f32.gmra.mxu0 %v1582
        %v1673 = vpop.f32.mrf.mxu0
        %v1674 = vadd.f32 0.0, %v1673
        %v1675 = vpop.f32.mrf.mxu0
        %1676 = vmatprep.mubr.f32.mxu0 0.0
        %1677 = vmatmul.mubr.f32.gmra.mxu0 %v1585
        %v1678 = vpop.f32.mrf.mxu0
        %v1679 = vadd.f32 0.0, %v1678
        %v1680 = vpop.f32.mrf.mxu0
        %1681 = vmatprep.mubr.f32.mxu0 0.0
        %1682 = vmatmul.mubr.f32.gmra.mxu0 %v1588
        %v1683 = vpop.f32.mrf.mxu0
        %v1684 = vadd.f32 0.0, %v1683
        %v1685 = vpop.f32.mrf.mxu0
        %1686 = vmatprep.mubr.f32.mxu0 0.0
        %1687 = vmatmul.mubr.f32.gmra.mxu0 %v1591
        %v1688 = vpop.f32.mrf.mxu0
        %v1689 = vadd.f32 0.0, %v1688
        %v1690 = vpop.f32.mrf.mxu0
        %1691 = vmatprep.mubr.f32.mxu0 0.0
        %1692 = vmatmul.mubr.f32.gmra.mxu0 %v1594
        %v1693 = vpop.f32.mrf.mxu0
        %v1694 = vadd.f32 0.0, %v1693
        %v1695 = vpop.f32.mrf.mxu0
        %1696 = vmatprep.mubr.f32.mxu0 0.0
        %1697 = vmatmul.mubr.f32.gmra.mxu0 %v1597
        %v1698 = vpop.f32.mrf.mxu0
        %v1699 = vadd.f32 0.0, %v1698
        %v1700 = vpop.f32.mrf.mxu0
        %1701 = vmatprep.mubr.f32.mxu0 0.0
        %1702 = vmatmul.mubr.f32.gmra.mxu0 %v1600
        %v1703 = vpop.f32.mrf.mxu0
        %v1704 = vadd.f32 0.0, %v1703
        %v1705 = vpop.f32.mrf.mxu0
        %1706 = vdwg.mxu0
        %v1707 = vadd.f32 %v1336, %v1669
        %v1708 = vadd.f32 %v1341, %v1674
        %v1709 = vadd.f32 %v1346, %v1679
        %v1710 = vadd.f32 %v1351, %v1684
        %v1711 = vadd.f32 %v1356, %v1689
        %v1712 = vadd.f32 %v1361, %v1694
        %v1713 = vadd.f32 %v1366, %v1699
        %v1714 = vadd.f32 %v1371, %v1704
        %1715 = vxpose.xlu0.b32.start [1/16] %v645, 128
        %1716 = vxpose.xlu0.b32.cont [2/16] 0.0, 128
        %1717 = vxpose.xlu0.b32.cont [3/16] 0.0, 128
        %1718 = vxpose.xlu0.b32.cont [4/16] 0.0, 128
        %1719 = vxpose.xlu0.b32.cont [5/16] 0.0, 128
        %1720 = vxpose.xlu0.b32.cont [6/16] 0.0, 128
        %1721 = vxpose.xlu0.b32.cont [7/16] 0.0, 128
        %1722 = vxpose.xlu0.b32.cont [8/16] 0.0, 128
        %1723 = vxpose.xlu0.b32.cont [9/16] 0.0, 128
        %1724 = vxpose.xlu0.b32.cont [10/16] 0.0, 128
        %1725 = vxpose.xlu0.b32.cont [11/16] 0.0, 128
        %1726 = vxpose.xlu0.b32.cont [12/16] 0.0, 128
        %1727 = vxpose.xlu0.b32.cont [13/16] 0.0, 128
        %1728 = vxpose.xlu0.b32.cont [14/16] 0.0, 128
        %1729 = vxpose.xlu0.b32.cont [15/16] 0.0, 128
        %1730 = vxpose.xlu0.b32.end [16/16] 0.0, 128
        %v1731 = vpop.trf.xlu0
        %v1732 = vpop.trf.xlu0
        %v1733 = vpop.trf.xlu0
        %v1734 = vpop.trf.xlu0
        %v1735 = vpop.trf.xlu0
        %v1736 = vpop.trf.xlu0
        %v1737 = vpop.trf.xlu0
        %v1738 = vpop.trf.xlu0
        %v1739 = vpop.trf.xlu0
        %v1740 = vpop.trf.xlu0
        %v1741 = vpop.trf.xlu0
        %v1742 = vpop.trf.xlu0
        %v1743 = vpop.trf.xlu0
        %v1744 = vpop.trf.xlu0
        %v1745 = vpop.trf.xlu0
        %v1746 = vpop.trf.xlu0
        %v1748 = vsel %vm740, %v1731, 0
        %1750 = vmatprep.subr.mxu0 0.0
        %1751 = vmatpush1.msra.mxu0 0.0
        %1752 = vmatprep.subr.mxu0 0.0
        %1753 = vmatpush1.msra.mxu0 0.0
        %1754 = vmatprep.subr.mxu0 0.0
        %1755 = vmatpush1.msra.mxu0 0.0
        %1756 = vmatprep.subr.mxu0 0.0
        %1757 = vmatpush1.msra.mxu0 0.0
        %1758 = vmatprep.subr.mxu0 0.0
        %1759 = vmatpush1.msra.mxu0 0.0
        %1760 = vmatprep.subr.mxu0 0.0
        %1761 = vmatpush1.msra.mxu0 0.0
        %1762 = vmatprep.subr.mxu0 0.0
        %1763 = vmatpush1.msra.mxu0 0.0
        %1764 = vmatprep.subr.mxu0 0.0
        %1765 = vmatpush1.msra.mxu0 0.0
        %1766 = vmatprep.subr.mxu0 0.0
        %1767 = vmatpush1.msra.mxu0 0.0
        %1768 = vmatprep.subr.mxu0 0.0
        %1769 = vmatpush1.msra.mxu0 0.0
        %1770 = vmatprep.subr.mxu0 0.0
        %1771 = vmatpush1.msra.mxu0 0.0
        %1772 = vmatprep.subr.mxu0 0.0
        %1773 = vmatpush1.msra.mxu0 0.0
        %1774 = vmatprep.subr.mxu0 0.0
        %1775 = vmatpush1.msra.mxu0 0.0
        %1776 = vmatprep.subr.mxu0 0.0
        %1777 = vmatpush1.msra.mxu0 0.0
        %1778 = vmatprep.subr.mxu0 0.0
        %1779 = vmatpush1.msra.mxu0 0.0
        %1780 = vmatprep.subr.mxu0 0.0
        %1781 = vmatpush1.msra.mxu0 %v472
        %1782 = vmatprep.subr.mxu0 0.0
        %1783 = vmatpush2.msra.mxu0 0.0
        %1784 = vmatprep.subr.mxu0 0.0
        %1785 = vmatpush2.msra.mxu0 0.0
        %1786 = vmatprep.subr.mxu0 0.0
        %1787 = vmatpush2.msra.mxu0 0.0
        %1788 = vmatprep.subr.mxu0 0.0
        %1789 = vmatpush2.msra.mxu0 0.0
        %1790 = vmatprep.subr.mxu0 0.0
        %1791 = vmatpush2.msra.mxu0 0.0
        %1792 = vmatprep.subr.mxu0 0.0
        %1793 = vmatpush2.msra.mxu0 0.0
        %1794 = vmatprep.subr.mxu0 0.0
        %1795 = vmatpush2.msra.mxu0 0.0
        %1796 = vmatprep.subr.mxu0 0.0
        %1797 = vmatpush2.msra.mxu0 0.0
        %1798 = vmatprep.subr.mxu0 0.0
        %1799 = vmatpush2.msra.mxu0 0.0
        %1800 = vmatprep.subr.mxu0 0.0
        %1801 = vmatpush2.msra.mxu0 0.0
        %1802 = vmatprep.subr.mxu0 0.0
        %1803 = vmatpush2.msra.mxu0 0.0
        %1804 = vmatprep.subr.mxu0 0.0
        %1805 = vmatpush2.msra.mxu0 0.0
        %1806 = vmatprep.subr.mxu0 0.0
        %1807 = vmatpush2.msra.mxu0 0.0
        %1808 = vmatprep.subr.mxu0 0.0
        %1809 = vmatpush2.msra.mxu0 0.0
        %1810 = vmatprep.subr.mxu0 0.0
        %1811 = vmatpush2.msra.mxu0 0.0
        %1812 = vmatprep.subr.mxu0 0.0
        %1813 = vmatpush2.msra.mxu0 0.0
        %1814 = vmatprep.mubr.f32.mxu0 0.0
        %1815 = vmatmul.mubr.f32.gmra.mxu0 %v1748
        %v1816 = vpop.f32.mrf.mxu0
        %v1817 = vadd.f32 0.0, %v1816
        %v1818 = vpop.f32.mrf.mxu0
        %1819 = vdwg.mxu0
        %v1820 = vrot.slane %v1817, 4
        %v1821 = vmax.f32 %v1817, %v1820
        %v1822 = vrot.slane %v1821, 2
        %v1823 = vmax.f32 %v1821, %v1822
        %v1824 = vrot.slane %v1823, 1
        %v1825 = vmax.f32 %v1823, %v1824
        %v1826 = vsub.f32 %v1817, %v1825
        %v1827 = vmul.f32 %v1826, 1.442695
        %v1828 = vpow.pop %v1827
        %v1829 = vrot.slane %v1828, 4
        %v1830 = vadd.f32 %v1828, %v1829
        %v1831 = vrot.slane %v1830, 2
        %v1832 = vadd.f32 %v1830, %v1831
        %v1833 = vrot.slane %v1832, 1
        %v1834 = vadd.f32 %v1832, %v1833
        %v1836 = vsel %vm740, %v685, 0
        %1838 = vmatprep.subr.mxu0 0.0
        %1839 = vmatpush1.msra.mxu0 0.0
        %1840 = vmatprep.subr.mxu0 0.0
        %1841 = vmatpush1.msra.mxu0 0.0
        %1842 = vmatprep.subr.mxu0 0.0
        %1843 = vmatpush1.msra.mxu0 0.0
        %1844 = vmatprep.subr.mxu0 0.0
        %1845 = vmatpush1.msra.mxu0 0.0
        %1846 = vmatprep.subr.mxu0 0.0
        %1847 = vmatpush1.msra.mxu0 0.0
        %1848 = vmatprep.subr.mxu0 0.0
        %1849 = vmatpush1.msra.mxu0 0.0
        %1850 = vmatprep.subr.mxu0 0.0
        %1851 = vmatpush1.msra.mxu0 0.0
        %1852 = vmatprep.subr.mxu0 0.0
        %1853 = vmatpush1.msra.mxu0 0.0
        %1854 = vmatprep.subr.mxu0 0.0
        %1855 = vmatpush1.msra.mxu0 0.0
        %1856 = vmatprep.subr.mxu0 0.0
        %1857 = vmatpush1.msra.mxu0 0.0
        %1858 = vmatprep.subr.mxu0 0.0
        %1859 = vmatpush1.msra.mxu0 0.0
        %1860 = vmatprep.subr.mxu0 0.0
        %1861 = vmatpush1.msra.mxu0 0.0
        %1862 = vmatprep.subr.mxu0 0.0
        %1863 = vmatpush1.msra.mxu0 0.0
        %1864 = vmatprep.subr.mxu0 0.0
        %1865 = vmatpush1.msra.mxu0 0.0
        %1866 = vmatprep.subr.mxu0 0.0
        %1867 = vmatpush1.msra.mxu0 0.0
        %1868 = vmatprep.subr.mxu0 0.0
        %1869 = vmatpush1.msra.mxu0 %v1828
        %1870 = vmatprep.subr.mxu0 0.0
        %1871 = vmatpush2.msra.mxu0 0.0
        %1872 = vmatprep.subr.mxu0 0.0
        %1873 = vmatpush2.msra.mxu0 0.0
        %1874 = vmatprep.subr.mxu0 0.0
        %1875 = vmatpush2.msra.mxu0 0.0
        %1876 = vmatprep.subr.mxu0 0.0
        %1877 = vmatpush2.msra.mxu0 0.0
        %1878 = vmatprep.subr.mxu0 0.0
        %1879 = vmatpush2.msra.mxu0 0.0
        %1880 = vmatprep.subr.mxu0 0.0
        %1881 = vmatpush2.msra.mxu0 0.0
        %1882 = vmatprep.subr.mxu0 0.0
        %1883 = vmatpush2.msra.mxu0 0.0
        %1884 = vmatprep.subr.mxu0 0.0
        %1885 = vmatpush2.msra.mxu0 0.0
        %1886 = vmatprep.subr.mxu0 0.0
        %1887 = vmatpush2.msra.mxu0 0.0
        %1888 = vmatprep.subr.mxu0 0.0
        %1889 = vmatpush2.msra.mxu0 0.0
        %1890 = vmatprep.subr.mxu0 0.0
        %1891 = vmatpush2.msra.mxu0 0.0
        %1892 = vmatprep.subr.mxu0 0.0
        %1893 = vmatpush2.msra.mxu0 0.0
        %1894 = vmatprep.subr.mxu0 0.0
        %1895 = vmatpush2.msra.mxu0 0.0
        %1896 = vmatprep.subr.mxu0 0.0
        %1897 = vmatpush2.msra.mxu0 0.0
        %1898 = vmatprep.subr.mxu0 0.0
        %1899 = vmatpush2.msra.mxu0 0.0
        %1900 = vmatprep.subr.mxu0 0.0
        %1901 = vmatpush2.msra.mxu0 0.0
        %1902 = vmatprep.mubr.f32.mxu0 0.0
        %1903 = vmatmul.mubr.f32.gmra.mxu0 %v1836
        %v1904 = vpop.f32.mrf.mxu0
        %v1905 = vadd.f32 0.0, %v1904
        %v1906 = vpop.f32.mrf.mxu0
        %1907 = vdwg.mxu0
        %v1908 = vrcp.pop %v1834
        %v1909 = vmul.f32 %v1905, %v1908
        %s1910 = scalar_lea.vmem %s4, 192
        %v1911 = vld [vmem:[%s1910] sm:$0xff]
        %v1912 = vld [vmem:[%s1910 + $0x8] sm:$0xff]
        %v1913 = vld [vmem:[%s1910 + $0x10] sm:$0xff]
        %v1914 = vld [vmem:[%s1910 + $0x18] sm:$0xff]
        %v1915 = vld [vmem:[%s1910 + $0x20] sm:$0xff]
        %v1916 = vld [vmem:[%s1910 + $0x28] sm:$0xff]
        %v1917 = vld [vmem:[%s1910 + $0x30] sm:$0xff]
        %v1918 = vld [vmem:[%s1910 + $0x38] sm:$0xff]
        %v1920 = vsel %vm740, %v1911, 0
        %v1923 = vsel %vm740, %v1912, 0
        %v1926 = vsel %vm740, %v1913, 0
        %v1929 = vsel %vm740, %v1914, 0
        %v1932 = vsel %vm740, %v1915, 0
        %v1935 = vsel %vm740, %v1916, 0
        %v1938 = vsel %vm740, %v1917, 0
        %v1941 = vsel %vm740, %v1918, 0
        %1943 = vmatprep.subr.mxu0 0.0
        %1944 = vmatpush1.msra.mxu0 0.0
        %1945 = vmatprep.subr.mxu0 0.0
        %1946 = vmatpush1.msra.mxu0 0.0
        %1947 = vmatprep.subr.mxu0 0.0
        %1948 = vmatpush1.msra.mxu0 0.0
        %1949 = vmatprep.subr.mxu0 0.0
        %1950 = vmatpush1.msra.mxu0 0.0
        %1951 = vmatprep.subr.mxu0 0.0
        %1952 = vmatpush1.msra.mxu0 0.0
        %1953 = vmatprep.subr.mxu0 0.0
        %1954 = vmatpush1.msra.mxu0 0.0
        %1955 = vmatprep.subr.mxu0 0.0
        %1956 = vmatpush1.msra.mxu0 0.0
        %1957 = vmatprep.subr.mxu0 0.0
        %1958 = vmatpush1.msra.mxu0 0.0
        %1959 = vmatprep.subr.mxu0 0.0
        %1960 = vmatpush1.msra.mxu0 0.0
        %1961 = vmatprep.subr.mxu0 0.0
        %1962 = vmatpush1.msra.mxu0 0.0
        %1963 = vmatprep.subr.mxu0 0.0
        %1964 = vmatpush1.msra.mxu0 0.0
        %1965 = vmatprep.subr.mxu0 0.0
        %1966 = vmatpush1.msra.mxu0 0.0
        %1967 = vmatprep.subr.mxu0 0.0
        %1968 = vmatpush1.msra.mxu0 0.0
        %1969 = vmatprep.subr.mxu0 0.0
        %1970 = vmatpush1.msra.mxu0 0.0
        %1971 = vmatprep.subr.mxu0 0.0
        %1972 = vmatpush1.msra.mxu0 0.0
        %1973 = vmatprep.subr.mxu0 0.0
        %1974 = vmatpush1.msra.mxu0 %v1909
        %1975 = vmatprep.subr.mxu0 0.0
        %1976 = vmatpush2.msra.mxu0 0.0
        %1977 = vmatprep.subr.mxu0 0.0
        %1978 = vmatpush2.msra.mxu0 0.0
        %1979 = vmatprep.subr.mxu0 0.0
        %1980 = vmatpush2.msra.mxu0 0.0
        %1981 = vmatprep.subr.mxu0 0.0
        %1982 = vmatpush2.msra.mxu0 0.0
        %1983 = vmatprep.subr.mxu0 0.0
        %1984 = vmatpush2.msra.mxu0 0.0
        %1985 = vmatprep.subr.mxu0 0.0
        %1986 = vmatpush2.msra.mxu0 0.0
        %1987 = vmatprep.subr.mxu0 0.0
        %1988 = vmatpush2.msra.mxu0 0.0
        %1989 = vmatprep.subr.mxu0 0.0
        %1990 = vmatpush2.msra.mxu0 0.0
        %1991 = vmatprep.subr.mxu0 0.0
        %1992 = vmatpush2.msra.mxu0 0.0
        %1993 = vmatprep.subr.mxu0 0.0
        %1994 = vmatpush2.msra.mxu0 0.0
        %1995 = vmatprep.subr.mxu0 0.0
        %1996 = vmatpush2.msra.mxu0 0.0
        %1997 = vmatprep.subr.mxu0 0.0
        %1998 = vmatpush2.msra.mxu0 0.0
        %1999 = vmatprep.subr.mxu0 0.0
        %2000 = vmatpush2.msra.mxu0 0.0
        %2001 = vmatprep.subr.mxu0 0.0
        %2002 = vmatpush2.msra.mxu0 0.0
        %2003 = vmatprep.subr.mxu0 0.0
        %2004 = vmatpush2.msra.mxu0 0.0
        %2005 = vmatprep.subr.mxu0 0.0
        %2006 = vmatpush2.msra.mxu0 0.0
        %2007 = vmatprep.mubr.f32.mxu0 0.0
        %2008 = vmatmul.mubr.f32.gmra.mxu0 %v1920
        %v2009 = vpop.f32.mrf.mxu0
        %v2010 = vadd.f32 0.0, %v2009
        %v2011 = vpop.f32.mrf.mxu0
        %2012 = vmatprep.mubr.f32.mxu0 0.0
        %2013 = vmatmul.mubr.f32.gmra.mxu0 %v1923
        %v2014 = vpop.f32.mrf.mxu0
        %v2015 = vadd.f32 0.0, %v2014
        %v2016 = vpop.f32.mrf.mxu0
        %2017 = vmatprep.mubr.f32.mxu0 0.0
        %2018 = vmatmul.mubr.f32.gmra.mxu0 %v1926
        %v2019 = vpop.f32.mrf.mxu0
        %v2020 = vadd.f32 0.0, %v2019
        %v2021 = vpop.f32.mrf.mxu0
        %2022 = vmatprep.mubr.f32.mxu0 0.0
        %2023 = vmatmul.mubr.f32.gmra.mxu0 %v1929
        %v2024 = vpop.f32.mrf.mxu0
        %v2025 = vadd.f32 0.0, %v2024
        %v2026 = vpop.f32.mrf.mxu0
        %2027 = vmatprep.mubr.f32.mxu0 0.0
        %2028 = vmatmul.mubr.f32.gmra.mxu0 %v1932
        %v2029 = vpop.f32.mrf.mxu0
        %v2030 = vadd.f32 0.0, %v2029
        %v2031 = vpop.f32.mrf.mxu0
        %2032 = vmatprep.mubr.f32.mxu0 0.0
        %2033 = vmatmul.mubr.f32.gmra.mxu0 %v1935
        %v2034 = vpop.f32.mrf.mxu0
        %v2035 = vadd.f32 0.0, %v2034
        %v2036 = vpop.f32.mrf.mxu0
        %2037 = vmatprep.mubr.f32.mxu0 0.0
        %2038 = vmatmul.mubr.f32.gmra.mxu0 %v1938
        %v2039 = vpop.f32.mrf.mxu0
        %v2040 = vadd.f32 0.0, %v2039
        %v2041 = vpop.f32.mrf.mxu0
        %2042 = vmatprep.mubr.f32.mxu0 0.0
        %2043 = vmatmul.mubr.f32.gmra.mxu0 %v1941
        %v2044 = vpop.f32.mrf.mxu0
        %v2045 = vadd.f32 0.0, %v2044
        %v2046 = vpop.f32.mrf.mxu0
        %2047 = vdwg.mxu0
        %v2048 = vadd.f32 %v1707, %v2010
        %v2049 = vadd.f32 %v1708, %v2015
        %v2050 = vadd.f32 %v1709, %v2020
        %v2051 = vadd.f32 %v1710, %v2025
        %v2052 = vadd.f32 %v1711, %v2030
        %v2053 = vadd.f32 %v1712, %v2035
        %v2054 = vadd.f32 %v1713, %v2040
        %v2055 = vadd.f32 %v1714, %v2045
        %2056 = vxpose.xlu0.b32.start [1/16] %v650, 128
        %2057 = vxpose.xlu0.b32.cont [2/16] 0.0, 128
        %2058 = vxpose.xlu0.b32.cont [3/16] 0.0, 128
        %2059 = vxpose.xlu0.b32.cont [4/16] 0.0, 128
        %2060 = vxpose.xlu0.b32.cont [5/16] 0.0, 128
        %2061 = vxpose.xlu0.b32.cont [6/16] 0.0, 128
        %2062 = vxpose.xlu0.b32.cont [7/16] 0.0, 128
        %2063 = vxpose.xlu0.b32.cont [8/16] 0.0, 128
        %2064 = vxpose.xlu0.b32.cont [9/16] 0.0, 128
        %2065 = vxpose.xlu0.b32.cont [10/16] 0.0, 128
        %2066 = vxpose.xlu0.b32.cont [11/16] 0.0, 128
        %2067 = vxpose.xlu0.b32.cont [12/16] 0.0, 128
        %2068 = vxpose.xlu0.b32.cont [13/16] 0.0, 128
        %2069 = vxpose.xlu0.b32.cont [14/16] 0.0, 128
        %2070 = vxpose.xlu0.b32.cont [15/16] 0.0, 128
        %2071 = vxpose.xlu0.b32.end [16/16] 0.0, 128
        %v2072 = vpop.trf.xlu0
        %v2073 = vpop.trf.xlu0
        %v2074 = vpop.trf.xlu0
        %v2075 = vpop.trf.xlu0
        %v2076 = vpop.trf.xlu0
        %v2077 = vpop.trf.xlu0
        %v2078 = vpop.trf.xlu0
        %v2079 = vpop.trf.xlu0
        %v2080 = vpop.trf.xlu0
        %v2081 = vpop.trf.xlu0
        %v2082 = vpop.trf.xlu0
        %v2083 = vpop.trf.xlu0
        %v2084 = vpop.trf.xlu0
        %v2085 = vpop.trf.xlu0
        %v2086 = vpop.trf.xlu0
        %v2087 = vpop.trf.xlu0
        %v2089 = vsel %vm740, %v2072, 0
        %2091 = vmatprep.subr.mxu0 0.0
        %2092 = vmatpush1.msra.mxu0 0.0
        %2093 = vmatprep.subr.mxu0 0.0
        %2094 = vmatpush1.msra.mxu0 0.0
        %2095 = vmatprep.subr.mxu0 0.0
        %2096 = vmatpush1.msra.mxu0 0.0
        %2097 = vmatprep.subr.mxu0 0.0
        %2098 = vmatpush1.msra.mxu0 0.0
        %2099 = vmatprep.subr.mxu0 0.0
        %2100 = vmatpush1.msra.mxu0 0.0
        %2101 = vmatprep.subr.mxu0 0.0
        %2102 = vmatpush1.msra.mxu0 0.0
        %2103 = vmatprep.subr.mxu0 0.0
        %2104 = vmatpush1.msra.mxu0 0.0
        %2105 = vmatprep.subr.mxu0 0.0
        %2106 = vmatpush1.msra.mxu0 0.0
        %2107 = vmatprep.subr.mxu0 0.0
        %2108 = vmatpush1.msra.mxu0 0.0
        %2109 = vmatprep.subr.mxu0 0.0
        %2110 = vmatpush1.msra.mxu0 0.0
        %2111 = vmatprep.subr.mxu0 0.0
        %2112 = vmatpush1.msra.mxu0 0.0
        %2113 = vmatprep.subr.mxu0 0.0
        %2114 = vmatpush1.msra.mxu0 0.0
        %2115 = vmatprep.subr.mxu0 0.0
        %2116 = vmatpush1.msra.mxu0 0.0
        %2117 = vmatprep.subr.mxu0 0.0
        %2118 = vmatpush1.msra.mxu0 0.0
        %2119 = vmatprep.subr.mxu0 0.0
        %2120 = vmatpush1.msra.mxu0 0.0
        %2121 = vmatprep.subr.mxu0 0.0
        %2122 = vmatpush1.msra.mxu0 %v477
        %2123 = vmatprep.subr.mxu0 0.0
        %2124 = vmatpush2.msra.mxu0 0.0
        %2125 = vmatprep.subr.mxu0 0.0
        %2126 = vmatpush2.msra.mxu0 0.0
        %2127 = vmatprep.subr.mxu0 0.0
        %2128 = vmatpush2.msra.mxu0 0.0
        %2129 = vmatprep.subr.mxu0 0.0
        %2130 = vmatpush2.msra.mxu0 0.0
        %2131 = vmatprep.subr.mxu0 0.0
        %2132 = vmatpush2.msra.mxu0 0.0
        %2133 = vmatprep.subr.mxu0 0.0
        %2134 = vmatpush2.msra.mxu0 0.0
        %2135 = vmatprep.subr.mxu0 0.0
        %2136 = vmatpush2.msra.mxu0 0.0
        %2137 = vmatprep.subr.mxu0 0.0
        %2138 = vmatpush2.msra.mxu0 0.0
        %2139 = vmatprep.subr.mxu0 0.0
        %2140 = vmatpush2.msra.mxu0 0.0
        %2141 = vmatprep.subr.mxu0 0.0
        %2142 = vmatpush2.msra.mxu0 0.0
        %2143 = vmatprep.subr.mxu0 0.0
        %2144 = vmatpush2.msra.mxu0 0.0
        %2145 = vmatprep.subr.mxu0 0.0
        %2146 = vmatpush2.msra.mxu0 0.0
        %2147 = vmatprep.subr.mxu0 0.0
        %2148 = vmatpush2.msra.mxu0 0.0
        %2149 = vmatprep.subr.mxu0 0.0
        %2150 = vmatpush2.msra.mxu0 0.0
        %2151 = vmatprep.subr.mxu0 0.0
        %2152 = vmatpush2.msra.mxu0 0.0
        %2153 = vmatprep.subr.mxu0 0.0
        %2154 = vmatpush2.msra.mxu0 0.0
        %2155 = vmatprep.mubr.f32.mxu0 0.0
        %2156 = vmatmul.mubr.f32.gmra.mxu0 %v2089
        %v2157 = vpop.f32.mrf.mxu0
        %v2158 = vadd.f32 0.0, %v2157
        %v2159 = vpop.f32.mrf.mxu0
        %2160 = vdwg.mxu0
        %v2161 = vrot.slane %v2158, 4
        %v2162 = vmax.f32 %v2158, %v2161
        %v2163 = vrot.slane %v2162, 2
        %v2164 = vmax.f32 %v2162, %v2163
        %v2165 = vrot.slane %v2164, 1
        %v2166 = vmax.f32 %v2164, %v2165
        %v2167 = vsub.f32 %v2158, %v2166
        %v2168 = vmul.f32 %v2167, 1.442695
        %v2169 = vpow.pop %v2168
        %v2170 = vrot.slane %v2169, 4
        %v2171 = vadd.f32 %v2169, %v2170
        %v2172 = vrot.slane %v2171, 2
        %v2173 = vadd.f32 %v2171, %v2172
        %v2174 = vrot.slane %v2173, 1
        %v2175 = vadd.f32 %v2173, %v2174
        %v2177 = vsel %vm740, %v690, 0
        %2179 = vmatprep.subr.mxu0 0.0
        %2180 = vmatpush1.msra.mxu0 0.0
        %2181 = vmatprep.subr.mxu0 0.0
        %2182 = vmatpush1.msra.mxu0 0.0
        %2183 = vmatprep.subr.mxu0 0.0
        %2184 = vmatpush1.msra.mxu0 0.0
        %2185 = vmatprep.subr.mxu0 0.0
        %2186 = vmatpush1.msra.mxu0 0.0
        %2187 = vmatprep.subr.mxu0 0.0
        %2188 = vmatpush1.msra.mxu0 0.0
        %2189 = vmatprep.subr.mxu0 0.0
        %2190 = vmatpush1.msra.mxu0 0.0
        %2191 = vmatprep.subr.mxu0 0.0
        %2192 = vmatpush1.msra.mxu0 0.0
        %2193 = vmatprep.subr.mxu0 0.0
        %2194 = vmatpush1.msra.mxu0 0.0
        %2195 = vmatprep.subr.mxu0 0.0
        %2196 = vmatpush1.msra.mxu0 0.0
        %2197 = vmatprep.subr.mxu0 0.0
        %2198 = vmatpush1.msra.mxu0 0.0
        %2199 = vmatprep.subr.mxu0 0.0
        %2200 = vmatpush1.msra.mxu0 0.0
        %2201 = vmatprep.subr.mxu0 0.0
        %2202 = vmatpush1.msra.mxu0 0.0
        %2203 = vmatprep.subr.mxu0 0.0
        %2204 = vmatpush1.msra.mxu0 0.0
        %2205 = vmatprep.subr.mxu0 0.0
        %2206 = vmatpush1.msra.mxu0 0.0
        %2207 = vmatprep.subr.mxu0 0.0
        %2208 = vmatpush1.msra.mxu0 0.0
        %2209 = vmatprep.subr.mxu0 0.0
        %2210 = vmatpush1.msra.mxu0 %v2169
        %2211 = vmatprep.subr.mxu0 0.0
        %2212 = vmatpush2.msra.mxu0 0.0
        %2213 = vmatprep.subr.mxu0 0.0
        %2214 = vmatpush2.msra.mxu0 0.0
        %2215 = vmatprep.subr.mxu0 0.0
        %2216 = vmatpush2.msra.mxu0 0.0
        %2217 = vmatprep.subr.mxu0 0.0
        %2218 = vmatpush2.msra.mxu0 0.0
        %2219 = vmatprep.subr.mxu0 0.0
        %2220 = vmatpush2.msra.mxu0 0.0
        %2221 = vmatprep.subr.mxu0 0.0
        %2222 = vmatpush2.msra.mxu0 0.0
        %2223 = vmatprep.subr.mxu0 0.0
        %2224 = vmatpush2.msra.mxu0 0.0
        %2225 = vmatprep.subr.mxu0 0.0
        %2226 = vmatpush2.msra.mxu0 0.0
        %2227 = vmatprep.subr.mxu0 0.0
        %2228 = vmatpush2.msra.mxu0 0.0
        %2229 = vmatprep.subr.mxu0 0.0
        %2230 = vmatpush2.msra.mxu0 0.0
        %2231 = vmatprep.subr.mxu0 0.0
        %2232 = vmatpush2.msra.mxu0 0.0
        %2233 = vmatprep.subr.mxu0 0.0
        %2234 = vmatpush2.msra.mxu0 0.0
        %2235 = vmatprep.subr.mxu0 0.0
        %2236 = vmatpush2.msra.mxu0 0.0
        %2237 = vmatprep.subr.mxu0 0.0
        %2238 = vmatpush2.msra.mxu0 0.0
        %2239 = vmatprep.subr.mxu0 0.0
        %2240 = vmatpush2.msra.mxu0 0.0
        %2241 = vmatprep.subr.mxu0 0.0
        %2242 = vmatpush2.msra.mxu0 0.0
        %2243 = vmatprep.mubr.f32.mxu0 0.0
        %2244 = vmatmul.mubr.f32.gmra.mxu0 %v2177
        %v2245 = vpop.f32.mrf.mxu0
        %v2246 = vadd.f32 0.0, %v2245
        %v2247 = vpop.f32.mrf.mxu0
        %2248 = vdwg.mxu0
        %v2249 = vrcp.pop %v2175
        %v2250 = vmul.f32 %v2246, %v2249
        %s2251 = scalar_lea.vmem %s4, 256
        %v2252 = vld [vmem:[%s2251] sm:$0xff]
        %v2253 = vld [vmem:[%s2251 + $0x8] sm:$0xff]
        %v2254 = vld [vmem:[%s2251 + $0x10] sm:$0xff]
        %v2255 = vld [vmem:[%s2251 + $0x18] sm:$0xff]
        %v2256 = vld [vmem:[%s2251 + $0x20] sm:$0xff]
        %v2257 = vld [vmem:[%s2251 + $0x28] sm:$0xff]
        %v2258 = vld [vmem:[%s2251 + $0x30] sm:$0xff]
        %v2259 = vld [vmem:[%s2251 + $0x38] sm:$0xff]
        %v2261 = vsel %vm740, %v2252, 0
        %v2264 = vsel %vm740, %v2253, 0
        %v2267 = vsel %vm740, %v2254, 0
        %v2270 = vsel %vm740, %v2255, 0
        %v2273 = vsel %vm740, %v2256, 0
        %v2276 = vsel %vm740, %v2257, 0
        %v2279 = vsel %vm740, %v2258, 0
        %v2282 = vsel %vm740, %v2259, 0
        %2284 = vmatprep.subr.mxu0 0.0
        %2285 = vmatpush1.msra.mxu0 0.0
        %2286 = vmatprep.subr.mxu0 0.0
        %2287 = vmatpush1.msra.mxu0 0.0
        %2288 = vmatprep.subr.mxu0 0.0
        %2289 = vmatpush1.msra.mxu0 0.0
        %2290 = vmatprep.subr.mxu0 0.0
        %2291 = vmatpush1.msra.mxu0 0.0
        %2292 = vmatprep.subr.mxu0 0.0
        %2293 = vmatpush1.msra.mxu0 0.0
        %2294 = vmatprep.subr.mxu0 0.0
        %2295 = vmatpush1.msra.mxu0 0.0
        %2296 = vmatprep.subr.mxu0 0.0
        %2297 = vmatpush1.msra.mxu0 0.0
        %2298 = vmatprep.subr.mxu0 0.0
        %2299 = vmatpush1.msra.mxu0 0.0
        %2300 = vmatprep.subr.mxu0 0.0
        %2301 = vmatpush1.msra.mxu0 0.0
        %2302 = vmatprep.subr.mxu0 0.0
        %2303 = vmatpush1.msra.mxu0 0.0
        %2304 = vmatprep.subr.mxu0 0.0
        %2305 = vmatpush1.msra.mxu0 0.0
        %2306 = vmatprep.subr.mxu0 0.0
        %2307 = vmatpush1.msra.mxu0 0.0
        %2308 = vmatprep.subr.mxu0 0.0
        %2309 = vmatpush1.msra.mxu0 0.0
        %2310 = vmatprep.subr.mxu0 0.0
        %2311 = vmatpush1.msra.mxu0 0.0
        %2312 = vmatprep.subr.mxu0 0.0
        %2313 = vmatpush1.msra.mxu0 0.0
        %2314 = vmatprep.subr.mxu0 0.0
        %2315 = vmatpush1.msra.mxu0 %v2250
        %2316 = vmatprep.subr.mxu0 0.0
        %2317 = vmatpush2.msra.mxu0 0.0
        %2318 = vmatprep.subr.mxu0 0.0
        %2319 = vmatpush2.msra.mxu0 0.0
        %2320 = vmatprep.subr.mxu0 0.0
        %2321 = vmatpush2.msra.mxu0 0.0
        %2322 = vmatprep.subr.mxu0 0.0
        %2323 = vmatpush2.msra.mxu0 0.0
        %2324 = vmatprep.subr.mxu0 0.0
        %2325 = vmatpush2.msra.mxu0 0.0
        %2326 = vmatprep.subr.mxu0 0.0
        %2327 = vmatpush2.msra.mxu0 0.0
        %2328 = vmatprep.subr.mxu0 0.0
        %2329 = vmatpush2.msra.mxu0 0.0
        %2330 = vmatprep.subr.mxu0 0.0
        %2331 = vmatpush2.msra.mxu0 0.0
        %2332 = vmatprep.subr.mxu0 0.0
        %2333 = vmatpush2.msra.mxu0 0.0
        %2334 = vmatprep.subr.mxu0 0.0
        %2335 = vmatpush2.msra.mxu0 0.0
        %2336 = vmatprep.subr.mxu0 0.0
        %2337 = vmatpush2.msra.mxu0 0.0
        %2338 = vmatprep.subr.mxu0 0.0
        %2339 = vmatpush2.msra.mxu0 0.0
        %2340 = vmatprep.subr.mxu0 0.0
        %2341 = vmatpush2.msra.mxu0 0.0
        %2342 = vmatprep.subr.mxu0 0.0
        %2343 = vmatpush2.msra.mxu0 0.0
        %2344 = vmatprep.subr.mxu0 0.0
        %2345 = vmatpush2.msra.mxu0 0.0
        %2346 = vmatprep.subr.mxu0 0.0
        %2347 = vmatpush2.msra.mxu0 0.0
        %2348 = vmatprep.mubr.f32.mxu0 0.0
        %2349 = vmatmul.mubr.f32.gmra.mxu0 %v2261
        %v2350 = vpop.f32.mrf.mxu0
        %v2351 = vadd.f32 0.0, %v2350
        %v2352 = vpop.f32.mrf.mxu0
        %2353 = vmatprep.mubr.f32.mxu0 0.0
        %2354 = vmatmul.mubr.f32.gmra.mxu0 %v2264
        %v2355 = vpop.f32.mrf.mxu0
        %v2356 = vadd.f32 0.0, %v2355
        %v2357 = vpop.f32.mrf.mxu0
        %2358 = vmatprep.mubr.f32.mxu0 0.0
        %2359 = vmatmul.mubr.f32.gmra.mxu0 %v2267
        %v2360 = vpop.f32.mrf.mxu0
        %v2361 = vadd.f32 0.0, %v2360
        %v2362 = vpop.f32.mrf.mxu0
        %2363 = vmatprep.mubr.f32.mxu0 0.0
        %2364 = vmatmul.mubr.f32.gmra.mxu0 %v2270
        %v2365 = vpop.f32.mrf.mxu0
        %v2366 = vadd.f32 0.0, %v2365
        %v2367 = vpop.f32.mrf.mxu0
        %2368 = vmatprep.mubr.f32.mxu0 0.0
        %2369 = vmatmul.mubr.f32.gmra.mxu0 %v2273
        %v2370 = vpop.f32.mrf.mxu0
        %v2371 = vadd.f32 0.0, %v2370
        %v2372 = vpop.f32.mrf.mxu0
        %2373 = vmatprep.mubr.f32.mxu0 0.0
        %2374 = vmatmul.mubr.f32.gmra.mxu0 %v2276
        %v2375 = vpop.f32.mrf.mxu0
        %v2376 = vadd.f32 0.0, %v2375
        %v2377 = vpop.f32.mrf.mxu0
        %2378 = vmatprep.mubr.f32.mxu0 0.0
        %2379 = vmatmul.mubr.f32.gmra.mxu0 %v2279
        %v2380 = vpop.f32.mrf.mxu0
        %v2381 = vadd.f32 0.0, %v2380
        %v2382 = vpop.f32.mrf.mxu0
        %2383 = vmatprep.mubr.f32.mxu0 0.0
        %2384 = vmatmul.mubr.f32.gmra.mxu0 %v2282
        %v2385 = vpop.f32.mrf.mxu0
        %v2386 = vadd.f32 0.0, %v2385
        %v2387 = vpop.f32.mrf.mxu0
        %2388 = vdwg.mxu0
        %v2389 = vadd.f32 %v2048, %v2351
        %v2390 = vadd.f32 %v2049, %v2356
        %v2391 = vadd.f32 %v2050, %v2361
        %v2392 = vadd.f32 %v2051, %v2366
        %v2393 = vadd.f32 %v2052, %v2371
        %v2394 = vadd.f32 %v2053, %v2376
        %v2395 = vadd.f32 %v2054, %v2381
        %v2396 = vadd.f32 %v2055, %v2386
        %2397 = vxpose.xlu0.b32.start [1/16] %v655, 128
        %2398 = vxpose.xlu0.b32.cont [2/16] 0.0, 128
        %2399 = vxpose.xlu0.b32.cont [3/16] 0.0, 128
        %2400 = vxpose.xlu0.b32.cont [4/16] 0.0, 128
        %2401 = vxpose.xlu0.b32.cont [5/16] 0.0, 128
        %2402 = vxpose.xlu0.b32.cont [6/16] 0.0, 128
        %2403 = vxpose.xlu0.b32.cont [7/16] 0.0, 128
        %2404 = vxpose.xlu0.b32.cont [8/16] 0.0, 128
        %2405 = vxpose.xlu0.b32.cont [9/16] 0.0, 128
        %2406 = vxpose.xlu0.b32.cont [10/16] 0.0, 128
        %2407 = vxpose.xlu0.b32.cont [11/16] 0.0, 128
        %2408 = vxpose.xlu0.b32.cont [12/16] 0.0, 128
        %2409 = vxpose.xlu0.b32.cont [13/16] 0.0, 128
        %2410 = vxpose.xlu0.b32.cont [14/16] 0.0, 128
        %2411 = vxpose.xlu0.b32.cont [15/16] 0.0, 128
        %2412 = vxpose.xlu0.b32.end [16/16] 0.0, 128
        %v2413 = vpop.trf.xlu0
        %v2414 = vpop.trf.xlu0
        %v2415 = vpop.trf.xlu0
        %v2416 = vpop.trf.xlu0
        %v2417 = vpop.trf.xlu0
        %v2418 = vpop.trf.xlu0
        %v2419 = vpop.trf.xlu0
        %v2420 = vpop.trf.xlu0
        %v2421 = vpop.trf.xlu0
        %v2422 = vpop.trf.xlu0
        %v2423 = vpop.trf.xlu0
        %v2424 = vpop.trf.xlu0
        %v2425 = vpop.trf.xlu0
        %v2426 = vpop.trf.xlu0
        %v2427 = vpop.trf.xlu0
        %v2428 = vpop.trf.xlu0
        %v2430 = vsel %vm740, %v2413, 0
        %2432 = vmatprep.subr.mxu0 0.0
        %2433 = vmatpush1.msra.mxu0 0.0
        %2434 = vmatprep.subr.mxu0 0.0
        %2435 = vmatpush1.msra.mxu0 0.0
        %2436 = vmatprep.subr.mxu0 0.0
        %2437 = vmatpush1.msra.mxu0 0.0
        %2438 = vmatprep.subr.mxu0 0.0
        %2439 = vmatpush1.msra.mxu0 0.0
        %2440 = vmatprep.subr.mxu0 0.0
        %2441 = vmatpush1.msra.mxu0 0.0
        %2442 = vmatprep.subr.mxu0 0.0
        %2443 = vmatpush1.msra.mxu0 0.0
        %2444 = vmatprep.subr.mxu0 0.0
        %2445 = vmatpush1.msra.mxu0 0.0
        %2446 = vmatprep.subr.mxu0 0.0
        %2447 = vmatpush1.msra.mxu0 0.0
        %2448 = vmatprep.subr.mxu0 0.0
        %2449 = vmatpush1.msra.mxu0 0.0
        %2450 = vmatprep.subr.mxu0 0.0
        %2451 = vmatpush1.msra.mxu0 0.0
        %2452 = vmatprep.subr.mxu0 0.0
        %2453 = vmatpush1.msra.mxu0 0.0
        %2454 = vmatprep.subr.mxu0 0.0
        %2455 = vmatpush1.msra.mxu0 0.0
        %2456 = vmatprep.subr.mxu0 0.0
        %2457 = vmatpush1.msra.mxu0 0.0
        %2458 = vmatprep.subr.mxu0 0.0
        %2459 = vmatpush1.msra.mxu0 0.0
        %2460 = vmatprep.subr.mxu0 0.0
        %2461 = vmatpush1.msra.mxu0 0.0
        %2462 = vmatprep.subr.mxu0 0.0
        %2463 = vmatpush1.msra.mxu0 %v482
        %2464 = vmatprep.subr.mxu0 0.0
        %2465 = vmatpush2.msra.mxu0 0.0
        %2466 = vmatprep.subr.mxu0 0.0
        %2467 = vmatpush2.msra.mxu0 0.0
        %2468 = vmatprep.subr.mxu0 0.0
        %2469 = vmatpush2.msra.mxu0 0.0
        %2470 = vmatprep.subr.mxu0 0.0
        %2471 = vmatpush2.msra.mxu0 0.0
        %2472 = vmatprep.subr.mxu0 0.0
        %2473 = vmatpush2.msra.mxu0 0.0
        %2474 = vmatprep.subr.mxu0 0.0
        %2475 = vmatpush2.msra.mxu0 0.0
        %2476 = vmatprep.subr.mxu0 0.0
        %2477 = vmatpush2.msra.mxu0 0.0
        %2478 = vmatprep.subr.mxu0 0.0
        %2479 = vmatpush2.msra.mxu0 0.0
        %2480 = vmatprep.subr.mxu0 0.0
        %2481 = vmatpush2.msra.mxu0 0.0
        %2482 = vmatprep.subr.mxu0 0.0
        %2483 = vmatpush2.msra.mxu0 0.0
        %2484 = vmatprep.subr.mxu0 0.0
        %2485 = vmatpush2.msra.mxu0 0.0
        %2486 = vmatprep.subr.mxu0 0.0
        %2487 = vmatpush2.msra.mxu0 0.0
        %2488 = vmatprep.subr.mxu0 0.0
        %2489 = vmatpush2.msra.mxu0 0.0
        %2490 = vmatprep.subr.mxu0 0.0
        %2491 = vmatpush2.msra.mxu0 0.0
        %2492 = vmatprep.subr.mxu0 0.0
        %2493 = vmatpush2.msra.mxu0 0.0
        %2494 = vmatprep.subr.mxu0 0.0
        %2495 = vmatpush2.msra.mxu0 0.0
        %2496 = vmatprep.mubr.f32.mxu0 0.0
        %2497 = vmatmul.mubr.f32.gmra.mxu0 %v2430
        %v2498 = vpop.f32.mrf.mxu0
        %v2499 = vadd.f32 0.0, %v2498
        %v2500 = vpop.f32.mrf.mxu0
        %2501 = vdwg.mxu0
        %v2502 = vrot.slane %v2499, 4
        %v2503 = vmax.f32 %v2499, %v2502
        %v2504 = vrot.slane %v2503, 2
        %v2505 = vmax.f32 %v2503, %v2504
        %v2506 = vrot.slane %v2505, 1
        %v2507 = vmax.f32 %v2505, %v2506
        %v2508 = vsub.f32 %v2499, %v2507
        %v2509 = vmul.f32 %v2508, 1.442695
        %v2510 = vpow.pop %v2509
        %v2511 = vrot.slane %v2510, 4
        %v2512 = vadd.f32 %v2510, %v2511
        %v2513 = vrot.slane %v2512, 2
        %v2514 = vadd.f32 %v2512, %v2513
        %v2515 = vrot.slane %v2514, 1
        %v2516 = vadd.f32 %v2514, %v2515
        %v2518 = vsel %vm740, %v695, 0
        %2520 = vmatprep.subr.mxu0 0.0
        %2521 = vmatpush1.msra.mxu0 0.0
        %2522 = vmatprep.subr.mxu0 0.0
        %2523 = vmatpush1.msra.mxu0 0.0
        %2524 = vmatprep.subr.mxu0 0.0
        %2525 = vmatpush1.msra.mxu0 0.0
        %2526 = vmatprep.subr.mxu0 0.0
        %2527 = vmatpush1.msra.mxu0 0.0
        %2528 = vmatprep.subr.mxu0 0.0
        %2529 = vmatpush1.msra.mxu0 0.0
        %2530 = vmatprep.subr.mxu0 0.0
        %2531 = vmatpush1.msra.mxu0 0.0
        %2532 = vmatprep.subr.mxu0 0.0
        %2533 = vmatpush1.msra.mxu0 0.0
        %2534 = vmatprep.subr.mxu0 0.0
        %2535 = vmatpush1.msra.mxu0 0.0
        %2536 = vmatprep.subr.mxu0 0.0
        %2537 = vmatpush1.msra.mxu0 0.0
        %2538 = vmatprep.subr.mxu0 0.0
        %2539 = vmatpush1.msra.mxu0 0.0
        %2540 = vmatprep.subr.mxu0 0.0
        %2541 = vmatpush1.msra.mxu0 0.0
        %2542 = vmatprep.subr.mxu0 0.0
        %2543 = vmatpush1.msra.mxu0 0.0
        %2544 = vmatprep.subr.mxu0 0.0
        %2545 = vmatpush1.msra.mxu0 0.0
        %2546 = vmatprep.subr.mxu0 0.0
        %2547 = vmatpush1.msra.mxu0 0.0
        %2548 = vmatprep.subr.mxu0 0.0
        %2549 = vmatpush1.msra.mxu0 0.0
        %2550 = vmatprep.subr.mxu0 0.0
        %2551 = vmatpush1.msra.mxu0 %v2510
        %2552 = vmatprep.subr.mxu0 0.0
        %2553 = vmatpush2.msra.mxu0 0.0
        %2554 = vmatprep.subr.mxu0 0.0
        %2555 = vmatpush2.msra.mxu0 0.0
        %2556 = vmatprep.subr.mxu0 0.0
        %2557 = vmatpush2.msra.mxu0 0.0
        %2558 = vmatprep.subr.mxu0 0.0
        %2559 = vmatpush2.msra.mxu0 0.0
        %2560 = vmatprep.subr.mxu0 0.0
        %2561 = vmatpush2.msra.mxu0 0.0
        %2562 = vmatprep.subr.mxu0 0.0
        %2563 = vmatpush2.msra.mxu0 0.0
        %2564 = vmatprep.subr.mxu0 0.0
        %2565 = vmatpush2.msra.mxu0 0.0
        %2566 = vmatprep.subr.mxu0 0.0
        %2567 = vmatpush2.msra.mxu0 0.0
        %2568 = vmatprep.subr.mxu0 0.0
        %2569 = vmatpush2.msra.mxu0 0.0
        %2570 = vmatprep.subr.mxu0 0.0
        %2571 = vmatpush2.msra.mxu0 0.0
        %2572 = vmatprep.subr.mxu0 0.0
        %2573 = vmatpush2.msra.mxu0 0.0
        %2574 = vmatprep.subr.mxu0 0.0
        %2575 = vmatpush2.msra.mxu0 0.0
        %2576 = vmatprep.subr.mxu0 0.0
        %2577 = vmatpush2.msra.mxu0 0.0
        %2578 = vmatprep.subr.mxu0 0.0
        %2579 = vmatpush2.msra.mxu0 0.0
        %2580 = vmatprep.subr.mxu0 0.0
        %2581 = vmatpush2.msra.mxu0 0.0
        %2582 = vmatprep.subr.mxu0 0.0
        %2583 = vmatpush2.msra.mxu0 0.0
        %2584 = vmatprep.mubr.f32.mxu0 0.0
        %2585 = vmatmul.mubr.f32.gmra.mxu0 %v2518
        %v2586 = vpop.f32.mrf.mxu0
        %v2587 = vadd.f32 0.0, %v2586
        %v2588 = vpop.f32.mrf.mxu0
        %2589 = vdwg.mxu0
        %v2590 = vrcp.pop %v2516
        %v2591 = vmul.f32 %v2587, %v2590
        %s2592 = scalar_lea.vmem %s4, 320
        %v2593 = vld [vmem:[%s2592] sm:$0xff]
        %v2594 = vld [vmem:[%s2592 + $0x8] sm:$0xff]
        %v2595 = vld [vmem:[%s2592 + $0x10] sm:$0xff]
        %v2596 = vld [vmem:[%s2592 + $0x18] sm:$0xff]
        %v2597 = vld [vmem:[%s2592 + $0x20] sm:$0xff]
        %v2598 = vld [vmem:[%s2592 + $0x28] sm:$0xff]
        %v2599 = vld [vmem:[%s2592 + $0x30] sm:$0xff]
        %v2600 = vld [vmem:[%s2592 + $0x38] sm:$0xff]
        %v2602 = vsel %vm740, %v2593, 0
        %v2605 = vsel %vm740, %v2594, 0
        %v2608 = vsel %vm740, %v2595, 0
        %v2611 = vsel %vm740, %v2596, 0
        %v2614 = vsel %vm740, %v2597, 0
        %v2617 = vsel %vm740, %v2598, 0
        %v2620 = vsel %vm740, %v2599, 0
        %v2623 = vsel %vm740, %v2600, 0
        %2625 = vmatprep.subr.mxu0 0.0
        %2626 = vmatpush1.msra.mxu0 0.0
        %2627 = vmatprep.subr.mxu0 0.0
        %2628 = vmatpush1.msra.mxu0 0.0
        %2629 = vmatprep.subr.mxu0 0.0
        %2630 = vmatpush1.msra.mxu0 0.0
        %2631 = vmatprep.subr.mxu0 0.0
        %2632 = vmatpush1.msra.mxu0 0.0
        %2633 = vmatprep.subr.mxu0 0.0
        %2634 = vmatpush1.msra.mxu0 0.0
        %2635 = vmatprep.subr.mxu0 0.0
        %2636 = vmatpush1.msra.mxu0 0.0
        %2637 = vmatprep.subr.mxu0 0.0
        %2638 = vmatpush1.msra.mxu0 0.0
        %2639 = vmatprep.subr.mxu0 0.0
        %2640 = vmatpush1.msra.mxu0 0.0
        %2641 = vmatprep.subr.mxu0 0.0
        %2642 = vmatpush1.msra.mxu0 0.0
        %2643 = vmatprep.subr.mxu0 0.0
        %2644 = vmatpush1.msra.mxu0 0.0
        %2645 = vmatprep.subr.mxu0 0.0
        %2646 = vmatpush1.msra.mxu0 0.0
        %2647 = vmatprep.subr.mxu0 0.0
        %2648 = vmatpush1.msra.mxu0 0.0
        %2649 = vmatprep.subr.mxu0 0.0
        %2650 = vmatpush1.msra.mxu0 0.0
        %2651 = vmatprep.subr.mxu0 0.0
        %2652 = vmatpush1.msra.mxu0 0.0
        %2653 = vmatprep.subr.mxu0 0.0
        %2654 = vmatpush1.msra.mxu0 0.0
        %2655 = vmatprep.subr.mxu0 0.0
        %2656 = vmatpush1.msra.mxu0 %v2591
        %2657 = vmatprep.subr.mxu0 0.0
        %2658 = vmatpush2.msra.mxu0 0.0
        %2659 = vmatprep.subr.mxu0 0.0
        %2660 = vmatpush2.msra.mxu0 0.0
        %2661 = vmatprep.subr.mxu0 0.0
        %2662 = vmatpush2.msra.mxu0 0.0
        %2663 = vmatprep.subr.mxu0 0.0
        %2664 = vmatpush2.msra.mxu0 0.0
        %2665 = vmatprep.subr.mxu0 0.0
        %2666 = vmatpush2.msra.mxu0 0.0
        %2667 = vmatprep.subr.mxu0 0.0
        %2668 = vmatpush2.msra.mxu0 0.0
        %2669 = vmatprep.subr.mxu0 0.0
        %2670 = vmatpush2.msra.mxu0 0.0
        %2671 = vmatprep.subr.mxu0 0.0
        %2672 = vmatpush2.msra.mxu0 0.0
        %2673 = vmatprep.subr.mxu0 0.0
        %2674 = vmatpush2.msra.mxu0 0.0
        %2675 = vmatprep.subr.mxu0 0.0
        %2676 = vmatpush2.msra.mxu0 0.0
        %2677 = vmatprep.subr.mxu0 0.0
        %2678 = vmatpush2.msra.mxu0 0.0
        %2679 = vmatprep.subr.mxu0 0.0
        %2680 = vmatpush2.msra.mxu0 0.0
        %2681 = vmatprep.subr.mxu0 0.0
        %2682 = vmatpush2.msra.mxu0 0.0
        %2683 = vmatprep.subr.mxu0 0.0
        %2684 = vmatpush2.msra.mxu0 0.0
        %2685 = vmatprep.subr.mxu0 0.0
        %2686 = vmatpush2.msra.mxu0 0.0
        %2687 = vmatprep.subr.mxu0 0.0
        %2688 = vmatpush2.msra.mxu0 0.0
        %2689 = vmatprep.mubr.f32.mxu0 0.0
        %2690 = vmatmul.mubr.f32.gmra.mxu0 %v2602
        %v2691 = vpop.f32.mrf.mxu0
        %v2692 = vadd.f32 0.0, %v2691
        %v2693 = vpop.f32.mrf.mxu0
        %2694 = vmatprep.mubr.f32.mxu0 0.0
        %2695 = vmatmul.mubr.f32.gmra.mxu0 %v2605
        %v2696 = vpop.f32.mrf.mxu0
        %v2697 = vadd.f32 0.0, %v2696
        %v2698 = vpop.f32.mrf.mxu0
        %2699 = vmatprep.mubr.f32.mxu0 0.0
        %2700 = vmatmul.mubr.f32.gmra.mxu0 %v2608
        %v2701 = vpop.f32.mrf.mxu0
        %v2702 = vadd.f32 0.0, %v2701
        %v2703 = vpop.f32.mrf.mxu0
        %2704 = vmatprep.mubr.f32.mxu0 0.0
        %2705 = vmatmul.mubr.f32.gmra.mxu0 %v2611
        %v2706 = vpop.f32.mrf.mxu0
        %v2707 = vadd.f32 0.0, %v2706
        %v2708 = vpop.f32.mrf.mxu0
        %2709 = vmatprep.mubr.f32.mxu0 0.0
        %2710 = vmatmul.mubr.f32.gmra.mxu0 %v2614
        %v2711 = vpop.f32.mrf.mxu0
        %v2712 = vadd.f32 0.0, %v2711
        %v2713 = vpop.f32.mrf.mxu0
        %2714 = vmatprep.mubr.f32.mxu0 0.0
        %2715 = vmatmul.mubr.f32.gmra.mxu0 %v2617
        %v2716 = vpop.f32.mrf.mxu0
        %v2717 = vadd.f32 0.0, %v2716
        %v2718 = vpop.f32.mrf.mxu0
        %2719 = vmatprep.mubr.f32.mxu0 0.0
        %2720 = vmatmul.mubr.f32.gmra.mxu0 %v2620
        %v2721 = vpop.f32.mrf.mxu0
        %v2722 = vadd.f32 0.0, %v2721
        %v2723 = vpop.f32.mrf.mxu0
        %2724 = vmatprep.mubr.f32.mxu0 0.0
        %2725 = vmatmul.mubr.f32.gmra.mxu0 %v2623
        %v2726 = vpop.f32.mrf.mxu0
        %v2727 = vadd.f32 0.0, %v2726
        %v2728 = vpop.f32.mrf.mxu0
        %2729 = vdwg.mxu0
        %v2730 = vadd.f32 %v2389, %v2692
        %v2731 = vadd.f32 %v2390, %v2697
        %v2732 = vadd.f32 %v2391, %v2702
        %v2733 = vadd.f32 %v2392, %v2707
        %v2734 = vadd.f32 %v2393, %v2712
        %v2735 = vadd.f32 %v2394, %v2717
        %v2736 = vadd.f32 %v2395, %v2722
        %v2737 = vadd.f32 %v2396, %v2727
        %2738 = vxpose.xlu0.b32.start [1/16] %v660, 128
        %2739 = vxpose.xlu0.b32.cont [2/16] 0.0, 128
        %2740 = vxpose.xlu0.b32.cont [3/16] 0.0, 128
        %2741 = vxpose.xlu0.b32.cont [4/16] 0.0, 128
        %2742 = vxpose.xlu0.b32.cont [5/16] 0.0, 128
        %2743 = vxpose.xlu0.b32.cont [6/16] 0.0, 128
        %2744 = vxpose.xlu0.b32.cont [7/16] 0.0, 128
        %2745 = vxpose.xlu0.b32.cont [8/16] 0.0, 128
        %2746 = vxpose.xlu0.b32.cont [9/16] 0.0, 128
        %2747 = vxpose.xlu0.b32.cont [10/16] 0.0, 128
        %2748 = vxpose.xlu0.b32.cont [11/16] 0.0, 128
        %2749 = vxpose.xlu0.b32.cont [12/16] 0.0, 128
        %2750 = vxpose.xlu0.b32.cont [13/16] 0.0, 128
        %2751 = vxpose.xlu0.b32.cont [14/16] 0.0, 128
        %2752 = vxpose.xlu0.b32.cont [15/16] 0.0, 128
        %2753 = vxpose.xlu0.b32.end [16/16] 0.0, 128
        %v2754 = vpop.trf.xlu0
        %v2755 = vpop.trf.xlu0
        %v2756 = vpop.trf.xlu0
        %v2757 = vpop.trf.xlu0
        %v2758 = vpop.trf.xlu0
        %v2759 = vpop.trf.xlu0
        %v2760 = vpop.trf.xlu0
        %v2761 = vpop.trf.xlu0
        %v2762 = vpop.trf.xlu0
        %v2763 = vpop.trf.xlu0
        %v2764 = vpop.trf.xlu0
        %v2765 = vpop.trf.xlu0
        %v2766 = vpop.trf.xlu0
        %v2767 = vpop.trf.xlu0
        %v2768 = vpop.trf.xlu0
        %v2769 = vpop.trf.xlu0
        %v2771 = vsel %vm740, %v2754, 0
        %2773 = vmatprep.subr.mxu0 0.0
        %2774 = vmatpush1.msra.mxu0 0.0
        %2775 = vmatprep.subr.mxu0 0.0
        %2776 = vmatpush1.msra.mxu0 0.0
        %2777 = vmatprep.subr.mxu0 0.0
        %2778 = vmatpush1.msra.mxu0 0.0
        %2779 = vmatprep.subr.mxu0 0.0
        %2780 = vmatpush1.msra.mxu0 0.0
        %2781 = vmatprep.subr.mxu0 0.0
        %2782 = vmatpush1.msra.mxu0 0.0
        %2783 = vmatprep.subr.mxu0 0.0
        %2784 = vmatpush1.msra.mxu0 0.0
        %2785 = vmatprep.subr.mxu0 0.0
        %2786 = vmatpush1.msra.mxu0 0.0
        %2787 = vmatprep.subr.mxu0 0.0
        %2788 = vmatpush1.msra.mxu0 0.0
        %2789 = vmatprep.subr.mxu0 0.0
        %2790 = vmatpush1.msra.mxu0 0.0
        %2791 = vmatprep.subr.mxu0 0.0
        %2792 = vmatpush1.msra.mxu0 0.0
        %2793 = vmatprep.subr.mxu0 0.0
        %2794 = vmatpush1.msra.mxu0 0.0
        %2795 = vmatprep.subr.mxu0 0.0
        %2796 = vmatpush1.msra.mxu0 0.0
        %2797 = vmatprep.subr.mxu0 0.0
        %2798 = vmatpush1.msra.mxu0 0.0
        %2799 = vmatprep.subr.mxu0 0.0
        %2800 = vmatpush1.msra.mxu0 0.0
        %2801 = vmatprep.subr.mxu0 0.0
        %2802 = vmatpush1.msra.mxu0 0.0
        %2803 = vmatprep.subr.mxu0 0.0
        %2804 = vmatpush1.msra.mxu0 %v487
        %2805 = vmatprep.subr.mxu0 0.0
        %2806 = vmatpush2.msra.mxu0 0.0
        %2807 = vmatprep.subr.mxu0 0.0
        %2808 = vmatpush2.msra.mxu0 0.0
        %2809 = vmatprep.subr.mxu0 0.0
        %2810 = vmatpush2.msra.mxu0 0.0
        %2811 = vmatprep.subr.mxu0 0.0
        %2812 = vmatpush2.msra.mxu0 0.0
        %2813 = vmatprep.subr.mxu0 0.0
        %2814 = vmatpush2.msra.mxu0 0.0
        %2815 = vmatprep.subr.mxu0 0.0
        %2816 = vmatpush2.msra.mxu0 0.0
        %2817 = vmatprep.subr.mxu0 0.0
        %2818 = vmatpush2.msra.mxu0 0.0
        %2819 = vmatprep.subr.mxu0 0.0
        %2820 = vmatpush2.msra.mxu0 0.0
        %2821 = vmatprep.subr.mxu0 0.0
        %2822 = vmatpush2.msra.mxu0 0.0
        %2823 = vmatprep.subr.mxu0 0.0
        %2824 = vmatpush2.msra.mxu0 0.0
        %2825 = vmatprep.subr.mxu0 0.0
        %2826 = vmatpush2.msra.mxu0 0.0
        %2827 = vmatprep.subr.mxu0 0.0
        %2828 = vmatpush2.msra.mxu0 0.0
        %2829 = vmatprep.subr.mxu0 0.0
        %2830 = vmatpush2.msra.mxu0 0.0
        %2831 = vmatprep.subr.mxu0 0.0
        %2832 = vmatpush2.msra.mxu0 0.0
        %2833 = vmatprep.subr.mxu0 0.0
        %2834 = vmatpush2.msra.mxu0 0.0
        %2835 = vmatprep.subr.mxu0 0.0
        %2836 = vmatpush2.msra.mxu0 0.0
        %2837 = vmatprep.mubr.f32.mxu0 0.0
        %2838 = vmatmul.mubr.f32.gmra.mxu0 %v2771
        %v2839 = vpop.f32.mrf.mxu0
        %v2840 = vadd.f32 0.0, %v2839
        %v2841 = vpop.f32.mrf.mxu0
        %2842 = vdwg.mxu0
        %v2843 = vrot.slane %v2840, 4
        %v2844 = vmax.f32 %v2840, %v2843
        %v2845 = vrot.slane %v2844, 2
        %v2846 = vmax.f32 %v2844, %v2845
        %v2847 = vrot.slane %v2846, 1
        %v2848 = vmax.f32 %v2846, %v2847
        %v2849 = vsub.f32 %v2840, %v2848
        %v2850 = vmul.f32 %v2849, 1.442695
        %v2851 = vpow.pop %v2850
        %v2852 = vrot.slane %v2851, 4
        %v2853 = vadd.f32 %v2851, %v2852
        %v2854 = vrot.slane %v2853, 2
        %v2855 = vadd.f32 %v2853, %v2854
        %v2856 = vrot.slane %v2855, 1
        %v2857 = vadd.f32 %v2855, %v2856
        %v2859 = vsel %vm740, %v700, 0
        %2861 = vmatprep.subr.mxu0 0.0
        %2862 = vmatpush1.msra.mxu0 0.0
        %2863 = vmatprep.subr.mxu0 0.0
        %2864 = vmatpush1.msra.mxu0 0.0
        %2865 = vmatprep.subr.mxu0 0.0
        %2866 = vmatpush1.msra.mxu0 0.0
        %2867 = vmatprep.subr.mxu0 0.0
        %2868 = vmatpush1.msra.mxu0 0.0
        %2869 = vmatprep.subr.mxu0 0.0
        %2870 = vmatpush1.msra.mxu0 0.0
        %2871 = vmatprep.subr.mxu0 0.0
        %2872 = vmatpush1.msra.mxu0 0.0
        %2873 = vmatprep.subr.mxu0 0.0
        %2874 = vmatpush1.msra.mxu0 0.0
        %2875 = vmatprep.subr.mxu0 0.0
        %2876 = vmatpush1.msra.mxu0 0.0
        %2877 = vmatprep.subr.mxu0 0.0
        %2878 = vmatpush1.msra.mxu0 0.0
        %2879 = vmatprep.subr.mxu0 0.0
        %2880 = vmatpush1.msra.mxu0 0.0
        %2881 = vmatprep.subr.mxu0 0.0
        %2882 = vmatpush1.msra.mxu0 0.0
        %2883 = vmatprep.subr.mxu0 0.0
        %2884 = vmatpush1.msra.mxu0 0.0
        %2885 = vmatprep.subr.mxu0 0.0
        %2886 = vmatpush1.msra.mxu0 0.0
        %2887 = vmatprep.subr.mxu0 0.0
        %2888 = vmatpush1.msra.mxu0 0.0
        %2889 = vmatprep.subr.mxu0 0.0
        %2890 = vmatpush1.msra.mxu0 0.0
        %2891 = vmatprep.subr.mxu0 0.0
        %2892 = vmatpush1.msra.mxu0 %v2851
        %2893 = vmatprep.subr.mxu0 0.0
        %2894 = vmatpush2.msra.mxu0 0.0
        %2895 = vmatprep.subr.mxu0 0.0
        %2896 = vmatpush2.msra.mxu0 0.0
        %2897 = vmatprep.subr.mxu0 0.0
        %2898 = vmatpush2.msra.mxu0 0.0
        %2899 = vmatprep.subr.mxu0 0.0
        %2900 = vmatpush2.msra.mxu0 0.0
        %2901 = vmatprep.subr.mxu0 0.0
        %2902 = vmatpush2.msra.mxu0 0.0
        %2903 = vmatprep.subr.mxu0 0.0
        %2904 = vmatpush2.msra.mxu0 0.0
        %2905 = vmatprep.subr.mxu0 0.0
        %2906 = vmatpush2.msra.mxu0 0.0
        %2907 = vmatprep.subr.mxu0 0.0
        %2908 = vmatpush2.msra.mxu0 0.0
        %2909 = vmatprep.subr.mxu0 0.0
        %2910 = vmatpush2.msra.mxu0 0.0
        %2911 = vmatprep.subr.mxu0 0.0
        %2912 = vmatpush2.msra.mxu0 0.0
        %2913 = vmatprep.subr.mxu0 0.0
        %2914 = vmatpush2.msra.mxu0 0.0
        %2915 = vmatprep.subr.mxu0 0.0
        %2916 = vmatpush2.msra.mxu0 0.0
        %2917 = vmatprep.subr.mxu0 0.0
        %2918 = vmatpush2.msra.mxu0 0.0
        %2919 = vmatprep.subr.mxu0 0.0
        %2920 = vmatpush2.msra.mxu0 0.0
        %2921 = vmatprep.subr.mxu0 0.0
        %2922 = vmatpush2.msra.mxu0 0.0
        %2923 = vmatprep.subr.mxu0 0.0
        %2924 = vmatpush2.msra.mxu0 0.0
        %2925 = vmatprep.mubr.f32.mxu0 0.0
        %2926 = vmatmul.mubr.f32.gmra.mxu0 %v2859
        %v2927 = vpop.f32.mrf.mxu0
        %v2928 = vadd.f32 0.0, %v2927
        %v2929 = vpop.f32.mrf.mxu0
        %2930 = vdwg.mxu0
        %v2931 = vrcp.pop %v2857
        %v2932 = vmul.f32 %v2928, %v2931
        %s2933 = scalar_lea.vmem %s4, 384
        %v2934 = vld [vmem:[%s2933] sm:$0xff]
        %v2935 = vld [vmem:[%s2933 + $0x8] sm:$0xff]
        %v2936 = vld [vmem:[%s2933 + $0x10] sm:$0xff]
        %v2937 = vld [vmem:[%s2933 + $0x18] sm:$0xff]
        %v2938 = vld [vmem:[%s2933 + $0x20] sm:$0xff]
        %v2939 = vld [vmem:[%s2933 + $0x28] sm:$0xff]
        %v2940 = vld [vmem:[%s2933 + $0x30] sm:$0xff]
        %v2941 = vld [vmem:[%s2933 + $0x38] sm:$0xff]
        %v2943 = vsel %vm740, %v2934, 0
        %v2946 = vsel %vm740, %v2935, 0
        %v2949 = vsel %vm740, %v2936, 0
        %v2952 = vsel %vm740, %v2937, 0
        %v2955 = vsel %vm740, %v2938, 0
        %v2958 = vsel %vm740, %v2939, 0
        %v2961 = vsel %vm740, %v2940, 0
        %v2964 = vsel %vm740, %v2941, 0
        %2966 = vmatprep.subr.mxu0 0.0
        %2967 = vmatpush1.msra.mxu0 0.0
        %2968 = vmatprep.subr.mxu0 0.0
        %2969 = vmatpush1.msra.mxu0 0.0
        %2970 = vmatprep.subr.mxu0 0.0
        %2971 = vmatpush1.msra.mxu0 0.0
        %2972 = vmatprep.subr.mxu0 0.0
        %2973 = vmatpush1.msra.mxu0 0.0
        %2974 = vmatprep.subr.mxu0 0.0
        %2975 = vmatpush1.msra.mxu0 0.0
        %2976 = vmatprep.subr.mxu0 0.0
        %2977 = vmatpush1.msra.mxu0 0.0
        %2978 = vmatprep.subr.mxu0 0.0
        %2979 = vmatpush1.msra.mxu0 0.0
        %2980 = vmatprep.subr.mxu0 0.0
        %2981 = vmatpush1.msra.mxu0 0.0
        %2982 = vmatprep.subr.mxu0 0.0
        %2983 = vmatpush1.msra.mxu0 0.0
        %2984 = vmatprep.subr.mxu0 0.0
        %2985 = vmatpush1.msra.mxu0 0.0
        %2986 = vmatprep.subr.mxu0 0.0
        %2987 = vmatpush1.msra.mxu0 0.0
        %2988 = vmatprep.subr.mxu0 0.0
        %2989 = vmatpush1.msra.mxu0 0.0
        %2990 = vmatprep.subr.mxu0 0.0
        %2991 = vmatpush1.msra.mxu0 0.0
        %2992 = vmatprep.subr.mxu0 0.0
        %2993 = vmatpush1.msra.mxu0 0.0
        %2994 = vmatprep.subr.mxu0 0.0
        %2995 = vmatpush1.msra.mxu0 0.0
        %2996 = vmatprep.subr.mxu0 0.0
        %2997 = vmatpush1.msra.mxu0 %v2932
        %2998 = vmatprep.subr.mxu0 0.0
        %2999 = vmatpush2.msra.mxu0 0.0
        %3000 = vmatprep.subr.mxu0 0.0
        %3001 = vmatpush2.msra.mxu0 0.0
        %3002 = vmatprep.subr.mxu0 0.0
        %3003 = vmatpush2.msra.mxu0 0.0
        %3004 = vmatprep.subr.mxu0 0.0
        %3005 = vmatpush2.msra.mxu0 0.0
        %3006 = vmatprep.subr.mxu0 0.0
        %3007 = vmatpush2.msra.mxu0 0.0
        %3008 = vmatprep.subr.mxu0 0.0
        %3009 = vmatpush2.msra.mxu0 0.0
        %3010 = vmatprep.subr.mxu0 0.0
        %3011 = vmatpush2.msra.mxu0 0.0
        %3012 = vmatprep.subr.mxu0 0.0
        %3013 = vmatpush2.msra.mxu0 0.0
        %3014 = vmatprep.subr.mxu0 0.0
        %3015 = vmatpush2.msra.mxu0 0.0
        %3016 = vmatprep.subr.mxu0 0.0
        %3017 = vmatpush2.msra.mxu0 0.0
        %3018 = vmatprep.subr.mxu0 0.0
        %3019 = vmatpush2.msra.mxu0 0.0
        %3020 = vmatprep.subr.mxu0 0.0
        %3021 = vmatpush2.msra.mxu0 0.0
        %3022 = vmatprep.subr.mxu0 0.0
        %3023 = vmatpush2.msra.mxu0 0.0
        %3024 = vmatprep.subr.mxu0 0.0
        %3025 = vmatpush2.msra.mxu0 0.0
        %3026 = vmatprep.subr.mxu0 0.0
        %3027 = vmatpush2.msra.mxu0 0.0
        %3028 = vmatprep.subr.mxu0 0.0
        %3029 = vmatpush2.msra.mxu0 0.0
        %3030 = vmatprep.mubr.f32.mxu0 0.0
        %3031 = vmatmul.mubr.f32.gmra.mxu0 %v2943
        %v3032 = vpop.f32.mrf.mxu0
        %v3033 = vadd.f32 0.0, %v3032
        %v3034 = vpop.f32.mrf.mxu0
        %3035 = vmatprep.mubr.f32.mxu0 0.0
        %3036 = vmatmul.mubr.f32.gmra.mxu0 %v2946
        %v3037 = vpop.f32.mrf.mxu0
        %v3038 = vadd.f32 0.0, %v3037
        %v3039 = vpop.f32.mrf.mxu0
        %3040 = vmatprep.mubr.f32.mxu0 0.0
        %3041 = vmatmul.mubr.f32.gmra.mxu0 %v2949
        %v3042 = vpop.f32.mrf.mxu0
        %v3043 = vadd.f32 0.0, %v3042
        %v3044 = vpop.f32.mrf.mxu0
        %3045 = vmatprep.mubr.f32.mxu0 0.0
        %3046 = vmatmul.mubr.f32.gmra.mxu0 %v2952
        %v3047 = vpop.f32.mrf.mxu0
        %v3048 = vadd.f32 0.0, %v3047
        %v3049 = vpop.f32.mrf.mxu0
        %3050 = vmatprep.mubr.f32.mxu0 0.0
        %3051 = vmatmul.mubr.f32.gmra.mxu0 %v2955
        %v3052 = vpop.f32.mrf.mxu0
        %v3053 = vadd.f32 0.0, %v3052
        %v3054 = vpop.f32.mrf.mxu0
        %3055 = vmatprep.mubr.f32.mxu0 0.0
        %3056 = vmatmul.mubr.f32.gmra.mxu0 %v2958
        %v3057 = vpop.f32.mrf.mxu0
        %v3058 = vadd.f32 0.0, %v3057
        %v3059 = vpop.f32.mrf.mxu0
        %3060 = vmatprep.mubr.f32.mxu0 0.0
        %3061 = vmatmul.mubr.f32.gmra.mxu0 %v2961
        %v3062 = vpop.f32.mrf.mxu0
        %v3063 = vadd.f32 0.0, %v3062
        %v3064 = vpop.f32.mrf.mxu0
        %3065 = vmatprep.mubr.f32.mxu0 0.0
        %3066 = vmatmul.mubr.f32.gmra.mxu0 %v2964
        %v3067 = vpop.f32.mrf.mxu0
        %v3068 = vadd.f32 0.0, %v3067
        %v3069 = vpop.f32.mrf.mxu0
        %3070 = vdwg.mxu0
        %v3071 = vadd.f32 %v2730, %v3033
        %v3072 = vadd.f32 %v2731, %v3038
        %v3073 = vadd.f32 %v2732, %v3043
        %v3074 = vadd.f32 %v2733, %v3048
        %v3075 = vadd.f32 %v2734, %v3053
        %v3076 = vadd.f32 %v2735, %v3058
        %v3077 = vadd.f32 %v2736, %v3063
        %v3078 = vadd.f32 %v2737, %v3068
        %3079 = vxpose.xlu0.b32.start [1/16] %v665, 128
        %3080 = vxpose.xlu0.b32.cont [2/16] 0.0, 128
        %3081 = vxpose.xlu0.b32.cont [3/16] 0.0, 128
        %3082 = vxpose.xlu0.b32.cont [4/16] 0.0, 128
        %3083 = vxpose.xlu0.b32.cont [5/16] 0.0, 128
        %3084 = vxpose.xlu0.b32.cont [6/16] 0.0, 128
        %3085 = vxpose.xlu0.b32.cont [7/16] 0.0, 128
        %3086 = vxpose.xlu0.b32.cont [8/16] 0.0, 128
        %3087 = vxpose.xlu0.b32.cont [9/16] 0.0, 128
        %3088 = vxpose.xlu0.b32.cont [10/16] 0.0, 128
        %3089 = vxpose.xlu0.b32.cont [11/16] 0.0, 128
        %3090 = vxpose.xlu0.b32.cont [12/16] 0.0, 128
        %3091 = vxpose.xlu0.b32.cont [13/16] 0.0, 128
        %3092 = vxpose.xlu0.b32.cont [14/16] 0.0, 128
        %3093 = vxpose.xlu0.b32.cont [15/16] 0.0, 128
        %3094 = vxpose.xlu0.b32.end [16/16] 0.0, 128
        %v3095 = vpop.trf.xlu0
        %v3096 = vpop.trf.xlu0
        %v3097 = vpop.trf.xlu0
        %v3098 = vpop.trf.xlu0
        %v3099 = vpop.trf.xlu0
        %v3100 = vpop.trf.xlu0
        %v3101 = vpop.trf.xlu0
        %v3102 = vpop.trf.xlu0
        %v3103 = vpop.trf.xlu0
        %v3104 = vpop.trf.xlu0
        %v3105 = vpop.trf.xlu0
        %v3106 = vpop.trf.xlu0
        %v3107 = vpop.trf.xlu0
        %v3108 = vpop.trf.xlu0
        %v3109 = vpop.trf.xlu0
        %v3110 = vpop.trf.xlu0
        %v3112 = vsel %vm740, %v3095, 0
        %3114 = vmatprep.subr.mxu0 0.0
        %3115 = vmatpush1.msra.mxu0 0.0
        %3116 = vmatprep.subr.mxu0 0.0
        %3117 = vmatpush1.msra.mxu0 0.0
        %3118 = vmatprep.subr.mxu0 0.0
        %3119 = vmatpush1.msra.mxu0 0.0
        %3120 = vmatprep.subr.mxu0 0.0
        %3121 = vmatpush1.msra.mxu0 0.0
        %3122 = vmatprep.subr.mxu0 0.0
        %3123 = vmatpush1.msra.mxu0 0.0
        %3124 = vmatprep.subr.mxu0 0.0
        %3125 = vmatpush1.msra.mxu0 0.0
        %3126 = vmatprep.subr.mxu0 0.0
        %3127 = vmatpush1.msra.mxu0 0.0
        %3128 = vmatprep.subr.mxu0 0.0
        %3129 = vmatpush1.msra.mxu0 0.0
        %3130 = vmatprep.subr.mxu0 0.0
        %3131 = vmatpush1.msra.mxu0 0.0
        %3132 = vmatprep.subr.mxu0 0.0
        %3133 = vmatpush1.msra.mxu0 0.0
        %3134 = vmatprep.subr.mxu0 0.0
        %3135 = vmatpush1.msra.mxu0 0.0
        %3136 = vmatprep.subr.mxu0 0.0
        %3137 = vmatpush1.msra.mxu0 0.0
        %3138 = vmatprep.subr.mxu0 0.0
        %3139 = vmatpush1.msra.mxu0 0.0
        %3140 = vmatprep.subr.mxu0 0.0
        %3141 = vmatpush1.msra.mxu0 0.0
        %3142 = vmatprep.subr.mxu0 0.0
        %3143 = vmatpush1.msra.mxu0 0.0
        %3144 = vmatprep.subr.mxu0 0.0
        %3145 = vmatpush1.msra.mxu0 %v492
        %3146 = vmatprep.subr.mxu0 0.0
        %3147 = vmatpush2.msra.mxu0 0.0
        %3148 = vmatprep.subr.mxu0 0.0
        %3149 = vmatpush2.msra.mxu0 0.0
        %3150 = vmatprep.subr.mxu0 0.0
        %3151 = vmatpush2.msra.mxu0 0.0
        %3152 = vmatprep.subr.mxu0 0.0
        %3153 = vmatpush2.msra.mxu0 0.0
        %3154 = vmatprep.subr.mxu0 0.0
        %3155 = vmatpush2.msra.mxu0 0.0
        %3156 = vmatprep.subr.mxu0 0.0
        %3157 = vmatpush2.msra.mxu0 0.0
        %3158 = vmatprep.subr.mxu0 0.0
        %3159 = vmatpush2.msra.mxu0 0.0
        %3160 = vmatprep.subr.mxu0 0.0
        %3161 = vmatpush2.msra.mxu0 0.0
        %3162 = vmatprep.subr.mxu0 0.0
        %3163 = vmatpush2.msra.mxu0 0.0
        %3164 = vmatprep.subr.mxu0 0.0
        %3165 = vmatpush2.msra.mxu0 0.0
        %3166 = vmatprep.subr.mxu0 0.0
        %3167 = vmatpush2.msra.mxu0 0.0
        %3168 = vmatprep.subr.mxu0 0.0
        %3169 = vmatpush2.msra.mxu0 0.0
        %3170 = vmatprep.subr.mxu0 0.0
        %3171 = vmatpush2.msra.mxu0 0.0
        %3172 = vmatprep.subr.mxu0 0.0
        %3173 = vmatpush2.msra.mxu0 0.0
        %3174 = vmatprep.subr.mxu0 0.0
        %3175 = vmatpush2.msra.mxu0 0.0
        %3176 = vmatprep.subr.mxu0 0.0
        %3177 = vmatpush2.msra.mxu0 0.0
        %3178 = vmatprep.mubr.f32.mxu0 0.0
        %3179 = vmatmul.mubr.f32.gmra.mxu0 %v3112
        %v3180 = vpop.f32.mrf.mxu0
        %v3181 = vadd.f32 0.0, %v3180
        %v3182 = vpop.f32.mrf.mxu0
        %3183 = vdwg.mxu0
        %v3184 = vrot.slane %v3181, 4
        %v3185 = vmax.f32 %v3181, %v3184
        %v3186 = vrot.slane %v3185, 2
        %v3187 = vmax.f32 %v3185, %v3186
        %v3188 = vrot.slane %v3187, 1
        %v3189 = vmax.f32 %v3187, %v3188
        %v3190 = vsub.f32 %v3181, %v3189
        %v3191 = vmul.f32 %v3190, 1.442695
        %v3192 = vpow.pop %v3191
        %v3193 = vrot.slane %v3192, 4
        %v3194 = vadd.f32 %v3192, %v3193
        %v3195 = vrot.slane %v3194, 2
        %v3196 = vadd.f32 %v3194, %v3195
        %v3197 = vrot.slane %v3196, 1
        %v3198 = vadd.f32 %v3196, %v3197
        %v3200 = vsel %vm740, %v705, 0
        %3202 = vmatprep.subr.mxu0 0.0
        %3203 = vmatpush1.msra.mxu0 0.0
        %3204 = vmatprep.subr.mxu0 0.0
        %3205 = vmatpush1.msra.mxu0 0.0
        %3206 = vmatprep.subr.mxu0 0.0
        %3207 = vmatpush1.msra.mxu0 0.0
        %3208 = vmatprep.subr.mxu0 0.0
        %3209 = vmatpush1.msra.mxu0 0.0
        %3210 = vmatprep.subr.mxu0 0.0
        %3211 = vmatpush1.msra.mxu0 0.0
        %3212 = vmatprep.subr.mxu0 0.0
        %3213 = vmatpush1.msra.mxu0 0.0
        %3214 = vmatprep.subr.mxu0 0.0
        %3215 = vmatpush1.msra.mxu0 0.0
        %3216 = vmatprep.subr.mxu0 0.0
        %3217 = vmatpush1.msra.mxu0 0.0
        %3218 = vmatprep.subr.mxu0 0.0
        %3219 = vmatpush1.msra.mxu0 0.0
        %3220 = vmatprep.subr.mxu0 0.0
        %3221 = vmatpush1.msra.mxu0 0.0
        %3222 = vmatprep.subr.mxu0 0.0
        %3223 = vmatpush1.msra.mxu0 0.0
        %3224 = vmatprep.subr.mxu0 0.0
        %3225 = vmatpush1.msra.mxu0 0.0
        %3226 = vmatprep.subr.mxu0 0.0
        %3227 = vmatpush1.msra.mxu0 0.0
        %3228 = vmatprep.subr.mxu0 0.0
        %3229 = vmatpush1.msra.mxu0 0.0
        %3230 = vmatprep.subr.mxu0 0.0
        %3231 = vmatpush1.msra.mxu0 0.0
        %3232 = vmatprep.subr.mxu0 0.0
        %3233 = vmatpush1.msra.mxu0 %v3192
        %3234 = vmatprep.subr.mxu0 0.0
        %3235 = vmatpush2.msra.mxu0 0.0
        %3236 = vmatprep.subr.mxu0 0.0
        %3237 = vmatpush2.msra.mxu0 0.0
        %3238 = vmatprep.subr.mxu0 0.0
        %3239 = vmatpush2.msra.mxu0 0.0
        %3240 = vmatprep.subr.mxu0 0.0
        %3241 = vmatpush2.msra.mxu0 0.0
        %3242 = vmatprep.subr.mxu0 0.0
        %3243 = vmatpush2.msra.mxu0 0.0
        %3244 = vmatprep.subr.mxu0 0.0
        %3245 = vmatpush2.msra.mxu0 0.0
        %3246 = vmatprep.subr.mxu0 0.0
        %3247 = vmatpush2.msra.mxu0 0.0
        %3248 = vmatprep.subr.mxu0 0.0
        %3249 = vmatpush2.msra.mxu0 0.0
        %3250 = vmatprep.subr.mxu0 0.0
        %3251 = vmatpush2.msra.mxu0 0.0
        %3252 = vmatprep.subr.mxu0 0.0
        %3253 = vmatpush2.msra.mxu0 0.0
        %3254 = vmatprep.subr.mxu0 0.0
        %3255 = vmatpush2.msra.mxu0 0.0
        %3256 = vmatprep.subr.mxu0 0.0
        %3257 = vmatpush2.msra.mxu0 0.0
        %3258 = vmatprep.subr.mxu0 0.0
        %3259 = vmatpush2.msra.mxu0 0.0
        %3260 = vmatprep.subr.mxu0 0.0
        %3261 = vmatpush2.msra.mxu0 0.0
        %3262 = vmatprep.subr.mxu0 0.0
        %3263 = vmatpush2.msra.mxu0 0.0
        %3264 = vmatprep.subr.mxu0 0.0
        %3265 = vmatpush2.msra.mxu0 0.0
        %3266 = vmatprep.mubr.f32.mxu0 0.0
        %3267 = vmatmul.mubr.f32.gmra.mxu0 %v3200
        %v3268 = vpop.f32.mrf.mxu0
        %v3269 = vadd.f32 0.0, %v3268
        %v3270 = vpop.f32.mrf.mxu0
        %3271 = vdwg.mxu0
        %v3272 = vrcp.pop %v3198
        %v3273 = vmul.f32 %v3269, %v3272
        %s3274 = scalar_lea.vmem %s4, 448
        %v3275 = vld [vmem:[%s3274] sm:$0xff]
        %v3276 = vld [vmem:[%s3274 + $0x8] sm:$0xff]
        %v3277 = vld [vmem:[%s3274 + $0x10] sm:$0xff]
        %v3278 = vld [vmem:[%s3274 + $0x18] sm:$0xff]
        %v3279 = vld [vmem:[%s3274 + $0x20] sm:$0xff]
        %v3280 = vld [vmem:[%s3274 + $0x28] sm:$0xff]
        %v3281 = vld [vmem:[%s3274 + $0x30] sm:$0xff]
        %v3282 = vld [vmem:[%s3274 + $0x38] sm:$0xff]
        %v3284 = vsel %vm740, %v3275, 0
        %v3287 = vsel %vm740, %v3276, 0
        %v3290 = vsel %vm740, %v3277, 0
        %v3293 = vsel %vm740, %v3278, 0
        %v3296 = vsel %vm740, %v3279, 0
        %v3299 = vsel %vm740, %v3280, 0
        %v3302 = vsel %vm740, %v3281, 0
        %v3305 = vsel %vm740, %v3282, 0
        %3307 = vmatprep.subr.mxu0 0.0
        %3308 = vmatpush1.msra.mxu0 0.0
        %3309 = vmatprep.subr.mxu0 0.0
        %3310 = vmatpush1.msra.mxu0 0.0
        %3311 = vmatprep.subr.mxu0 0.0
        %3312 = vmatpush1.msra.mxu0 0.0
        %3313 = vmatprep.subr.mxu0 0.0
        %3314 = vmatpush1.msra.mxu0 0.0
        %3315 = vmatprep.subr.mxu0 0.0
        %3316 = vmatpush1.msra.mxu0 0.0
        %3317 = vmatprep.subr.mxu0 0.0
        %3318 = vmatpush1.msra.mxu0 0.0
        %3319 = vmatprep.subr.mxu0 0.0
        %3320 = vmatpush1.msra.mxu0 0.0
        %3321 = vmatprep.subr.mxu0 0.0
        %3322 = vmatpush1.msra.mxu0 0.0
        %3323 = vmatprep.subr.mxu0 0.0
        %3324 = vmatpush1.msra.mxu0 0.0
        %3325 = vmatprep.subr.mxu0 0.0
        %3326 = vmatpush1.msra.mxu0 0.0
        %3327 = vmatprep.subr.mxu0 0.0
        %3328 = vmatpush1.msra.mxu0 0.0
        %3329 = vmatprep.subr.mxu0 0.0
        %3330 = vmatpush1.msra.mxu0 0.0
        %3331 = vmatprep.subr.mxu0 0.0
        %3332 = vmatpush1.msra.mxu0 0.0
        %3333 = vmatprep.subr.mxu0 0.0
        %3334 = vmatpush1.msra.mxu0 0.0
        %3335 = vmatprep.subr.mxu0 0.0
        %3336 = vmatpush1.msra.mxu0 0.0
        %3337 = vmatprep.subr.mxu0 0.0
        %3338 = vmatpush1.msra.mxu0 %v3273
        %3339 = vmatprep.subr.mxu0 0.0
        %3340 = vmatpush2.msra.mxu0 0.0
        %3341 = vmatprep.subr.mxu0 0.0
        %3342 = vmatpush2.msra.mxu0 0.0
        %3343 = vmatprep.subr.mxu0 0.0
        %3344 = vmatpush2.msra.mxu0 0.0
        %3345 = vmatprep.subr.mxu0 0.0
        %3346 = vmatpush2.msra.mxu0 0.0
        %3347 = vmatprep.subr.mxu0 0.0
        %3348 = vmatpush2.msra.mxu0 0.0
        %3349 = vmatprep.subr.mxu0 0.0
        %3350 = vmatpush2.msra.mxu0 0.0
        %3351 = vmatprep.subr.mxu0 0.0
        %3352 = vmatpush2.msra.mxu0 0.0
        %3353 = vmatprep.subr.mxu0 0.0
        %3354 = vmatpush2.msra.mxu0 0.0
        %3355 = vmatprep.subr.mxu0 0.0
        %3356 = vmatpush2.msra.mxu0 0.0
        %3357 = vmatprep.subr.mxu0 0.0
        %3358 = vmatpush2.msra.mxu0 0.0
        %3359 = vmatprep.subr.mxu0 0.0
        %3360 = vmatpush2.msra.mxu0 0.0
        %3361 = vmatprep.subr.mxu0 0.0
        %3362 = vmatpush2.msra.mxu0 0.0
        %3363 = vmatprep.subr.mxu0 0.0
        %3364 = vmatpush2.msra.mxu0 0.0
        %3365 = vmatprep.subr.mxu0 0.0
        %3366 = vmatpush2.msra.mxu0 0.0
        %3367 = vmatprep.subr.mxu0 0.0
        %3368 = vmatpush2.msra.mxu0 0.0
        %3369 = vmatprep.subr.mxu0 0.0
        %3370 = vmatpush2.msra.mxu0 0.0
        %3371 = vmatprep.mubr.f32.mxu0 0.0
        %3372 = vmatmul.mubr.f32.gmra.mxu0 %v3284
        %v3373 = vpop.f32.mrf.mxu0
        %v3374 = vadd.f32 0.0, %v3373
        %v3375 = vpop.f32.mrf.mxu0
        %3376 = vmatprep.mubr.f32.mxu0 0.0
        %3377 = vmatmul.mubr.f32.gmra.mxu0 %v3287
        %v3378 = vpop.f32.mrf.mxu0
        %v3379 = vadd.f32 0.0, %v3378
        %v3380 = vpop.f32.mrf.mxu0
        %3381 = vmatprep.mubr.f32.mxu0 0.0
        %3382 = vmatmul.mubr.f32.gmra.mxu0 %v3290
        %v3383 = vpop.f32.mrf.mxu0
        %v3384 = vadd.f32 0.0, %v3383
        %v3385 = vpop.f32.mrf.mxu0
        %3386 = vmatprep.mubr.f32.mxu0 0.0
        %3387 = vmatmul.mubr.f32.gmra.mxu0 %v3293
        %v3388 = vpop.f32.mrf.mxu0
        %v3389 = vadd.f32 0.0, %v3388
        %v3390 = vpop.f32.mrf.mxu0
        %3391 = vmatprep.mubr.f32.mxu0 0.0
        %3392 = vmatmul.mubr.f32.gmra.mxu0 %v3296
        %v3393 = vpop.f32.mrf.mxu0
        %v3394 = vadd.f32 0.0, %v3393
        %v3395 = vpop.f32.mrf.mxu0
        %3396 = vmatprep.mubr.f32.mxu0 0.0
        %3397 = vmatmul.mubr.f32.gmra.mxu0 %v3299
        %v3398 = vpop.f32.mrf.mxu0
        %v3399 = vadd.f32 0.0, %v3398
        %v3400 = vpop.f32.mrf.mxu0
        %3401 = vmatprep.mubr.f32.mxu0 0.0
        %3402 = vmatmul.mubr.f32.gmra.mxu0 %v3302
        %v3403 = vpop.f32.mrf.mxu0
        %v3404 = vadd.f32 0.0, %v3403
        %v3405 = vpop.f32.mrf.mxu0
        %3406 = vmatprep.mubr.f32.mxu0 0.0
        %3407 = vmatmul.mubr.f32.gmra.mxu0 %v3305
        %v3408 = vpop.f32.mrf.mxu0
        %v3409 = vadd.f32 0.0, %v3408
        %v3410 = vpop.f32.mrf.mxu0
        %3411 = vdwg.mxu0
        %v3412 = vadd.f32 %v3071, %v3374
        %v3413 = vadd.f32 %v3072, %v3379
        %v3414 = vadd.f32 %v3073, %v3384
        %v3415 = vadd.f32 %v3074, %v3389
        %v3416 = vadd.f32 %v3075, %v3394
        %v3417 = vadd.f32 %v3076, %v3399
        %v3418 = vadd.f32 %v3077, %v3404
        %v3419 = vadd.f32 %v3078, %v3409
        %v3420 = vadd.f32 %v348, %v3412
        %v3421 = vadd.f32 %v349, %v3413
        %v3422 = vadd.f32 %v350, %v3414
        %v3423 = vadd.f32 %v351, %v3415
        %v3424 = vadd.f32 %v352, %v3416
        %v3425 = vadd.f32 %v353, %v3417
        %v3426 = vadd.f32 %v354, %v3418
        %v3427 = vadd.f32 %v355, %v3419
        %v3428 = vld [vmem:[%s5] sm:$0xff]
        %v3429 = vld [vmem:[%s5 + $0x8] sm:$0xff]
        %v3430 = vld [vmem:[%s5 + $0x10] sm:$0xff]
        %v3431 = vld [vmem:[%s5 + $0x18] sm:$0xff]
        %v3432 = vld [vmem:[%s5 + $0x20] sm:$0xff]
        %v3433 = vld [vmem:[%s5 + $0x28] sm:$0xff]
        %v3434 = vld [vmem:[%s5 + $0x30] sm:$0xff]
        %v3435 = vld [vmem:[%s5 + $0x38] sm:$0xff]
        %3437 = vset.pattern.permute.xlu0 0
        %3438 = vperm.xlu0 %3437, %v3428
        %v3439 = vpop.permute.xlu0 %3438
        %3442 = vset.pattern.permute.xlu0 0
        %3443 = vperm.xlu0 %3442, %v3429
        %v3444 = vpop.permute.xlu0 %3443
        %3447 = vset.pattern.permute.xlu0 0
        %3448 = vperm.xlu0 %3447, %v3430
        %v3449 = vpop.permute.xlu0 %3448
        %3452 = vset.pattern.permute.xlu0 0
        %3453 = vperm.xlu0 %3452, %v3431
        %v3454 = vpop.permute.xlu0 %3453
        %3457 = vset.pattern.permute.xlu0 0
        %3458 = vperm.xlu0 %3457, %v3432
        %v3459 = vpop.permute.xlu0 %3458
        %3462 = vset.pattern.permute.xlu0 0
        %3463 = vperm.xlu0 %3462, %v3433
        %v3464 = vpop.permute.xlu0 %3463
        %3467 = vset.pattern.permute.xlu0 0
        %3468 = vperm.xlu0 %3467, %v3434
        %v3469 = vpop.permute.xlu0 %3468
        %3472 = vset.pattern.permute.xlu0 0
        %3473 = vperm.xlu0 %3472, %v3435
        %v3474 = vpop.permute.xlu0 %3473
        %v3476 = vadd.f32 %v3420, %v3439
        %v3477 = vadd.f32 %v3421, %v3444
        %v3478 = vadd.f32 %v3422, %v3449
        %v3479 = vadd.f32 %v3423, %v3454
        %v3480 = vadd.f32 %v3424, %v3459
        %v3481 = vadd.f32 %v3425, %v3464
        %v3482 = vadd.f32 %v3426, %v3469
        %v3483 = vadd.f32 %v3427, %v3474
        %3484 = vst [vmem:[%s343] sm:$0xff] %v3476
        %3485 = vst [vmem:[%s343 + $0x8] sm:$0xff] %v3477
        %3486 = vst [vmem:[%s343 + $0x10] sm:$0xff] %v3478
        %3487 = vst [vmem:[%s343 + $0x18] sm:$0xff] %v3479
        %3488 = vst [vmem:[%s343 + $0x20] sm:$0xff] %v3480
        %3489 = vst [vmem:[%s343 + $0x28] sm:$0xff] %v3481
        %3490 = vst [vmem:[%s343 + $0x30] sm:$0xff] %v3482
        %3491 = vst [vmem:[%s343 + $0x38] sm:$0xff] %v3483
        %s3492 = sand.u32 %s180, 1
        %s3493 = scalar_lea.sflag [#allocation4], %s3492
        %s3494 = sand.u32 %s180, 1
        %s3495 = smul.addr %s3494, 64
        %s3496 = scalar_lea.vmem [#allocation3], %s3495
        // Predicated region
        $region83: #{tpu_custom_call.1} parent=77 // pred_check
          %p3497 = pneg %p190
        $region84: #{tpu_custom_call.1} parent=77 // pred_check_branch
          %3499 = sbr.rel (%p3497) target = $region86
        $region85: #{tpu_custom_call.1} parent=77 // pred_region
          %s3501 = ssub.s32 1024, 1024
          %3502 = vsyncadd %s3493, %s3501
          %s3503 = smul.addr %s24, 16
          %s3504 = sadd.s32 %s25, %s3503
          %s3505 = smul.addr %s3504, 128
          %s3506 = scalar_lea.hbm %s6, %s3505
          %s3507 = sshll.u32 %s3496, 4
          %s3508 = int_to_ptr.vmem [resolvable:$true] %s3507
          %3513 = dma.vmem_to_hbm [thread:$0]  %s3508, 1024, %s3506, %s3493, 128, 256, 8
        $region86: #{tpu_custom_call.1} parent=77 // pred_fallthru
          _
      $region78: #{tpu_custom_call.1} parent=5 // pred_fallthru
        _
      %p3514 = scmp.le.s32.totalorder 2, %s15
      // Predicated region
      $region87: #{tpu_custom_call.1} parent=5 // pred_check
        %p3515 = pneg %p3514
      $region88: #{tpu_custom_call.1} parent=5 // pred_check_branch
        %3517 = sbr.rel (%p3515) target = $region90
      $region89: #{tpu_custom_call.1} parent=5 // pred_region
        %s3518 = ssub.s32 %s15, 2
        // Predicated region
        $region91: #{tpu_custom_call.1} parent=89 // pred_check
          %p3519 = pneg %p196
        $region92: #{tpu_custom_call.1} parent=89 // pred_check_branch
          %3521 = sbr.rel (%p3519) target = $region94
        $region93: #{tpu_custom_call.1} parent=89 // pred_region
          %s3522 = sand.u32 %s181, 1
          %s3523 = scalar_lea.sflag [#allocation4], %s3522
          %s3524 = sand.u32 %s181, 1
          %s3525 = smul.addr %s3524, 64
          %s3526 = scalar_lea.vmem [#allocation3], %s3525
          %3527 = dma.done %s3523, 1024
        $region94: #{tpu_custom_call.1} parent=89 // pred_fallthru
          _
      $region90: #{tpu_custom_call.1} parent=5 // pred_fallthru
        _
    $region6: #{tpu_custom_call.1} parent=1 // loop_footer
      %s19 = sadd.s32 1, %s15
    $region7: #{tpu_custom_call.1} parent=1 // loop_footer_branch
      %14 = sbr.rel target = $region3
    $region8: #{tpu_custom_call.1} parent=1 // loop_exit
      _
    %3528 = vsyncpa [#allocation4], 1
    %s3529 = scalar_lea.sflag [#allocation4], 1
    %3530 = vsyncpa %s3529, 1

</llo_original>
